<compile_context>
chip_gen: v7x
topology: tpu7x:2x2x1
jax: 0.10.0
libtpu: 0.0.40
codegen_flags: <defaults>
</compile_context>

<pallas_src>
import functools

import jax
import jax.numpy as jnp
from jax.experimental import pallas as pl
from jax.experimental.pallas import tpu as pltpu

NEG_INF = float("-inf")
LEAKY_SLOPE = 0.1
BN_EPS = 1e-5
LANE = 128


def _round_up(x, m):
    return (x + m - 1) // m * m


def _leaky(x):
    # LeakyReLU(0.1) as one mul + one max (valid for slope in (0, 1)).
    return jnp.maximum(x, LEAKY_SLOPE * x)


def _roll_rows(a, s):
    """result[i] = a[(i + s) % n] along axis 0, done on the XLU (no copy through ld/st)."""
    n = a.shape[0]
    return pltpu.roll(a, shift=(-s) % n, axis=0)


def _pool5(a, col_masks, row_masks):
    """5x5 max pool, stride 1, pad 2 (implicit -inf), on row-major flattened (H*W, C).

    col_masks / row_masks: lists of (shift, fwd_mask, bwd_mask) with (H*W, 1) masks.
    Wrapped (rolled-around) positions are always covered by the masks.
    """
    # pool along image columns (w): flattened shifts of +-1, +-2, masked at row edges
    out = a
    for s, m_fwd, m_bwd in col_masks:
        out = jnp.maximum(out, jnp.where(m_fwd, _roll_rows(a, s), NEG_INF))
        out = jnp.maximum(out, jnp.where(m_bwd, _roll_rows(a, -s), NEG_INF))
    # pool along image rows (h): flattened shifts of +-W, +-2W, masked at image edges
    b = out
    for s, m_fwd, m_bwd in row_masks:
        out = jnp.maximum(out, jnp.where(m_fwd, _roll_rows(b, s), NEG_INF))
        out = jnp.maximum(out, jnp.where(m_bwd, _roll_rows(b, -s), NEG_INF))
    return out


def _spff_kernel(x_ref, w1_ref, b1_ref, wc_ref, bc_ref, o_ref, *, W, compute_dtype):
    x = x_ref[0]  # (H*W, Cin_p), compute dtype

    # conv1: 1x1 conv == channel matmul; BN scale is folded into w1, bias added here.
    y = jnp.dot(x, w1_ref[...], preferred_element_type=jnp.float32) + b1_ref[...]
    x1 = _leaky(y)  # (H*W, Cmid_p) f32

    hw = x1.shape[0]
    row = jax.lax.broadcasted_iota(jnp.int32, (hw, 1), 0)
    col = row % W
    # hoisted boundary masks; with chained 5x5 pools only s = 1, 2 are ever needed
    col_masks = [(s, col < W - s, col >= s) for s in (1, 2)]
    row_masks = [(s, row < hw - s, row >= s) for s in (W, 2 * W)]

    # chained pooling: 5x5 applied 1x / 2x / 3x == 5x5 / 9x9 / 13x13 SAME (-inf pad), exactly
    p5 = _pool5(x1, col_masks, row_masks)
    p9 = _pool5(p5, col_masks, row_masks)
    p13 = _pool5(p9, col_masks, row_masks)

    # concat_conv without materializing the (H*W, 4*Cmid) concat buffer:
    # four partial matmuls accumulated into z; BN scale folded into wc.
    z = jnp.dot(x1.astype(compute_dtype), wc_ref[0], preferred_element_type=jnp.float32)
    z += jnp.dot(p5.astype(compute_dtype), wc_ref[1], preferred_element_type=jnp.float32)
    z += jnp.dot(p9.astype(compute_dtype), wc_ref[2], preferred_element_type=jnp.float32)
    z += jnp.dot(p13.astype(compute_dtype), wc_ref[3], preferred_element_type=jnp.float32)
    z += bc_ref[...]
    o_ref[0] = _leaky(z).astype(o_ref.dtype)


def _fold_bn(gamma, beta, mean, var, eps=BN_EPS):
    scale = gamma / jnp.sqrt(var + eps)
    bias = beta - mean * scale
    return scale, bias


def _pad_to(a, axis, size):
    pad = size - a.shape[axis]
    if pad == 0:
        return a
    widths = [(0, 0)] * a.ndim
    widths[axis] = (0, pad)
    return jnp.pad(a, widths)


def spff_pallas_nhwc(x_nhwc, w1, bn1, wc, bnc, *, compute_dtype=jnp.bfloat16):
    """x_nhwc: (N, H, W, Cin) -> (N, H, W, Cout). Channels-last entry point."""
    N, H, W, Cin = x_nhwc.shape
    Cmid = w1.shape[0]
    Cout = wc.shape[0]
    HW = H * W

    # lane-dense channel padding (>= 128, multiple of 128); padded channels are exact zeros
    cin_p = _round_up(max(Cin, LANE), LANE)
    cmid_p = _round_up(max(Cmid, LANE), LANE)
    cout_p = _round_up(max(Cout, LANE), LANE)

    s1, b1 = _fold_bn(*bn1)
    sc, bc = _fold_bn(*bnc)

    # fold BN scale into the conv weights (free at trace time); keep bias separate
    w1_k = (w1 * s1[:, None]).T                      # (Cin, Cmid)
    wc_k = (wc * sc[:, None]).T.reshape(4, Cmid, Cout)  # slabs for x1, p5, p9, p13

    w1_k = _pad_to(_pad_to(w1_k, 0, cin_p), 1, cmid_p).astype(compute_dtype)
    wc_k = _pad_to(_pad_to(wc_k, 1, cmid_p), 2, cout_p).astype(compute_dtype)
    b1_k = _pad_to(b1.reshape(1, Cmid), 1, cmid_p).astype(jnp.float32)
    bc_k = _pad_to(bc.reshape(1, Cout), 1, cout_p).astype(jnp.float32)

    x_flat = _pad_to(x_nhwc.reshape(N, HW, Cin), 2, cin_p).astype(compute_dtype)

    # scoped-VMEM budget: double-buffered in/out blocks + weights + pooling intermediates
    esz = jnp.dtype(compute_dtype).itemsize
    est = (2 * HW * cin_p * esz + 2 * HW * cout_p * 4
           + (cin_p * cmid_p + 4 * cmid_p * cout_p) * esz + (cmid_p + cout_p) * 4
           + 8 * HW * cmid_p * 4 + 2 * HW * cout_p * 4)
    vmem_limit = int(min(max(2 * est, 8 << 20), 64 << 20))

    out_flat = pl.pallas_call(
        functools.partial(_spff_kernel, W=W, compute_dtype=compute_dtype),
        out_shape=jax.ShapeDtypeStruct((N, HW, cout_p), jnp.float32),
        grid_spec=pltpu.PrefetchScalarGridSpec(
            num_scalar_prefetch=0,
            grid=(N,),
            in_specs=[
                pl.BlockSpec((1, HW, cin_p), lambda n: (n, 0, 0)),
                pl.BlockSpec((cin_p, cmid_p), lambda n: (0, 0)),
                pl.BlockSpec((1, cmid_p), lambda n: (0, 0)),
                pl.BlockSpec((4, cmid_p, cout_p), lambda n: (0, 0, 0)),
                pl.BlockSpec((1, cout_p), lambda n: (0, 0)),
            ],
            out_specs=pl.BlockSpec((1, HW, cout_p), lambda n: (n, 0, 0)),
        ),
        compiler_params=pltpu.CompilerParams(
            dimension_semantics=("parallel",),
            vmem_limit_bytes=vmem_limit,
        ),
    )(x_flat, w1_k, b1_k, wc_k, bc_k)

    return out_flat[:, :, :Cout].reshape(N, H, W, Cout)


def spff_pallas(x_nchw, w1, bn1, wc, bnc, *, compute_dtype=jnp.bfloat16):
    """PyTorch-layout wrapper: (N, Cin, H, W) -> (N, Cout, H, W).

    NOTE: the NCHW<->NHWC transposes below are separate XLA passes over HBM; if the
    surrounding model is channels-last, call spff_pallas_nhwc directly and skip them.
    """
    x_nhwc = jnp.transpose(x_nchw, (0, 2, 3, 1))
    out = spff_pallas_nhwc(x_nhwc, w1, bn1, wc, bnc, compute_dtype=compute_dtype)
    return jnp.transpose(out, (0, 3, 1, 2))


def spff_reference(x_nchw, w1, bn1, wc, bnc):
    """Pure-JAX f32 reference with identical semantics (for verification)."""
    s1, b1 = _fold_bn(*bn1)
    sc, bc = _fold_bn(*bnc)
    x = jnp.transpose(x_nchw, (0, 2, 3, 1))
    y = jnp.einsum("nhwc,oc->nhwo", x, w1) * s1 + b1
    x1 = jnp.where(y >= 0, y, LEAKY_SLOPE * y)

    def mp(a, k):
        return jax.lax.reduce_window(
            a, -jnp.inf, jax.lax.max, (1, k, k, 1), (1, 1, 1, 1), "SAME"
        )

    cat = jnp.concatenate([x1, mp(x1, 5), mp(x1, 9), mp(x1, 13)], axis=-1)
    z = jnp.einsum("nhwc,oc->nhwo", cat, wc) * sc + bc
    out = jnp.where(z >= 0, z, LEAKY_SLOPE * z)
    return jnp.transpose(out, (0, 3, 1, 2))


def init_params(key, in_channels, out_channels):
    cmid = in_channels // 2
    k1, k2, k3, k4 = jax.random.split(key, 4)
    # conv weights: PyTorch shapes (Cout, Cin, 1, 1) squeezed to (Cout, Cin)
    w1 = jax.random.normal(k1, (cmid, in_channels), jnp.float32) / jnp.sqrt(in_channels)
    wc = jax.random.normal(k2, (out_channels, 4 * cmid), jnp.float32) / jnp.sqrt(4.0 * cmid)

    def bn_params(k, c):
        ka, kb, kc, kd = jax.random.split(k, 4)
        gamma = 1.0 + 0.1 * jax.random.normal(ka, (c,), jnp.float32)
        beta = 0.1 * jax.random.normal(kb, (c,), jnp.float32)
        mean = 0.1 * jax.random.normal(kc, (c,), jnp.float32)
        var = 0.5 + jax.random.uniform(kd, (c,), jnp.float32)
        return gamma, beta, mean, var

    return w1, bn_params(k3, cmid), wc, bn_params(k4, out_channels)


if __name__ == "__main__":
    key = jax.random.PRNGKey(0)
    kx, kp = jax.random.split(key)

    N, Cin, H, W = 2, 8, 16, 16
    Cout = 8

    x = jax.random.normal(kx, (N, Cin, H, W), jnp.float32)
    params = init_params(kp, Cin, Cout)
    ref = spff_reference(x, *params)

    # tight correctness check of the kernel logic with f32 matmul operands
    out_f32 = jax.block_until_ready(spff_pallas(x, *params, compute_dtype=jnp.float32))
    assert out_f32.shape == (N, Cout, H, W), out_f32.shape
    assert jnp.allclose(out_f32, ref, atol=1e-2, rtol=1e-2), float(
        jnp.max(jnp.abs(out_f32 - ref))
    )

    # default fast path: bf16 MXU operands (f32 accumulation) -> looser tolerance,
    # as suggested by the performance review.
    out_bf16 = jax.block_until_ready(spff_pallas(x, *params))
    assert out_bf16.shape == (N, Cout, H, W), out_bf16.shape
    assert jnp.allclose(out_bf16, ref, atol=1e-1, rtol=1e-1), float(
        jnp.max(jnp.abs(out_bf16 - ref))
    )

    print("KERNEL_OK")
</pallas_src>

<mosaic_0001>
module attributes {stable_mosaic.version = 11 : i64} {
  func.func @_spff_kernel(%arg0: i32, %arg1: memref<1x256x128xf32, #tpu.memory_space<vmem>>, %arg2: memref<128x128xf32, #tpu.memory_space<vmem>>, %arg3: memref<1x128xf32, #tpu.memory_space<vmem>>, %arg4: memref<4x128x128xf32, #tpu.memory_space<vmem>>, %arg5: memref<1x128xf32, #tpu.memory_space<vmem>>, %arg6: memref<1x256x128xf32, #tpu.memory_space<vmem>>) attributes {dimension_semantics = [#tpu.dimension_semantics<parallel>], iteration_bounds = array<i64: 2>, scalar_prefetch = 0 : i64, scratch_operands = 0 : i64, tpu.core_type = #tpu.core_type<tc>, window_params = [{transform_indices = @transform_0, window_bounds = array<i64: 1, 256, 128>}, {pipeline_mode = #tpu.pipeline_mode<synchronous>, transform_indices = @transform_1, window_bounds = array<i64: 128, 128>}, {pipeline_mode = #tpu.pipeline_mode<synchronous>, transform_indices = @transform_2, window_bounds = array<i64: 1, 128>}, {pipeline_mode = #tpu.pipeline_mode<synchronous>, transform_indices = @transform_3, window_bounds = array<i64: 4, 128, 128>}, {pipeline_mode = #tpu.pipeline_mode<synchronous>, transform_indices = @transform_4, window_bounds = array<i64: 1, 128>}, {transform_indices = @transform_5, window_bounds = array<i64: 1, 256, 128>}]} {
    %c0 = arith.constant 0 : index
    %c0_0 = arith.constant 0 : index
    %c0_1 = arith.constant 0 : index
    %0 = vector.load %arg1[%c0, %c0_0, %c0_1] : memref<1x256x128xf32, #tpu.memory_space<vmem>>, vector<1x256x128xf32>
    %1 = vector.shape_cast %0 : vector<1x256x128xf32> to vector<256x128xf32>
    %c0_2 = arith.constant 0 : index
    %c0_3 = arith.constant 0 : index
    %2 = vector.load %arg2[%c0_2, %c0_3] : memref<128x128xf32, #tpu.memory_space<vmem>>, vector<128x128xf32>
    %cst = arith.constant dense<0.000000e+00> : vector<256x128xf32>
    %3 = tpu.matmul %1, %2, %cst {dimension_numbers = #tpu.dot_dimension_numbers<[1], [0], [0], [1], [0, 0, 1, 1], [], []>} : vector<256x128xf32>, vector<128x128xf32>, vector<256x128xf32> -> vector<256x128xf32>
    %c0_4 = arith.constant 0 : index
    %c0_5 = arith.constant 0 : index
    %4 = vector.load %arg3[%c0_4, %c0_5] : memref<1x128xf32, #tpu.memory_space<vmem>>, vector<1x128xf32>
    %5 = vector.broadcast %4 : vector<1x128xf32> to vector<256x128xf32>
    %6 = arith.addf %3, %5 : vector<256x128xf32>
    %cst_6 = arith.constant 1.000000e-01 : f32
    %7 = vector.broadcast %cst_6 : f32 to vector<256x128xf32>
    %8 = arith.mulf %7, %6 : vector<256x128xf32>
    %9 = arith.maximumf %6, %8 : vector<256x128xf32>
    %10 = tpu.iota {dimensions = array<i32: 0>} : vector<256x1xi32>
    %c16_i32 = arith.constant 16 : i32
    %c0_i32 = arith.constant 0 : i32
    %11 = arith.cmpi eq, %c16_i32, %c0_i32 : i32
    %c1_i32 = arith.constant 1 : i32
    %12 = arith.select %11, %c1_i32, %c16_i32 : i32
    %13 = vector.broadcast %12 : i32 to vector<256x1xi32>
    %14 = arith.remsi %10, %13 : vector<256x1xi32>
    %c0_i32_7 = arith.constant 0 : i32
    %15 = vector.broadcast %c0_i32_7 : i32 to vector<256x1xi32>
    %16 = arith.cmpi ne, %14, %15 : vector<256x1xi32>
    %c0_i32_8 = arith.constant 0 : i32
    %17 = vector.broadcast %c0_i32_8 : i32 to vector<256x1xi32>
    %18 = arith.cmpi slt, %14, %17 : vector<256x1xi32>
    %c0_i32_9 = arith.constant 0 : i32
    %19 = arith.cmpi slt, %12, %c0_i32_9 : i32
    %20 = vector.broadcast %19 : i1 to vector<256x1xi1>
    %21 = vector.broadcast %20 : vector<256x1xi1> to vector<256x1xi1>
    %22 = arith.xori %18, %21 : vector<256x1xi1>
    %23 = arith.andi %22, %16 : vector<256x1xi1>
    %24 = vector.broadcast %12 : i32 to vector<256x1xi32>
    %25 = arith.addi %14, %24 : vector<256x1xi32>
    %26 = arith.select %23, %25, %14 : vector<256x1xi1>, vector<256x1xi32>
    %c15_i32 = arith.constant 15 : i32
    %27 = vector.broadcast %c15_i32 : i32 to vector<256x1xi32>
    %28 = arith.cmpi slt, %26, %27 : vector<256x1xi32>
    %c1_i32_10 = arith.constant 1 : i32
    %29 = vector.broadcast %c1_i32_10 : i32 to vector<256x1xi32>
    %30 = arith.cmpi sge, %26, %29 : vector<256x1xi32>
    %c14_i32 = arith.constant 14 : i32
    %31 = vector.broadcast %c14_i32 : i32 to vector<256x1xi32>
    %32 = arith.cmpi slt, %26, %31 : vector<256x1xi32>
    %c2_i32 = arith.constant 2 : i32
    %33 = vector.broadcast %c2_i32 : i32 to vector<256x1xi32>
    %34 = arith.cmpi sge, %26, %33 : vector<256x1xi32>
    %c240_i32 = arith.constant 240 : i32
    %35 = vector.broadcast %c240_i32 : i32 to vector<256x1xi32>
    %36 = arith.cmpi slt, %10, %35 : vector<256x1xi32>
    %c16_i32_11 = arith.constant 16 : i32
    %37 = vector.broadcast %c16_i32_11 : i32 to vector<256x1xi32>
    %38 = arith.cmpi sge, %10, %37 : vector<256x1xi32>
    %c224_i32 = arith.constant 224 : i32
    %39 = vector.broadcast %c224_i32 : i32 to vector<256x1xi32>
    %40 = arith.cmpi slt, %10, %39 : vector<256x1xi32>
    %c32_i32 = arith.constant 32 : i32
    %41 = vector.broadcast %c32_i32 : i32 to vector<256x1xi32>
    %42 = arith.cmpi sge, %10, %41 : vector<256x1xi32>
    %c255_i32 = arith.constant 255 : i32
    %43 = tpu.dynamic_rotate %9 by %c255_i32 dim 0 : vector<256x128xf32>, i32 -> vector<256x128xf32>
    %cst_12 = arith.constant 0xFF800000 : f32
    %44 = vector.shape_cast %28 : vector<256x1xi1> to vector<256x1xi1>
    %45 = vector.broadcast %44 : vector<256x1xi1> to vector<256x128xi1>
    %46 = vector.broadcast %cst_12 : f32 to vector<256x128xf32>
    %47 = arith.select %45, %43, %46 : vector<256x128xi1>, vector<256x128xf32>
    %48 = arith.maximumf %9, %47 : vector<256x128xf32>
    %c1_i32_13 = arith.constant 1 : i32
    %49 = tpu.dynamic_rotate %9 by %c1_i32_13 dim 0 : vector<256x128xf32>, i32 -> vector<256x128xf32>
    %cst_14 = arith.constant 0xFF800000 : f32
    %50 = vector.shape_cast %30 : vector<256x1xi1> to vector<256x1xi1>
    %51 = vector.broadcast %50 : vector<256x1xi1> to vector<256x128xi1>
    %52 = vector.broadcast %cst_14 : f32 to vector<256x128xf32>
    %53 = arith.select %51, %49, %52 : vector<256x128xi1>, vector<256x128xf32>
    %54 = arith.maximumf %48, %53 : vector<256x128xf32>
    %c254_i32 = arith.constant 254 : i32
    %55 = tpu.dynamic_rotate %9 by %c254_i32 dim 0 : vector<256x128xf32>, i32 -> vector<256x128xf32>
    %cst_15 = arith.constant 0xFF800000 : f32
    %56 = vector.shape_cast %32 : vector<256x1xi1> to vector<256x1xi1>
    %57 = vector.broadcast %56 : vector<256x1xi1> to vector<256x128xi1>
    %58 = vector.broadcast %cst_15 : f32 to vector<256x128xf32>
    %59 = arith.select %57, %55, %58 : vector<256x128xi1>, vector<256x128xf32>
    %60 = arith.maximumf %54, %59 : vector<256x128xf32>
    %c2_i32_16 = arith.constant 2 : i32
    %61 = tpu.dynamic_rotate %9 by %c2_i32_16 dim 0 : vector<256x128xf32>, i32 -> vector<256x128xf32>
    %cst_17 = arith.constant 0xFF800000 : f32
    %62 = vector.shape_cast %34 : vector<256x1xi1> to vector<256x1xi1>
    %63 = vector.broadcast %62 : vector<256x1xi1> to vector<256x128xi1>
    %64 = vector.broadcast %cst_17 : f32 to vector<256x128xf32>
    %65 = arith.select %63, %61, %64 : vector<256x128xi1>, vector<256x128xf32>
    %66 = arith.maximumf %60, %65 : vector<256x128xf32>
    %c240_i32_18 = arith.constant 240 : i32
    %67 = tpu.dynamic_rotate %66 by %c240_i32_18 dim 0 : vector<256x128xf32>, i32 -> vector<256x128xf32>
    %cst_19 = arith.constant 0xFF800000 : f32
    %68 = vector.shape_cast %36 : vector<256x1xi1> to vector<256x1xi1>
    %69 = vector.broadcast %68 : vector<256x1xi1> to vector<256x128xi1>
    %70 = vector.broadcast %cst_19 : f32 to vector<256x128xf32>
    %71 = arith.select %69, %67, %70 : vector<256x128xi1>, vector<256x128xf32>
    %72 = arith.maximumf %66, %71 : vector<256x128xf32>
    %c16_i32_20 = arith.constant 16 : i32
    %73 = tpu.dynamic_rotate %66 by %c16_i32_20 dim 0 : vector<256x128xf32>, i32 -> vector<256x128xf32>
    %cst_21 = arith.constant 0xFF800000 : f32
    %74 = vector.shape_cast %38 : vector<256x1xi1> to vector<256x1xi1>
    %75 = vector.broadcast %74 : vector<256x1xi1> to vector<256x128xi1>
    %76 = vector.broadcast %cst_21 : f32 to vector<256x128xf32>
    %77 = arith.select %75, %73, %76 : vector<256x128xi1>, vector<256x128xf32>
    %78 = arith.maximumf %72, %77 : vector<256x128xf32>
    %c224_i32_22 = arith.constant 224 : i32
    %79 = tpu.dynamic_rotate %66 by %c224_i32_22 dim 0 : vector<256x128xf32>, i32 -> vector<256x128xf32>
    %cst_23 = arith.constant 0xFF800000 : f32
    %80 = vector.shape_cast %40 : vector<256x1xi1> to vector<256x1xi1>
    %81 = vector.broadcast %80 : vector<256x1xi1> to vector<256x128xi1>
    %82 = vector.broadcast %cst_23 : f32 to vector<256x128xf32>
    %83 = arith.select %81, %79, %82 : vector<256x128xi1>, vector<256x128xf32>
    %84 = arith.maximumf %78, %83 : vector<256x128xf32>
    %c32_i32_24 = arith.constant 32 : i32
    %85 = tpu.dynamic_rotate %66 by %c32_i32_24 dim 0 : vector<256x128xf32>, i32 -> vector<256x128xf32>
    %cst_25 = arith.constant 0xFF800000 : f32
    %86 = vector.shape_cast %42 : vector<256x1xi1> to vector<256x1xi1>
    %87 = vector.broadcast %86 : vector<256x1xi1> to vector<256x128xi1>
    %88 = vector.broadcast %cst_25 : f32 to vector<256x128xf32>
    %89 = arith.select %87, %85, %88 : vector<256x128xi1>, vector<256x128xf32>
    %90 = arith.maximumf %84, %89 : vector<256x128xf32>
    %c255_i32_26 = arith.constant 255 : i32
    %91 = tpu.dynamic_rotate %90 by %c255_i32_26 dim 0 : vector<256x128xf32>, i32 -> vector<256x128xf32>
    %cst_27 = arith.constant 0xFF800000 : f32
    %92 = vector.shape_cast %28 : vector<256x1xi1> to vector<256x1xi1>
    %93 = vector.broadcast %92 : vector<256x1xi1> to vector<256x128xi1>
    %94 = vector.broadcast %cst_27 : f32 to vector<256x128xf32>
    %95 = arith.select %93, %91, %94 : vector<256x128xi1>, vector<256x128xf32>
    %96 = arith.maximumf %90, %95 : vector<256x128xf32>
    %c1_i32_28 = arith.constant 1 : i32
    %97 = tpu.dynamic_rotate %90 by %c1_i32_28 dim 0 : vector<256x128xf32>, i32 -> vector<256x128xf32>
    %cst_29 = arith.constant 0xFF800000 : f32
    %98 = vector.shape_cast %30 : vector<256x1xi1> to vector<256x1xi1>
    %99 = vector.broadcast %98 : vector<256x1xi1> to vector<256x128xi1>
    %100 = vector.broadcast %cst_29 : f32 to vector<256x128xf32>
    %101 = arith.select %99, %97, %100 : vector<256x128xi1>, vector<256x128xf32>
    %102 = arith.maximumf %96, %101 : vector<256x128xf32>
    %c254_i32_30 = arith.constant 254 : i32
    %103 = tpu.dynamic_rotate %90 by %c254_i32_30 dim 0 : vector<256x128xf32>, i32 -> vector<256x128xf32>
    %cst_31 = arith.constant 0xFF800000 : f32
    %104 = vector.shape_cast %32 : vector<256x1xi1> to vector<256x1xi1>
    %105 = vector.broadcast %104 : vector<256x1xi1> to vector<256x128xi1>
    %106 = vector.broadcast %cst_31 : f32 to vector<256x128xf32>
    %107 = arith.select %105, %103, %106 : vector<256x128xi1>, vector<256x128xf32>
    %108 = arith.maximumf %102, %107 : vector<256x128xf32>
    %c2_i32_32 = arith.constant 2 : i32
    %109 = tpu.dynamic_rotate %90 by %c2_i32_32 dim 0 : vector<256x128xf32>, i32 -> vector<256x128xf32>
    %cst_33 = arith.constant 0xFF800000 : f32
    %110 = vector.shape_cast %34 : vector<256x1xi1> to vector<256x1xi1>
    %111 = vector.broadcast %110 : vector<256x1xi1> to vector<256x128xi1>
    %112 = vector.broadcast %cst_33 : f32 to vector<256x128xf32>
    %113 = arith.select %111, %109, %112 : vector<256x128xi1>, vector<256x128xf32>
    %114 = arith.maximumf %108, %113 : vector<256x128xf32>
    %c240_i32_34 = arith.constant 240 : i32
    %115 = tpu.dynamic_rotate %114 by %c240_i32_34 dim 0 : vector<256x128xf32>, i32 -> vector<256x128xf32>
    %cst_35 = arith.constant 0xFF800000 : f32
    %116 = vector.shape_cast %36 : vector<256x1xi1> to vector<256x1xi1>
    %117 = vector.broadcast %116 : vector<256x1xi1> to vector<256x128xi1>
    %118 = vector.broadcast %cst_35 : f32 to vector<256x128xf32>
    %119 = arith.select %117, %115, %118 : vector<256x128xi1>, vector<256x128xf32>
    %120 = arith.maximumf %114, %119 : vector<256x128xf32>
    %c16_i32_36 = arith.constant 16 : i32
    %121 = tpu.dynamic_rotate %114 by %c16_i32_36 dim 0 : vector<256x128xf32>, i32 -> vector<256x128xf32>
    %cst_37 = arith.constant 0xFF800000 : f32
    %122 = vector.shape_cast %38 : vector<256x1xi1> to vector<256x1xi1>
    %123 = vector.broadcast %122 : vector<256x1xi1> to vector<256x128xi1>
    %124 = vector.broadcast %cst_37 : f32 to vector<256x128xf32>
    %125 = arith.select %123, %121, %124 : vector<256x128xi1>, vector<256x128xf32>
    %126 = arith.maximumf %120, %125 : vector<256x128xf32>
    %c224_i32_38 = arith.constant 224 : i32
    %127 = tpu.dynamic_rotate %114 by %c224_i32_38 dim 0 : vector<256x128xf32>, i32 -> vector<256x128xf32>
    %cst_39 = arith.constant 0xFF800000 : f32
    %128 = vector.shape_cast %40 : vector<256x1xi1> to vector<256x1xi1>
    %129 = vector.broadcast %128 : vector<256x1xi1> to vector<256x128xi1>
    %130 = vector.broadcast %cst_39 : f32 to vector<256x128xf32>
    %131 = arith.select %129, %127, %130 : vector<256x128xi1>, vector<256x128xf32>
    %132 = arith.maximumf %126, %131 : vector<256x128xf32>
    %c32_i32_40 = arith.constant 32 : i32
    %133 = tpu.dynamic_rotate %114 by %c32_i32_40 dim 0 : vector<256x128xf32>, i32 -> vector<256x128xf32>
    %cst_41 = arith.constant 0xFF800000 : f32
    %134 = vector.shape_cast %42 : vector<256x1xi1> to vector<256x1xi1>
    %135 = vector.broadcast %134 : vector<256x1xi1> to vector<256x128xi1>
    %136 = vector.broadcast %cst_41 : f32 to vector<256x128xf32>
    %137 = arith.select %135, %133, %136 : vector<256x128xi1>, vector<256x128xf32>
    %138 = arith.maximumf %132, %137 : vector<256x128xf32>
    %c255_i32_42 = arith.constant 255 : i32
    %139 = tpu.dynamic_rotate %138 by %c255_i32_42 dim 0 : vector<256x128xf32>, i32 -> vector<256x128xf32>
    %cst_43 = arith.constant 0xFF800000 : f32
    %140 = vector.shape_cast %28 : vector<256x1xi1> to vector<256x1xi1>
    %141 = vector.broadcast %140 : vector<256x1xi1> to vector<256x128xi1>
    %142 = vector.broadcast %cst_43 : f32 to vector<256x128xf32>
    %143 = arith.select %141, %139, %142 : vector<256x128xi1>, vector<256x128xf32>
    %144 = arith.maximumf %138, %143 : vector<256x128xf32>
    %c1_i32_44 = arith.constant 1 : i32
    %145 = tpu.dynamic_rotate %138 by %c1_i32_44 dim 0 : vector<256x128xf32>, i32 -> vector<256x128xf32>
    %cst_45 = arith.constant 0xFF800000 : f32
    %146 = vector.shape_cast %30 : vector<256x1xi1> to vector<256x1xi1>
    %147 = vector.broadcast %146 : vector<256x1xi1> to vector<256x128xi1>
    %148 = vector.broadcast %cst_45 : f32 to vector<256x128xf32>
    %149 = arith.select %147, %145, %148 : vector<256x128xi1>, vector<256x128xf32>
    %150 = arith.maximumf %144, %149 : vector<256x128xf32>
    %c254_i32_46 = arith.constant 254 : i32
    %151 = tpu.dynamic_rotate %138 by %c254_i32_46 dim 0 : vector<256x128xf32>, i32 -> vector<256x128xf32>
    %cst_47 = arith.constant 0xFF800000 : f32
    %152 = vector.shape_cast %32 : vector<256x1xi1> to vector<256x1xi1>
    %153 = vector.broadcast %152 : vector<256x1xi1> to vector<256x128xi1>
    %154 = vector.broadcast %cst_47 : f32 to vector<256x128xf32>
    %155 = arith.select %153, %151, %154 : vector<256x128xi1>, vector<256x128xf32>
    %156 = arith.maximumf %150, %155 : vector<256x128xf32>
    %c2_i32_48 = arith.constant 2 : i32
    %157 = tpu.dynamic_rotate %138 by %c2_i32_48 dim 0 : vector<256x128xf32>, i32 -> vector<256x128xf32>
    %cst_49 = arith.constant 0xFF800000 : f32
    %158 = vector.shape_cast %34 : vector<256x1xi1> to vector<256x1xi1>
    %159 = vector.broadcast %158 : vector<256x1xi1> to vector<256x128xi1>
    %160 = vector.broadcast %cst_49 : f32 to vector<256x128xf32>
    %161 = arith.select %159, %157, %160 : vector<256x128xi1>, vector<256x128xf32>
    %162 = arith.maximumf %156, %161 : vector<256x128xf32>
    %c240_i32_50 = arith.constant 240 : i32
    %163 = tpu.dynamic_rotate %162 by %c240_i32_50 dim 0 : vector<256x128xf32>, i32 -> vector<256x128xf32>
    %cst_51 = arith.constant 0xFF800000 : f32
    %164 = vector.shape_cast %36 : vector<256x1xi1> to vector<256x1xi1>
    %165 = vector.broadcast %164 : vector<256x1xi1> to vector<256x128xi1>
    %166 = vector.broadcast %cst_51 : f32 to vector<256x128xf32>
    %167 = arith.select %165, %163, %166 : vector<256x128xi1>, vector<256x128xf32>
    %168 = arith.maximumf %162, %167 : vector<256x128xf32>
    %c16_i32_52 = arith.constant 16 : i32
    %169 = tpu.dynamic_rotate %162 by %c16_i32_52 dim 0 : vector<256x128xf32>, i32 -> vector<256x128xf32>
    %cst_53 = arith.constant 0xFF800000 : f32
    %170 = vector.shape_cast %38 : vector<256x1xi1> to vector<256x1xi1>
    %171 = vector.broadcast %170 : vector<256x1xi1> to vector<256x128xi1>
    %172 = vector.broadcast %cst_53 : f32 to vector<256x128xf32>
    %173 = arith.select %171, %169, %172 : vector<256x128xi1>, vector<256x128xf32>
    %174 = arith.maximumf %168, %173 : vector<256x128xf32>
    %c224_i32_54 = arith.constant 224 : i32
    %175 = tpu.dynamic_rotate %162 by %c224_i32_54 dim 0 : vector<256x128xf32>, i32 -> vector<256x128xf32>
    %cst_55 = arith.constant 0xFF800000 : f32
    %176 = vector.shape_cast %40 : vector<256x1xi1> to vector<256x1xi1>
    %177 = vector.broadcast %176 : vector<256x1xi1> to vector<256x128xi1>
    %178 = vector.broadcast %cst_55 : f32 to vector<256x128xf32>
    %179 = arith.select %177, %175, %178 : vector<256x128xi1>, vector<256x128xf32>
    %180 = arith.maximumf %174, %179 : vector<256x128xf32>
    %c32_i32_56 = arith.constant 32 : i32
    %181 = tpu.dynamic_rotate %162 by %c32_i32_56 dim 0 : vector<256x128xf32>, i32 -> vector<256x128xf32>
    %cst_57 = arith.constant 0xFF800000 : f32
    %182 = vector.shape_cast %42 : vector<256x1xi1> to vector<256x1xi1>
    %183 = vector.broadcast %182 : vector<256x1xi1> to vector<256x128xi1>
    %184 = vector.broadcast %cst_57 : f32 to vector<256x128xf32>
    %185 = arith.select %183, %181, %184 : vector<256x128xi1>, vector<256x128xf32>
    %186 = arith.maximumf %180, %185 : vector<256x128xf32>
    %c0_58 = arith.constant 0 : index
    %c0_59 = arith.constant 0 : index
    %c0_60 = arith.constant 0 : index
    %187 = vector.load %arg4[%c0_58, %c0_59, %c0_60] : memref<4x128x128xf32, #tpu.memory_space<vmem>>, vector<1x128x128xf32>
    %188 = vector.shape_cast %187 : vector<1x128x128xf32> to vector<128x128xf32>
    %cst_61 = arith.constant dense<0.000000e+00> : vector<256x128xf32>
    %189 = tpu.matmul %9, %188, %cst_61 {dimension_numbers = #tpu.dot_dimension_numbers<[1], [0], [0], [1], [0, 0, 1, 1], [], []>} : vector<256x128xf32>, vector<128x128xf32>, vector<256x128xf32> -> vector<256x128xf32>
    %c1 = arith.constant 1 : index
    %c0_62 = arith.constant 0 : index
    %c0_63 = arith.constant 0 : index
    %190 = vector.load %arg4[%c1, %c0_62, %c0_63] : memref<4x128x128xf32, #tpu.memory_space<vmem>>, vector<1x128x128xf32>
    %191 = vector.shape_cast %190 : vector<1x128x128xf32> to vector<128x128xf32>
    %cst_64 = arith.constant dense<0.000000e+00> : vector<256x128xf32>
    %192 = tpu.matmul %90, %191, %cst_64 {dimension_numbers = #tpu.dot_dimension_numbers<[1], [0], [0], [1], [0, 0, 1, 1], [], []>} : vector<256x128xf32>, vector<128x128xf32>, vector<256x128xf32> -> vector<256x128xf32>
    %193 = arith.addf %189, %192 : vector<256x128xf32>
    %c2 = arith.constant 2 : index
    %c0_65 = arith.constant 0 : index
    %c0_66 = arith.constant 0 : index
    %194 = vector.load %arg4[%c2, %c0_65, %c0_66] : memref<4x128x128xf32, #tpu.memory_space<vmem>>, vector<1x128x128xf32>
    %195 = vector.shape_cast %194 : vector<1x128x128xf32> to vector<128x128xf32>
    %cst_67 = arith.constant dense<0.000000e+00> : vector<256x128xf32>
    %196 = tpu.matmul %138, %195, %cst_67 {dimension_numbers = #tpu.dot_dimension_numbers<[1], [0], [0], [1], [0, 0, 1, 1], [], []>} : vector<256x128xf32>, vector<128x128xf32>, vector<256x128xf32> -> vector<256x128xf32>
    %197 = arith.addf %193, %196 : vector<256x128xf32>
    %c3 = arith.constant 3 : index
    %c0_68 = arith.constant 0 : index
    %c0_69 = arith.constant 0 : index
    %198 = vector.load %arg4[%c3, %c0_68, %c0_69] : memref<4x128x128xf32, #tpu.memory_space<vmem>>, vector<1x128x128xf32>
    %199 = vector.shape_cast %198 : vector<1x128x128xf32> to vector<128x128xf32>
    %cst_70 = arith.constant dense<0.000000e+00> : vector<256x128xf32>
    %200 = tpu.matmul %186, %199, %cst_70 {dimension_numbers = #tpu.dot_dimension_numbers<[1], [0], [0], [1], [0, 0, 1, 1], [], []>} : vector<256x128xf32>, vector<128x128xf32>, vector<256x128xf32> -> vector<256x128xf32>
    %201 = arith.addf %197, %200 : vector<256x128xf32>
    %c0_71 = arith.constant 0 : index
    %c0_72 = arith.constant 0 : index
    %202 = vector.load %arg5[%c0_71, %c0_72] : memref<1x128xf32, #tpu.memory_space<vmem>>, vector<1x128xf32>
    %203 = vector.broadcast %202 : vector<1x128xf32> to vector<256x128xf32>
    %204 = arith.addf %201, %203 : vector<256x128xf32>
    %cst_73 = arith.constant 1.000000e-01 : f32
    %205 = vector.broadcast %cst_73 : f32 to vector<256x128xf32>
    %206 = arith.mulf %205, %204 : vector<256x128xf32>
    %207 = arith.maximumf %204, %206 : vector<256x128xf32>
    %c0_74 = arith.constant 0 : index
    %c0_75 = arith.constant 0 : index
    %c0_76 = arith.constant 0 : index
    %208 = vector.load %arg6[%c0_74, %c0_75, %c0_76] : memref<1x256x128xf32, #tpu.memory_space<vmem>>, vector<1x256x128xf32>
    %209 = vector.shape_cast %208 : vector<1x256x128xf32> to vector<256x128xf32>
    %210 = vector.shape_cast %207 : vector<256x128xf32> to vector<1x256x128xf32>
    tpu.vector_store %arg6[%c0_74, %c0_75, %c0_76], %210 {strides = array<i32>} : memref<1x256x128xf32, #tpu.memory_space<vmem>>, vector<1x256x128xf32>,
    return
  }
  func.func @transform_0(%arg0: i32) -> (i32, i32, i32) {
    %c0_i32 = arith.constant 0 : i32
    %c0_i32_0 = arith.constant 0 : i32
    %c0_i32_1 = arith.constant 0 : i32
    return %arg0, %c0_i32, %c0_i32_0 : i32, i32, i32
  }
  func.func @transform_1(%arg0: i32) -> (i32, i32) {
    %c0_i32 = arith.constant 0 : i32
    %c0_i32_0 = arith.constant 0 : i32
    %c0_i32_1 = arith.constant 0 : i32
    return %c0_i32, %c0_i32_0 : i32, i32
  }
  func.func @transform_2(%arg0: i32) -> (i32, i32) {
    %c0_i32 = arith.constant 0 : i32
    %c0_i32_0 = arith.constant 0 : i32
    %c0_i32_1 = arith.constant 0 : i32
    return %c0_i32, %c0_i32_0 : i32, i32
  }
  func.func @transform_3(%arg0: i32) -> (i32, i32, i32) {
    %c0_i32 = arith.constant 0 : i32
    %c0_i32_0 = arith.constant 0 : i32
    %c0_i32_1 = arith.constant 0 : i32
    %c0_i32_2 = arith.constant 0 : i32
    return %c0_i32, %c0_i32_0, %c0_i32_1 : i32, i32, i32
  }
  func.func @transform_4(%arg0: i32) -> (i32, i32) {
    %c0_i32 = arith.constant 0 : i32
    %c0_i32_0 = arith.constant 0 : i32
    %c0_i32_1 = arith.constant 0 : i32
    return %c0_i32, %c0_i32_0 : i32, i32
  }
  func.func @transform_5(%arg0: i32) -> (i32, i32, i32) {
    %c0_i32 = arith.constant 0 : i32
    %c0_i32_0 = arith.constant 0 : i32
    %c0_i32_1 = arith.constant 0 : i32
    return %arg0, %c0_i32, %c0_i32_0 : i32, i32, i32
  }
}

</mosaic_0001>

<llo_original>
// kernel: tpu_custom_call.1
$region0: #{tpu_custom_call.1}
  #allocation0 [shape = 'u32[]', space=smem, size = 0x4, offset = 0x4, fixed_abs, tag = 'smem constant byte address 0x4 - core index']
  #allocation1 [shape = 'u32[144,128]{1,0:T(1,128)}', space=vmem, size = 0x12000, scoped, tag = 'internal scratch']
  %s0 = inlined_call_operand.hbm [shape: f32[2,256,128], index: 0, kind: input, shape index: {}]
  %s1 = inlined_call_operand.hbm [shape: f32[128,128], index: 1, kind: input, shape index: {}]
  %s2 = inlined_call_operand.vmem [shape: f32[1,128], index: 2, kind: input, shape index: {}]
  %s3 = inlined_call_operand.hbm [shape: f32[4,128,128], index: 3, kind: input, shape index: {}]
  %s4 = inlined_call_operand.vmem [shape: f32[1,128], index: 4, kind: input, shape index: {}]
  %s5 = inlined_call_operand.hbm [shape: f32[2,256,128], index: 5, kind: output, shape index: {}]
  %s6 = sld [smem:[#allocation0]]
  $region65: #{tpu_custom_call.1} parent=0
    _
  %s8 = ssub.s32 1, %s6
  %s9 = scalar_select 0, %s8, %s6
  $region1: #{tpu_custom_call.1} parent=0
    #allocation2 [shape = 'u8[262144]{0}', space=vmem, size = 0x40000, scoped, tag = 'input window, operand 0']
    #allocation3 [shape = 's32[2]{0}', space=sflag, size = 0x8, scoped, tag = 'scoped memory for tpu_custom_call.1']
    #allocation4 [shape = 's32[2]{0}', space=sflag, size = 0x8, scoped, tag = 'scoped memory for tpu_custom_call.1']
    #allocation5 [shape = 'u8[65536]{0}', space=vmem, size = 0x10000, scoped, tag = 'input window, operand 1, single buffered']
    #allocation6 [shape = 's32[1]{0}', space=sflag, size = 0x4, scoped, tag = 'scoped memory for tpu_custom_call.1']
    #allocation7 [shape = 'u8[262144]{0}', space=vmem, size = 0x40000, scoped, tag = 'input window, operand 3, single buffered']
    #allocation8 [shape = 'u8[262144]{0}', space=vmem, size = 0x40000, scoped, tag = 'output window, operand 0']
    %10 = vsyncpa [#allocation3], 0
    %s11 = scalar_lea.sflag [#allocation3], 1
    %12 = vsyncpa %s11, 0
    %13 = vsyncpa [#allocation6], 0
    %14 = vsyncpa [#allocation4], 0
    %s15 = scalar_lea.sflag [#allocation4], 1
    %16 = vsyncpa %s15, 0
    loop: start=0, step=1, limit=4
    $region2: #{tpu_custom_call.1} parent=1 // loop_pre_header
      _
    $region3: #{tpu_custom_call.1} parent=1 // loop_header
      %s18 = sphi 0, %s22
      %p19 = scmp.ge.s32.totalorder %s18, 4
      %s28 = sphi 0, %s30
      %s31 = sphi 0, %s28
      %s32 = sphi 0, %s31
      %s48 = sphi 0, %s32
      %s52 = sphi 0, %s52
      %s54 = sphi 0, %s52
      %s55 = sphi 0, %s54
      %s69 = sphi 0, %s55
      %s73 = sphi 0, %s73
      %s75 = sphi 0, %s73
      %s76 = sphi 0, %s75
      %s90 = sphi 0, %s76
      %s94 = sphi 0, %s94
      %s96 = sphi 0, %s94
      %s97 = sphi 0, %s96
      %s111 = sphi 0, %s97
      %s115 = sphi 0, %s115
      %s117 = sphi 0, %s115
      %s118 = sphi 0, %s117
      %s132 = sphi 0, %s118
      %s138 = sphi 0, %s140
      %s141 = sphi 0, %s138
      %s142 = sphi 0, %s141
      %s158 = sphi 0, %s142
    $region4: #{tpu_custom_call.1} parent=1 // loop_header_branch
      %21 = sbr.rel (%p19) target = $region8
    $region5: #{tpu_custom_call.1} parent=1 // loop_body
      %s23 = ssub.s32 %s18, 1
      %s24 = ssub.s32 %s18, 2
      %s25 = sadd.s32 %s18, 1
      %s26 = ssub.s32 %s18, %s25
      %p27 = scmp.eq.s32.totalorder %s26, 0
      %s29 = sadd.s32 %s28, 1
      %s30 = scalar_select %p27, %s28, %s29
      %p33 = pneg %p27
      %p34 = scmp.eq.s32.totalorder %s18, 1
      %p35 = por %p33, %p34
      %p36 = scmp.ne.s32.totalorder %s28, %s31
      %p37 = scmp.eq.s32.totalorder %s18, 0
      %p38 = por %p36, %p37
      %p39 = scmp.ne.s32.totalorder %s28, %s31
      %p40 = scmp.eq.s32.totalorder %s23, 1
      %p41 = por %p39, %p40
      %p42 = scmp.ne.s32.totalorder %s31, %s32
      %p43 = scmp.eq.s32.totalorder %s23, 0
      %p44 = por %p42, %p43
      %p45 = scmp.ne.s32.totalorder %s31, %s32
      %p46 = scmp.eq.s32.totalorder %s24, 1
      %p47 = por %p45, %p46
      %p49 = scmp.ne.s32.totalorder %s32, %s48
      %p50 = scmp.eq.s32.totalorder %s24, 0
      %p51 = por %p49, %p50
      %s53 = sadd.s32 %s52, 1
      %p56 = scmp.eq.s32.totalorder %s18, 1
      %p57 = scmp.ne.s32.totalorder %s52, %s54
      %p58 = scmp.eq.s32.totalorder %s18, 0
      %p59 = por %p57, %p58
      %p60 = scmp.ne.s32.totalorder %s52, %s54
      %p61 = scmp.eq.s32.totalorder %s23, 1
      %p62 = por %p60, %p61
      %p63 = scmp.ne.s32.totalorder %s54, %s55
      %p64 = scmp.eq.s32.totalorder %s23, 0
      %p65 = por %p63, %p64
      %p66 = scmp.ne.s32.totalorder %s54, %s55
      %p67 = scmp.eq.s32.totalorder %s24, 1
      %p68 = por %p66, %p67
      %p70 = scmp.ne.s32.totalorder %s55, %s69
      %p71 = scmp.eq.s32.totalorder %s24, 0
      %p72 = por %p70, %p71
      %s74 = sadd.s32 %s73, 1
      %p77 = scmp.eq.s32.totalorder %s18, 1
      %p78 = scmp.ne.s32.totalorder %s73, %s75
      %p79 = scmp.eq.s32.totalorder %s18, 0
      %p80 = por %p78, %p79
      %p81 = scmp.ne.s32.totalorder %s73, %s75
      %p82 = scmp.eq.s32.totalorder %s23, 1
      %p83 = por %p81, %p82
      %p84 = scmp.ne.s32.totalorder %s75, %s76
      %p85 = scmp.eq.s32.totalorder %s23, 0
      %p86 = por %p84, %p85
      %p87 = scmp.ne.s32.totalorder %s75, %s76
      %p88 = scmp.eq.s32.totalorder %s24, 1
      %p89 = por %p87, %p88
      %p91 = scmp.ne.s32.totalorder %s76, %s90
      %p92 = scmp.eq.s32.totalorder %s24, 0
      %p93 = por %p91, %p92
      %s95 = sadd.s32 %s94, 1
      %p98 = scmp.eq.s32.totalorder %s18, 1
      %p99 = scmp.ne.s32.totalorder %s94, %s96
      %p100 = scmp.eq.s32.totalorder %s18, 0
      %p101 = por %p99, %p100
      %p102 = scmp.ne.s32.totalorder %s94, %s96
      %p103 = scmp.eq.s32.totalorder %s23, 1
      %p104 = por %p102, %p103
      %p105 = scmp.ne.s32.totalorder %s96, %s97
      %p106 = scmp.eq.s32.totalorder %s23, 0
      %p107 = por %p105, %p106
      %p108 = scmp.ne.s32.totalorder %s96, %s97
      %p109 = scmp.eq.s32.totalorder %s24, 1
      %p110 = por %p108, %p109
      %p112 = scmp.ne.s32.totalorder %s97, %s111
      %p113 = scmp.eq.s32.totalorder %s24, 0
      %p114 = por %p112, %p113
      %s116 = sadd.s32 %s115, 1
      %p119 = scmp.eq.s32.totalorder %s18, 1
      %p120 = scmp.ne.s32.totalorder %s115, %s117
      %p121 = scmp.eq.s32.totalorder %s18, 0
      %p122 = por %p120, %p121
      %p123 = scmp.ne.s32.totalorder %s115, %s117
      %p124 = scmp.eq.s32.totalorder %s23, 1
      %p125 = por %p123, %p124
      %p126 = scmp.ne.s32.totalorder %s117, %s118
      %p127 = scmp.eq.s32.totalorder %s23, 0
      %p128 = por %p126, %p127
      %p129 = scmp.ne.s32.totalorder %s117, %s118
      %p130 = scmp.eq.s32.totalorder %s24, 1
      %p131 = por %p129, %p130
      %p133 = scmp.ne.s32.totalorder %s118, %s132
      %p134 = scmp.eq.s32.totalorder %s24, 0
      %p135 = por %p133, %p134
      %s136 = ssub.s32 %s18, %s25
      %p137 = scmp.eq.s32.totalorder %s136, 0
      %s139 = sadd.s32 %s138, 1
      %s140 = scalar_select %p137, %s138, %s139
      %p143 = pneg %p137
      %p144 = scmp.eq.s32.totalorder %s18, 1
      %p145 = por %p143, %p144
      %p146 = scmp.ne.s32.totalorder %s138, %s141
      %p147 = scmp.eq.s32.totalorder %s18, 0
      %p148 = por %p146, %p147
      %p149 = scmp.ne.s32.totalorder %s138, %s141
      %p150 = scmp.eq.s32.totalorder %s23, 1
      %p151 = por %p149, %p150
      %p152 = scmp.ne.s32.totalorder %s141, %s142
      %p153 = scmp.eq.s32.totalorder %s23, 0
      %p154 = por %p152, %p153
      %p155 = scmp.ne.s32.totalorder %s141, %s142
      %p156 = scmp.eq.s32.totalorder %s24, 1
      %p157 = por %p155, %p156
      %p159 = scmp.ne.s32.totalorder %s142, %s158
      %p160 = scmp.eq.s32.totalorder %s24, 0
      %p161 = por %p159, %p160
      %p162 = scmp.le.s32.totalorder 1, %s18
      %p163 = scmp.lt.s32.totalorder %s18, 3
      %p164 = pnand %p162, %p163
      %p165 = pneg %p164
      // Predicated region
      $region9: #{tpu_custom_call.1} parent=5 // pred_check
        _
      $region10: #{tpu_custom_call.1} parent=5 // pred_check_branch
        %167 = sbr.rel (%p164) target = $region12
      $region11: #{tpu_custom_call.1} parent=5 // pred_region
        %s168 = ssub.s32 %s18, 1
        // Predicated region
        $region13: #{tpu_custom_call.1} parent=11 // pred_check
          %p169 = pneg %p65
        $region14: #{tpu_custom_call.1} parent=11 // pred_check_branch
          %171 = sbr.rel (%p169) target = $region16
        $region15: #{tpu_custom_call.1} parent=11 // pred_region
          %s173 = ssub.s32 2048, 2048
          %174 = vsyncadd [#allocation6], %s173
          %s175 = sshll.u32 [#allocation5], 4
          %s176 = int_to_ptr.vmem [resolvable:$true] %s175
          %181 = dma.hbm_to_vmem [thread:$0]  %s1, 2048, %s176, [#allocation6], 128, 128, 8
        $region16: #{tpu_custom_call.1} parent=11 // pred_fallthru
          _
        // Predicated region
        $region17: #{tpu_custom_call.1} parent=11 // pred_check
          %p182 = pneg %p86
        $region18: #{tpu_custom_call.1} parent=11 // pred_check_branch
          %184 = sbr.rel (%p182) target = $region20
        $region19: #{tpu_custom_call.1} parent=11 // pred_region
          _
        $region20: #{tpu_custom_call.1} parent=11 // pred_fallthru
          _
        // Predicated region
        $region21: #{tpu_custom_call.1} parent=11 // pred_check
          %p185 = pneg %p107
        $region22: #{tpu_custom_call.1} parent=11 // pred_check_branch
          %187 = sbr.rel (%p185) target = $region24
        $region23: #{tpu_custom_call.1} parent=11 // pred_region
          %s189 = ssub.s32 8192, 8192
          %190 = vsyncadd [#allocation6], %s189
          %s191 = sshll.u32 [#allocation7], 4
          %s192 = int_to_ptr.vmem [resolvable:$true] %s191
          %197 = dma.hbm_to_vmem [thread:$0]  %s3, 8192, %s192, [#allocation6], 128, 128, 8
        $region24: #{tpu_custom_call.1} parent=11 // pred_fallthru
          _
        // Predicated region
        $region25: #{tpu_custom_call.1} parent=11 // pred_check
          %p198 = pneg %p128
        $region26: #{tpu_custom_call.1} parent=11 // pred_check_branch
          %200 = sbr.rel (%p198) target = $region28
        $region27: #{tpu_custom_call.1} parent=11 // pred_region
          _
        $region28: #{tpu_custom_call.1} parent=11 // pred_fallthru
          _
      $region12: #{tpu_custom_call.1} parent=5 // pred_fallthru
        _
      %p201 = scmp.lt.s32.totalorder %s18, 2
      // Predicated region
      $region29: #{tpu_custom_call.1} parent=5 // pred_check
        %p202 = pneg %p201
      $region30: #{tpu_custom_call.1} parent=5 // pred_check_branch
        %204 = sbr.rel (%p202) target = $region32
      $region31: #{tpu_custom_call.1} parent=5 // pred_region
        // Predicated region
        $region33: #{tpu_custom_call.1} parent=31 // pred_check
          %p205 = pneg %p38
        $region34: #{tpu_custom_call.1} parent=31 // pred_check_branch
          %207 = sbr.rel (%p205) target = $region36
        $region35: #{tpu_custom_call.1} parent=31 // pred_region
          %s208 = sand.u32 %s28, 1
          %s209 = scalar_lea.sflag [#allocation3], %s208
          %s210 = sand.u32 %s28, 1
          %s211 = smul.addr %s210, 256
          %s212 = scalar_lea.vmem [#allocation2], %s211
          %s214 = ssub.s32 4096, 4096
          %215 = vsyncadd %s209, %s214
          %s216 = smul.addr %s18, 32
          %s217 = smul.addr %s216, 128
          %s218 = scalar_lea.hbm %s0, %s217
          %s219 = sshll.u32 %s212, 4
          %s220 = int_to_ptr.vmem [resolvable:$true] %s219
          %225 = dma.hbm_to_vmem [thread:$0]  %s218, 4096, %s220, %s209, 128, 128, 8
        $region36: #{tpu_custom_call.1} parent=31 // pred_fallthru
          _
      $region32: #{tpu_custom_call.1} parent=5 // pred_fallthru
        _
      %p226 = scmp.le.s32.totalorder 1, %s18
      %p227 = scmp.lt.s32.totalorder %s18, 3
      %p228 = pnand %p226, %p227
      %p229 = pneg %p228
      // Predicated region
      $region37: #{tpu_custom_call.1} parent=5 // pred_check
        _
      $region38: #{tpu_custom_call.1} parent=5 // pred_check_branch
        %231 = sbr.rel (%p228) target = $region40
      $region39: #{tpu_custom_call.1} parent=5 // pred_region
        %s232 = ssub.s32 %s18, 1
        %s233 = sand.u32 %s31, 1
        %s234 = scalar_lea.sflag [#allocation3], %s233
        %s235 = sand.u32 %s31, 1
        %s236 = smul.addr %s235, 256
        %s237 = scalar_lea.vmem [#allocation2], %s236
        // Predicated region
        $region41: #{tpu_custom_call.1} parent=39 // pred_check
          %p238 = pneg %p44
        $region42: #{tpu_custom_call.1} parent=39 // pred_check_branch
          %240 = sbr.rel (%p238) target = $region44
        $region43: #{tpu_custom_call.1} parent=39 // pred_region
          %241 = dma.done %s234, 4096
        $region44: #{tpu_custom_call.1} parent=39 // pred_fallthru
          _
        // Predicated region
        $region45: #{tpu_custom_call.1} parent=39 // pred_check
          %p242 = pneg %p65
        $region46: #{tpu_custom_call.1} parent=39 // pred_check_branch
          %244 = sbr.rel (%p242) target = $region48
        $region47: #{tpu_custom_call.1} parent=39 // pred_region
          %245 = dma.done [#allocation6], 2048
        $region48: #{tpu_custom_call.1} parent=39 // pred_fallthru
          _
        // Predicated region
        $region49: #{tpu_custom_call.1} parent=39 // pred_check
          %p246 = pneg %p107
        $region50: #{tpu_custom_call.1} parent=39 // pred_check_branch
          %248 = sbr.rel (%p246) target = $region52
        $region51: #{tpu_custom_call.1} parent=39 // pred_region
          %249 = dma.done [#allocation6], 8192
        $region52: #{tpu_custom_call.1} parent=39 // pred_fallthru
          _
        %s250 = sand.u32 %s31, 1
        %s251 = scalar_lea.sflag [#allocation3], %s250
        %s252 = sand.u32 %s31, 1
        %s253 = smul.addr %s252, 256
        %s254 = scalar_lea.vmem [#allocation2], %s253
        %p255 = pneg %p44
        %p256 = pneg %p41
        %p257 = pneg %p65
        %p258 = pneg %p62
        %p259 = pneg %p86
        %p260 = pneg %p83
        %p261 = pneg %p107
        %p262 = pneg %p104
        %p263 = pneg %p128
        %p264 = pneg %p125
        %p265 = pneg %p154
        %p266 = pneg %p151
        %s267 = sand.u32 %s141, 1
        %s268 = scalar_lea.sflag [#allocation4], %s267
        %s269 = sand.u32 %s141, 1
        %s270 = smul.addr %s269, 256
        %s271 = scalar_lea.vmem [#allocation8], %s270
        %v272 = vld [vmem:[%s237] sm:$0xff]
        %v273 = vld [vmem:[%s237 + $0x8] sm:$0xff]
        %v274 = vld [vmem:[%s237 + $0x10] sm:$0xff]
        %v275 = vld [vmem:[%s237 + $0x18] sm:$0xff]
        %v276 = vld [vmem:[%s237 + $0x20] sm:$0xff]
        %v277 = vld [vmem:[%s237 + $0x28] sm:$0xff]
        %v278 = vld [vmem:[%s237 + $0x30] sm:$0xff]
        %v279 = vld [vmem:[%s237 + $0x38] sm:$0xff]
        %v280 = vld [vmem:[%s237 + $0x40] sm:$0xff]
        %v281 = vld [vmem:[%s237 + $0x48] sm:$0xff]
        %v282 = vld [vmem:[%s237 + $0x50] sm:$0xff]
        %v283 = vld [vmem:[%s237 + $0x58] sm:$0xff]
        %v284 = vld [vmem:[%s237 + $0x60] sm:$0xff]
        %v285 = vld [vmem:[%s237 + $0x68] sm:$0xff]
        %v286 = vld [vmem:[%s237 + $0x70] sm:$0xff]
        %v287 = vld [vmem:[%s237 + $0x78] sm:$0xff]
        %v288 = vld [vmem:[%s237 + $0x80] sm:$0xff]
        %v289 = vld [vmem:[%s237 + $0x88] sm:$0xff]
        %v290 = vld [vmem:[%s237 + $0x90] sm:$0xff]
        %v291 = vld [vmem:[%s237 + $0x98] sm:$0xff]
        %v292 = vld [vmem:[%s237 + $0xa0] sm:$0xff]
        %v293 = vld [vmem:[%s237 + $0xa8] sm:$0xff]
        %v294 = vld [vmem:[%s237 + $0xb0] sm:$0xff]
        %v295 = vld [vmem:[%s237 + $0xb8] sm:$0xff]
        %v296 = vld [vmem:[%s237 + $0xc0] sm:$0xff]
        %v297 = vld [vmem:[%s237 + $0xc8] sm:$0xff]
        %v298 = vld [vmem:[%s237 + $0xd0] sm:$0xff]
        %v299 = vld [vmem:[%s237 + $0xd8] sm:$0xff]
        %v300 = vld [vmem:[%s237 + $0xe0] sm:$0xff]
        %v301 = vld [vmem:[%s237 + $0xe8] sm:$0xff]
        %v302 = vld [vmem:[%s237 + $0xf0] sm:$0xff]
        %v303 = vld [vmem:[%s237 + $0xf8] sm:$0xff]
        %v304 = vld [vmem:[#allocation5] sm:$0xff]
        %v305 = vld [vmem:[#allocation5 + $0x8] sm:$0xff]
        %v306 = vld [vmem:[#allocation5 + $0x10] sm:$0xff]
        %v307 = vld [vmem:[#allocation5 + $0x18] sm:$0xff]
        %v308 = vld [vmem:[#allocation5 + $0x20] sm:$0xff]
        %v309 = vld [vmem:[#allocation5 + $0x28] sm:$0xff]
        %v310 = vld [vmem:[#allocation5 + $0x30] sm:$0xff]
        %v311 = vld [vmem:[#allocation5 + $0x38] sm:$0xff]
        %v312 = vld [vmem:[#allocation5 + $0x40] sm:$0xff]
        %v313 = vld [vmem:[#allocation5 + $0x48] sm:$0xff]
        %v314 = vld [vmem:[#allocation5 + $0x50] sm:$0xff]
        %v315 = vld [vmem:[#allocation5 + $0x58] sm:$0xff]
        %v316 = vld [vmem:[#allocation5 + $0x60] sm:$0xff]
        %v317 = vld [vmem:[#allocation5 + $0x68] sm:$0xff]
        %v318 = vld [vmem:[#allocation5 + $0x70] sm:$0xff]
        %v319 = vld [vmem:[#allocation5 + $0x78] sm:$0xff]
        %v320 = vld [vmem:[%s2] sm:$0x1]
        %v322 = vlaneseq
        %v323 = vshrl.u32 %v322, 7
        %v324 = vsub.s32 0, %v323
        %v325 = vrot.slane %v320, %v324
        %327 = vmatprep.subr.mxu0 0.0
        %328 = vmatpush1.msra.mxu0 %v304
        %329 = vmatprep.subr.mxu0 0.0
        %330 = vmatpush1.msra.mxu0 %v305
        %331 = vmatprep.subr.mxu0 0.0
        %332 = vmatpush1.msra.mxu0 %v306
        %333 = vmatprep.subr.mxu0 0.0
        %334 = vmatpush1.msra.mxu0 %v307
        %335 = vmatprep.subr.mxu0 0.0
        %336 = vmatpush1.msra.mxu0 %v308
        %337 = vmatprep.subr.mxu0 0.0
        %338 = vmatpush1.msra.mxu0 %v309
        %339 = vmatprep.subr.mxu0 0.0
        %340 = vmatpush1.msra.mxu0 %v310
        %341 = vmatprep.subr.mxu0 0.0
        %342 = vmatpush1.msra.mxu0 %v311
        %343 = vmatprep.subr.mxu0 0.0
        %344 = vmatpush1.msra.mxu0 %v312
        %345 = vmatprep.subr.mxu0 0.0
        %346 = vmatpush1.msra.mxu0 %v313
        %347 = vmatprep.subr.mxu0 0.0
        %348 = vmatpush1.msra.mxu0 %v314
        %349 = vmatprep.subr.mxu0 0.0
        %350 = vmatpush1.msra.mxu0 %v315
        %351 = vmatprep.subr.mxu0 0.0
        %352 = vmatpush1.msra.mxu0 %v316
        %353 = vmatprep.subr.mxu0 0.0
        %354 = vmatpush1.msra.mxu0 %v317
        %355 = vmatprep.subr.mxu0 0.0
        %356 = vmatpush1.msra.mxu0 %v318
        %357 = vmatprep.subr.mxu0 0.0
        %358 = vmatpush1.msra.mxu0 %v319
        %359 = vmatprep.subr.mxu0 0.0
        %360 = vmatpush1.msra.mxu0 0.0
        %361 = vmatprep.subr.mxu0 0.0
        %362 = vmatpush1.msra.mxu0 0.0
        %363 = vmatprep.subr.mxu0 0.0
        %364 = vmatpush1.msra.mxu0 0.0
        %365 = vmatprep.subr.mxu0 0.0
        %366 = vmatpush1.msra.mxu0 0.0
        %367 = vmatprep.subr.mxu0 0.0
        %368 = vmatpush1.msra.mxu0 0.0
        %369 = vmatprep.subr.mxu0 0.0
        %370 = vmatpush1.msra.mxu0 0.0
        %371 = vmatprep.subr.mxu0 0.0
        %372 = vmatpush1.msra.mxu0 0.0
        %373 = vmatprep.subr.mxu0 0.0
        %374 = vmatpush1.msra.mxu0 0.0
        %375 = vmatprep.subr.mxu0 0.0
        %376 = vmatpush1.msra.mxu0 0.0
        %377 = vmatprep.subr.mxu0 0.0
        %378 = vmatpush1.msra.mxu0 0.0
        %379 = vmatprep.subr.mxu0 0.0
        %380 = vmatpush1.msra.mxu0 0.0
        %381 = vmatprep.subr.mxu0 0.0
        %382 = vmatpush1.msra.mxu0 0.0
        %383 = vmatprep.subr.mxu0 0.0
        %384 = vmatpush1.msra.mxu0 0.0
        %385 = vmatprep.subr.mxu0 0.0
        %386 = vmatpush1.msra.mxu0 0.0
        %387 = vmatprep.subr.mxu0 0.0
        %388 = vmatpush1.msra.mxu0 0.0
        %389 = vmatprep.subr.mxu0 0.0
        %390 = vmatpush1.msra.mxu0 0.0
        %391 = vmatprep.mubr.f32.mxu0 0.0
        %392 = vmatmul.mubr.f32.gmra.mrb[0].mxu0 %v272
        %v393 = vpop.f32.mrb[0].mxu0
        %v394 = vadd.f32 %v325, %v393
        %v395 = vpop.f32.mrb[0].mxu0
        %396 = vmatprep.mubr.f32.mxu0 0.0
        %397 = vmatmul.mubr.f32.gmra.mrb[0].mxu0 %v273
        %v398 = vpop.f32.mrb[0].mxu0
        %v399 = vadd.f32 %v325, %v398
        %v400 = vpop.f32.mrb[0].mxu0
        %401 = vmatprep.mubr.f32.mxu0 0.0
        %402 = vmatmul.mubr.f32.gmra.mrb[0].mxu0 %v274
        %v403 = vpop.f32.mrb[0].mxu0
        %v404 = vadd.f32 %v325, %v403
        %v405 = vpop.f32.mrb[0].mxu0
        %406 = vmatprep.mubr.f32.mxu0 0.0
        %407 = vmatmul.mubr.f32.gmra.mrb[0].mxu0 %v275
        %v408 = vpop.f32.mrb[0].mxu0
        %v409 = vadd.f32 %v325, %v408
        %v410 = vpop.f32.mrb[0].mxu0
        %411 = vmatprep.mubr.f32.mxu0 0.0
        %412 = vmatmul.mubr.f32.gmra.mrb[0].mxu0 %v276
        %v413 = vpop.f32.mrb[0].mxu0
        %v414 = vadd.f32 %v325, %v413
        %v415 = vpop.f32.mrb[0].mxu0
        %416 = vmatprep.mubr.f32.mxu0 0.0
        %417 = vmatmul.mubr.f32.gmra.mrb[0].mxu0 %v277
        %v418 = vpop.f32.mrb[0].mxu0
        %v419 = vadd.f32 %v325, %v418
        %v420 = vpop.f32.mrb[0].mxu0
        %421 = vmatprep.mubr.f32.mxu0 0.0
        %422 = vmatmul.mubr.f32.gmra.mrb[0].mxu0 %v278
        %v423 = vpop.f32.mrb[0].mxu0
        %v424 = vadd.f32 %v325, %v423
        %v425 = vpop.f32.mrb[0].mxu0
        %426 = vmatprep.mubr.f32.mxu0 0.0
        %427 = vmatmul.mubr.f32.gmra.mrb[0].mxu0 %v279
        %v428 = vpop.f32.mrb[0].mxu0
        %v429 = vadd.f32 %v325, %v428
        %v430 = vpop.f32.mrb[0].mxu0
        %431 = vmatprep.mubr.f32.mxu0 0.0
        %432 = vmatmul.mubr.f32.gmra.mrb[0].mxu0 %v280
        %v433 = vpop.f32.mrb[0].mxu0
        %v434 = vadd.f32 %v325, %v433
        %v435 = vpop.f32.mrb[0].mxu0
        %436 = vmatprep.mubr.f32.mxu0 0.0
        %437 = vmatmul.mubr.f32.gmra.mrb[0].mxu0 %v281
        %v438 = vpop.f32.mrb[0].mxu0
        %v439 = vadd.f32 %v325, %v438
        %v440 = vpop.f32.mrb[0].mxu0
        %441 = vmatprep.mubr.f32.mxu0 0.0
        %442 = vmatmul.mubr.f32.gmra.mrb[0].mxu0 %v282
        %v443 = vpop.f32.mrb[0].mxu0
        %v444 = vadd.f32 %v325, %v443
        %v445 = vpop.f32.mrb[0].mxu0
        %446 = vmatprep.mubr.f32.mxu0 0.0
        %447 = vmatmul.mubr.f32.gmra.mrb[0].mxu0 %v283
        %v448 = vpop.f32.mrb[0].mxu0
        %v449 = vadd.f32 %v325, %v448
        %v450 = vpop.f32.mrb[0].mxu0
        %451 = vmatprep.mubr.f32.mxu0 0.0
        %452 = vmatmul.mubr.f32.gmra.mrb[0].mxu0 %v284
        %v453 = vpop.f32.mrb[0].mxu0
        %v454 = vadd.f32 %v325, %v453
        %v455 = vpop.f32.mrb[0].mxu0
        %456 = vmatprep.mubr.f32.mxu0 0.0
        %457 = vmatmul.mubr.f32.gmra.mrb[0].mxu0 %v285
        %v458 = vpop.f32.mrb[0].mxu0
        %v459 = vadd.f32 %v325, %v458
        %v460 = vpop.f32.mrb[0].mxu0
        %461 = vmatprep.mubr.f32.mxu0 0.0
        %462 = vmatmul.mubr.f32.gmra.mrb[0].mxu0 %v286
        %v463 = vpop.f32.mrb[0].mxu0
        %v464 = vadd.f32 %v325, %v463
        %v465 = vpop.f32.mrb[0].mxu0
        %466 = vmatprep.mubr.f32.mxu0 0.0
        %467 = vmatmul.mubr.f32.gmra.mrb[0].mxu0 %v287
        %v468 = vpop.f32.mrb[0].mxu0
        %v469 = vadd.f32 %v325, %v468
        %v470 = vpop.f32.mrb[0].mxu0
        %471 = vmatprep.mubr.f32.mxu0 0.0
        %472 = vmatmul.mubr.f32.gmra.mrb[0].mxu0 %v288
        %v473 = vpop.f32.mrb[0].mxu0
        %v474 = vadd.f32 %v325, %v473
        %v475 = vpop.f32.mrb[0].mxu0
        %476 = vmatprep.mubr.f32.mxu0 0.0
        %477 = vmatmul.mubr.f32.gmra.mrb[0].mxu0 %v289
        %v478 = vpop.f32.mrb[0].mxu0
        %v479 = vadd.f32 %v325, %v478
        %v480 = vpop.f32.mrb[0].mxu0
        %481 = vmatprep.mubr.f32.mxu0 0.0
        %482 = vmatmul.mubr.f32.gmra.mrb[0].mxu0 %v290
        %v483 = vpop.f32.mrb[0].mxu0
        %v484 = vadd.f32 %v325, %v483
        %v485 = vpop.f32.mrb[0].mxu0
        %486 = vmatprep.mubr.f32.mxu0 0.0
        %487 = vmatmul.mubr.f32.gmra.mrb[0].mxu0 %v291
        %v488 = vpop.f32.mrb[0].mxu0
        %v489 = vadd.f32 %v325, %v488
        %v490 = vpop.f32.mrb[0].mxu0
        %491 = vmatprep.mubr.f32.mxu0 0.0
        %492 = vmatmul.mubr.f32.gmra.mrb[0].mxu0 %v292
        %v493 = vpop.f32.mrb[0].mxu0
        %v494 = vadd.f32 %v325, %v493
        %v495 = vpop.f32.mrb[0].mxu0
        %496 = vmatprep.mubr.f32.mxu0 0.0
        %497 = vmatmul.mubr.f32.gmra.mrb[0].mxu0 %v293
        %v498 = vpop.f32.mrb[0].mxu0
        %v499 = vadd.f32 %v325, %v498
        %v500 = vpop.f32.mrb[0].mxu0
        %501 = vmatprep.mubr.f32.mxu0 0.0
        %502 = vmatmul.mubr.f32.gmra.mrb[0].mxu0 %v294
        %v503 = vpop.f32.mrb[0].mxu0
        %v504 = vadd.f32 %v325, %v503
        %v505 = vpop.f32.mrb[0].mxu0
        %506 = vmatprep.mubr.f32.mxu0 0.0
        %507 = vmatmul.mubr.f32.gmra.mrb[0].mxu0 %v295
        %v508 = vpop.f32.mrb[0].mxu0
        %v509 = vadd.f32 %v325, %v508
        %v510 = vpop.f32.mrb[0].mxu0
        %511 = vmatprep.mubr.f32.mxu0 0.0
        %512 = vmatmul.mubr.f32.gmra.mrb[0].mxu0 %v296
        %v513 = vpop.f32.mrb[0].mxu0
        %v514 = vadd.f32 %v325, %v513
        %v515 = vpop.f32.mrb[0].mxu0
        %516 = vmatprep.mubr.f32.mxu0 0.0
        %517 = vmatmul.mubr.f32.gmra.mrb[0].mxu0 %v297
        %v518 = vpop.f32.mrb[0].mxu0
        %v519 = vadd.f32 %v325, %v518
        %v520 = vpop.f32.mrb[0].mxu0
        %521 = vmatprep.mubr.f32.mxu0 0.0
        %522 = vmatmul.mubr.f32.gmra.mrb[0].mxu0 %v298
        %v523 = vpop.f32.mrb[0].mxu0
        %v524 = vadd.f32 %v325, %v523
        %v525 = vpop.f32.mrb[0].mxu0
        %526 = vmatprep.mubr.f32.mxu0 0.0
        %527 = vmatmul.mubr.f32.gmra.mrb[0].mxu0 %v299
        %v528 = vpop.f32.mrb[0].mxu0
        %v529 = vadd.f32 %v325, %v528
        %v530 = vpop.f32.mrb[0].mxu0
        %531 = vmatprep.mubr.f32.mxu0 0.0
        %532 = vmatmul.mubr.f32.gmra.mrb[0].mxu0 %v300
        %v533 = vpop.f32.mrb[0].mxu0
        %v534 = vadd.f32 %v325, %v533
        %v535 = vpop.f32.mrb[0].mxu0
        %536 = vmatprep.mubr.f32.mxu0 0.0
        %537 = vmatmul.mubr.f32.gmra.mrb[0].mxu0 %v301
        %v538 = vpop.f32.mrb[0].mxu0
        %v539 = vadd.f32 %v325, %v538
        %v540 = vpop.f32.mrb[0].mxu0
        %541 = vmatprep.mubr.f32.mxu0 0.0
        %542 = vmatmul.mubr.f32.gmra.mrb[0].mxu0 %v302
        %v543 = vpop.f32.mrb[0].mxu0
        %v544 = vadd.f32 %v325, %v543
        %v545 = vpop.f32.mrb[0].mxu0
        %546 = vmatprep.mubr.f32.mxu0 0.0
        %547 = vmatmul.mubr.f32.gmra.mrb[0].mxu0 %v303
        %v548 = vpop.f32.mrb[0].mxu0
        %v549 = vadd.f32 %v325, %v548
        %v550 = vpop.f32.mrb[0].mxu0
        %551 = vdwg.mxu0
        %v552 = vmul.f32 %v394, 0.1
        %v553 = vmul.f32 %v399, 0.1
        %v554 = vmul.f32 %v404, 0.1
        %v555 = vmul.f32 %v409, 0.1
        %v556 = vmul.f32 %v414, 0.1
        %v557 = vmul.f32 %v419, 0.1
        %v558 = vmul.f32 %v424, 0.1
        %v559 = vmul.f32 %v429, 0.1
        %v560 = vmul.f32 %v434, 0.1
        %v561 = vmul.f32 %v439, 0.1
        %v562 = vmul.f32 %v444, 0.1
        %v563 = vmul.f32 %v449, 0.1
        %v564 = vmul.f32 %v454, 0.1
        %v565 = vmul.f32 %v459, 0.1
        %v566 = vmul.f32 %v464, 0.1
        %v567 = vmul.f32 %v469, 0.1
        %v568 = vmul.f32 %v474, 0.1
        %v569 = vmul.f32 %v479, 0.1
        %v570 = vmul.f32 %v484, 0.1
        %v571 = vmul.f32 %v489, 0.1
        %v572 = vmul.f32 %v494, 0.1
        %v573 = vmul.f32 %v499, 0.1
        %v574 = vmul.f32 %v504, 0.1
        %v575 = vmul.f32 %v509, 0.1
        %v576 = vmul.f32 %v514, 0.1
        %v577 = vmul.f32 %v519, 0.1
        %v578 = vmul.f32 %v524, 0.1
        %v579 = vmul.f32 %v529, 0.1
        %v580 = vmul.f32 %v534, 0.1
        %v581 = vmul.f32 %v539, 0.1
        %v582 = vmul.f32 %v544, 0.1
        %v583 = vmul.f32 %v549, 0.1
        %v584 = vmax.f32 %v394, %v552
        %v585 = vmax.f32 %v399, %v553
        %v586 = vmax.f32 %v404, %v554
        %v587 = vmax.f32 %v409, %v555
        %v588 = vmax.f32 %v414, %v556
        %v589 = vmax.f32 %v419, %v557
        %v590 = vmax.f32 %v424, %v558
        %v591 = vmax.f32 %v429, %v559
        %v592 = vmax.f32 %v434, %v560
        %v593 = vmax.f32 %v439, %v561
        %v594 = vmax.f32 %v444, %v562
        %v595 = vmax.f32 %v449, %v563
        %v596 = vmax.f32 %v454, %v564
        %v597 = vmax.f32 %v459, %v565
        %v598 = vmax.f32 %v464, %v566
        %v599 = vmax.f32 %v469, %v567
        %v600 = vmax.f32 %v474, %v568
        %v601 = vmax.f32 %v479, %v569
        %v602 = vmax.f32 %v484, %v570
        %v603 = vmax.f32 %v489, %v571
        %v604 = vmax.f32 %v494, %v572
        %v605 = vmax.f32 %v499, %v573
        %v606 = vmax.f32 %v504, %v574
        %v607 = vmax.f32 %v509, %v575
        %v608 = vmax.f32 %v514, %v576
        %v609 = vmax.f32 %v519, %v577
        %v610 = vmax.f32 %v524, %v578
        %v611 = vmax.f32 %v529, %v579
        %v612 = vmax.f32 %v534, %v580
        %v613 = vmax.f32 %v539, %v581
        %v614 = vmax.f32 %v544, %v582
        %v615 = vmax.f32 %v549, %v583
        %v616 = vlaneseq
        %v617 = vshrl.u32 %v616, 7
        %v618 = vadd.s32 %v617, 8
        %v619 = vadd.s32 %v617, 16
        %v620 = vadd.s32 %v617, 24
        %v621 = vadd.s32 %v617, 32
        %v622 = vadd.s32 %v617, 40
        %v623 = vadd.s32 %v617, 48
        %v624 = vadd.s32 %v617, 56
        %v625 = vadd.s32 %v617, 64
        %v626 = vadd.s32 %v617, 72
        %v627 = vadd.s32 %v617, 80
        %v628 = vadd.s32 %v617, 88
        %v629 = vadd.s32 %v617, 96
        %v630 = vadd.s32 %v617, 104
        %v631 = vadd.s32 %v617, 112
        %v632 = vadd.s32 %v617, 120
        %v633 = vadd.s32 %v617, 128
        %v634 = vadd.s32 %v617, 136
        %v635 = vadd.s32 %v617, 144
        %v636 = vadd.s32 %v617, 152
        %v637 = vadd.s32 %v617, 160
        %v638 = vadd.s32 %v617, 168
        %v639 = vadd.s32 %v617, 176
        %v640 = vadd.s32 %v617, 184
        %v641 = vadd.s32 %v617, 192
        %v642 = vadd.s32 %v617, 200
        %v643 = vadd.s32 %v617, 208
        %v644 = vadd.s32 %v617, 216
        %v645 = vadd.s32 %v617, 224
        %v646 = vadd.s32 %v617, 232
        %v647 = vadd.s32 %v617, 240
        %v648 = vadd.s32 %v617, 248
        %vm649 = vcmp.lt.s32.totalorder %v617, 0
        %v650 = vsub.s32 0, %v617
        %v651 = vsel %vm649, %v650, %v617
        %v652 = vshrl.u32 %v651, 4
        %v653 = vand.u32 %v651, 15
        %v654 = vsub.s32 0, %v653
        %v655 = vsel %vm649, %v654, %v653
        %vm656 = vcmp.lt.s32.totalorder %v618, 0
        %v657 = vsub.s32 0, %v618
        %v658 = vsel %vm656, %v657, %v618
        %v659 = vshrl.u32 %v658, 4
        %v660 = vand.u32 %v658, 15
        %v661 = vsub.s32 0, %v660
        %v662 = vsel %vm656, %v661, %v660
        %vm663 = vcmp.lt.s32.totalorder %v619, 0
        %v664 = vsub.s32 0, %v619
        %v665 = vsel %vm663, %v664, %v619
        %v666 = vshrl.u32 %v665, 4
        %v667 = vand.u32 %v665, 15
        %v668 = vsub.s32 0, %v667
        %v669 = vsel %vm663, %v668, %v667
        %vm670 = vcmp.lt.s32.totalorder %v620, 0
        %v671 = vsub.s32 0, %v620
        %v672 = vsel %vm670, %v671, %v620
        %v673 = vshrl.u32 %v672, 4
        %v674 = vand.u32 %v672, 15
        %v675 = vsub.s32 0, %v674
        %v676 = vsel %vm670, %v675, %v674
        %vm677 = vcmp.lt.s32.totalorder %v621, 0
        %v678 = vsub.s32 0, %v621
        %v679 = vsel %vm677, %v678, %v621
        %v680 = vshrl.u32 %v679, 4
        %v681 = vand.u32 %v679, 15
        %v682 = vsub.s32 0, %v681
        %v683 = vsel %vm677, %v682, %v681
        %vm684 = vcmp.lt.s32.totalorder %v622, 0
        %v685 = vsub.s32 0, %v622
        %v686 = vsel %vm684, %v685, %v622
        %v687 = vshrl.u32 %v686, 4
        %v688 = vand.u32 %v686, 15
        %v689 = vsub.s32 0, %v688
        %v690 = vsel %vm684, %v689, %v688
        %vm691 = vcmp.lt.s32.totalorder %v623, 0
        %v692 = vsub.s32 0, %v623
        %v693 = vsel %vm691, %v692, %v623
        %v694 = vshrl.u32 %v693, 4
        %v695 = vand.u32 %v693, 15
        %v696 = vsub.s32 0, %v695
        %v697 = vsel %vm691, %v696, %v695
        %vm698 = vcmp.lt.s32.totalorder %v624, 0
        %v699 = vsub.s32 0, %v624
        %v700 = vsel %vm698, %v699, %v624
        %v701 = vshrl.u32 %v700, 4
        %v702 = vand.u32 %v700, 15
        %v703 = vsub.s32 0, %v702
        %v704 = vsel %vm698, %v703, %v702
        %vm705 = vcmp.lt.s32.totalorder %v625, 0
        %v706 = vsub.s32 0, %v625
        %v707 = vsel %vm705, %v706, %v625
        %v708 = vshrl.u32 %v707, 4
        %v709 = vand.u32 %v707, 15
        %v710 = vsub.s32 0, %v709
        %v711 = vsel %vm705, %v710, %v709
        %vm712 = vcmp.lt.s32.totalorder %v626, 0
        %v713 = vsub.s32 0, %v626
        %v714 = vsel %vm712, %v713, %v626
        %v715 = vshrl.u32 %v714, 4
        %v716 = vand.u32 %v714, 15
        %v717 = vsub.s32 0, %v716
        %v718 = vsel %vm712, %v717, %v716
        %vm719 = vcmp.lt.s32.totalorder %v627, 0
        %v720 = vsub.s32 0, %v627
        %v721 = vsel %vm719, %v720, %v627
        %v722 = vshrl.u32 %v721, 4
        %v723 = vand.u32 %v721, 15
        %v724 = vsub.s32 0, %v723
        %v725 = vsel %vm719, %v724, %v723
        %vm726 = vcmp.lt.s32.totalorder %v628, 0
        %v727 = vsub.s32 0, %v628
        %v728 = vsel %vm726, %v727, %v628
        %v729 = vshrl.u32 %v728, 4
        %v730 = vand.u32 %v728, 15
        %v731 = vsub.s32 0, %v730
        %v732 = vsel %vm726, %v731, %v730
        %vm733 = vcmp.lt.s32.totalorder %v629, 0
        %v734 = vsub.s32 0, %v629
        %v735 = vsel %vm733, %v734, %v629
        %v736 = vshrl.u32 %v735, 4
        %v737 = vand.u32 %v735, 15
        %v738 = vsub.s32 0, %v737
        %v739 = vsel %vm733, %v738, %v737
        %vm740 = vcmp.lt.s32.totalorder %v630, 0
        %v741 = vsub.s32 0, %v630
        %v742 = vsel %vm740, %v741, %v630
        %v743 = vshrl.u32 %v742, 4
        %v744 = vand.u32 %v742, 15
        %v745 = vsub.s32 0, %v744
        %v746 = vsel %vm740, %v745, %v744
        %vm747 = vcmp.lt.s32.totalorder %v631, 0
        %v748 = vsub.s32 0, %v631
        %v749 = vsel %vm747, %v748, %v631
        %v750 = vshrl.u32 %v749, 4
        %v751 = vand.u32 %v749, 15
        %v752 = vsub.s32 0, %v751
        %v753 = vsel %vm747, %v752, %v751
        %vm754 = vcmp.lt.s32.totalorder %v632, 0
        %v755 = vsub.s32 0, %v632
        %v756 = vsel %vm754, %v755, %v632
        %v757 = vshrl.u32 %v756, 4
        %v758 = vand.u32 %v756, 15
        %v759 = vsub.s32 0, %v758
        %v760 = vsel %vm754, %v759, %v758
        %vm761 = vcmp.lt.s32.totalorder %v633, 0
        %v762 = vsub.s32 0, %v633
        %v763 = vsel %vm761, %v762, %v633
        %v764 = vshrl.u32 %v763, 4
        %v765 = vand.u32 %v763, 15
        %v766 = vsub.s32 0, %v765
        %v767 = vsel %vm761, %v766, %v765
        %vm768 = vcmp.lt.s32.totalorder %v634, 0
        %v769 = vsub.s32 0, %v634
        %v770 = vsel %vm768, %v769, %v634
        %v771 = vshrl.u32 %v770, 4
        %v772 = vand.u32 %v770, 15
        %v773 = vsub.s32 0, %v772
        %v774 = vsel %vm768, %v773, %v772
        %vm775 = vcmp.lt.s32.totalorder %v635, 0
        %v776 = vsub.s32 0, %v635
        %v777 = vsel %vm775, %v776, %v635
        %v778 = vshrl.u32 %v777, 4
        %v779 = vand.u32 %v777, 15
        %v780 = vsub.s32 0, %v779
        %v781 = vsel %vm775, %v780, %v779
        %vm782 = vcmp.lt.s32.totalorder %v636, 0
        %v783 = vsub.s32 0, %v636
        %v784 = vsel %vm782, %v783, %v636
        %v785 = vshrl.u32 %v784, 4
        %v786 = vand.u32 %v784, 15
        %v787 = vsub.s32 0, %v786
        %v788 = vsel %vm782, %v787, %v786
        %vm789 = vcmp.lt.s32.totalorder %v637, 0
        %v790 = vsub.s32 0, %v637
        %v791 = vsel %vm789, %v790, %v637
        %v792 = vshrl.u32 %v791, 4
        %v793 = vand.u32 %v791, 15
        %v794 = vsub.s32 0, %v793
        %v795 = vsel %vm789, %v794, %v793
        %vm796 = vcmp.lt.s32.totalorder %v638, 0
        %v797 = vsub.s32 0, %v638
        %v798 = vsel %vm796, %v797, %v638
        %v799 = vshrl.u32 %v798, 4
        %v800 = vand.u32 %v798, 15
        %v801 = vsub.s32 0, %v800
        %v802 = vsel %vm796, %v801, %v800
        %vm803 = vcmp.lt.s32.totalorder %v639, 0
        %v804 = vsub.s32 0, %v639
        %v805 = vsel %vm803, %v804, %v639
        %v806 = vshrl.u32 %v805, 4
        %v807 = vand.u32 %v805, 15
        %v808 = vsub.s32 0, %v807
        %v809 = vsel %vm803, %v808, %v807
        %vm810 = vcmp.lt.s32.totalorder %v640, 0
        %v811 = vsub.s32 0, %v640
        %v812 = vsel %vm810, %v811, %v640
        %v813 = vshrl.u32 %v812, 4
        %v814 = vand.u32 %v812, 15
        %v815 = vsub.s32 0, %v814
        %v816 = vsel %vm810, %v815, %v814
        %vm817 = vcmp.lt.s32.totalorder %v641, 0
        %v818 = vsub.s32 0, %v641
        %v819 = vsel %vm817, %v818, %v641
        %v820 = vshrl.u32 %v819, 4
        %v821 = vand.u32 %v819, 15
        %v822 = vsub.s32 0, %v821
        %v823 = vsel %vm817, %v822, %v821
        %vm824 = vcmp.lt.s32.totalorder %v642, 0
        %v825 = vsub.s32 0, %v642
        %v826 = vsel %vm824, %v825, %v642
        %v827 = vshrl.u32 %v826, 4
        %v828 = vand.u32 %v826, 15
        %v829 = vsub.s32 0, %v828
        %v830 = vsel %vm824, %v829, %v828
        %vm831 = vcmp.lt.s32.totalorder %v643, 0
        %v832 = vsub.s32 0, %v643
        %v833 = vsel %vm831, %v832, %v643
        %v834 = vshrl.u32 %v833, 4
        %v835 = vand.u32 %v833, 15
        %v836 = vsub.s32 0, %v835
        %v837 = vsel %vm831, %v836, %v835
        %vm838 = vcmp.lt.s32.totalorder %v644, 0
        %v839 = vsub.s32 0, %v644
        %v840 = vsel %vm838, %v839, %v644
        %v841 = vshrl.u32 %v840, 4
        %v842 = vand.u32 %v840, 15
        %v843 = vsub.s32 0, %v842
        %v844 = vsel %vm838, %v843, %v842
        %vm845 = vcmp.lt.s32.totalorder %v645, 0
        %v846 = vsub.s32 0, %v645
        %v847 = vsel %vm845, %v846, %v645
        %v848 = vshrl.u32 %v847, 4
        %v849 = vand.u32 %v847, 15
        %v850 = vsub.s32 0, %v849
        %v851 = vsel %vm845, %v850, %v849
        %vm852 = vcmp.lt.s32.totalorder %v646, 0
        %v853 = vsub.s32 0, %v646
        %v854 = vsel %vm852, %v853, %v646
        %v855 = vshrl.u32 %v854, 4
        %v856 = vand.u32 %v854, 15
        %v857 = vsub.s32 0, %v856
        %v858 = vsel %vm852, %v857, %v856
        %vm859 = vcmp.lt.s32.totalorder %v647, 0
        %v860 = vsub.s32 0, %v647
        %v861 = vsel %vm859, %v860, %v647
        %v862 = vshrl.u32 %v861, 4
        %v863 = vand.u32 %v861, 15
        %v864 = vsub.s32 0, %v863
        %v865 = vsel %vm859, %v864, %v863
        %vm866 = vcmp.lt.s32.totalorder %v648, 0
        %v867 = vsub.s32 0, %v648
        %v868 = vsel %vm866, %v867, %v648
        %v869 = vshrl.u32 %v868, 4
        %v870 = vand.u32 %v868, 15
        %v871 = vsub.s32 0, %v870
        %v872 = vsel %vm866, %v871, %v870
        %vm873 = vcmp.ne.s32.totalorder %v655, 0
        %vm874 = vcmp.ne.s32.totalorder %v662, 0
        %vm875 = vcmp.ne.s32.totalorder %v669, 0
        %vm876 = vcmp.ne.s32.totalorder %v676, 0
        %vm877 = vcmp.ne.s32.totalorder %v683, 0
        %vm878 = vcmp.ne.s32.totalorder %v690, 0
        %vm879 = vcmp.ne.s32.totalorder %v697, 0
        %vm880 = vcmp.ne.s32.totalorder %v704, 0
        %vm881 = vcmp.ne.s32.totalorder %v711, 0
        %vm882 = vcmp.ne.s32.totalorder %v718, 0
        %vm883 = vcmp.ne.s32.totalorder %v725, 0
        %vm884 = vcmp.ne.s32.totalorder %v732, 0
        %vm885 = vcmp.ne.s32.totalorder %v739, 0
        %vm886 = vcmp.ne.s32.totalorder %v746, 0
        %vm887 = vcmp.ne.s32.totalorder %v753, 0
        %vm888 = vcmp.ne.s32.totalorder %v760, 0
        %vm889 = vcmp.ne.s32.totalorder %v767, 0
        %vm890 = vcmp.ne.s32.totalorder %v774, 0
        %vm891 = vcmp.ne.s32.totalorder %v781, 0
        %vm892 = vcmp.ne.s32.totalorder %v788, 0
        %vm893 = vcmp.ne.s32.totalorder %v795, 0
        %vm894 = vcmp.ne.s32.totalorder %v802, 0
        %vm895 = vcmp.ne.s32.totalorder %v809, 0
        %vm896 = vcmp.ne.s32.totalorder %v816, 0
        %vm897 = vcmp.ne.s32.totalorder %v823, 0
        %vm898 = vcmp.ne.s32.totalorder %v830, 0
        %vm899 = vcmp.ne.s32.totalorder %v837, 0
        %vm900 = vcmp.ne.s32.totalorder %v844, 0
        %vm901 = vcmp.ne.s32.totalorder %v851, 0
        %vm902 = vcmp.ne.s32.totalorder %v858, 0
        %vm903 = vcmp.ne.s32.totalorder %v865, 0
        %vm904 = vcmp.ne.s32.totalorder %v872, 0
        %vm905 = vcmp.lt.s32.totalorder %v655, 0
        %vm906 = vcmp.lt.s32.totalorder %v662, 0
        %vm907 = vcmp.lt.s32.totalorder %v669, 0
        %vm908 = vcmp.lt.s32.totalorder %v676, 0
        %vm909 = vcmp.lt.s32.totalorder %v683, 0
        %vm910 = vcmp.lt.s32.totalorder %v690, 0
        %vm911 = vcmp.lt.s32.totalorder %v697, 0
        %vm912 = vcmp.lt.s32.totalorder %v704, 0
        %vm913 = vcmp.lt.s32.totalorder %v711, 0
        %vm914 = vcmp.lt.s32.totalorder %v718, 0
        %vm915 = vcmp.lt.s32.totalorder %v725, 0
        %vm916 = vcmp.lt.s32.totalorder %v732, 0
        %vm917 = vcmp.lt.s32.totalorder %v739, 0
        %vm918 = vcmp.lt.s32.totalorder %v746, 0
        %vm919 = vcmp.lt.s32.totalorder %v753, 0
        %vm920 = vcmp.lt.s32.totalorder %v760, 0
        %vm921 = vcmp.lt.s32.totalorder %v767, 0
        %vm922 = vcmp.lt.s32.totalorder %v774, 0
        %vm923 = vcmp.lt.s32.totalorder %v781, 0
        %vm924 = vcmp.lt.s32.totalorder %v788, 0
        %vm925 = vcmp.lt.s32.totalorder %v795, 0
        %vm926 = vcmp.lt.s32.totalorder %v802, 0
        %vm927 = vcmp.lt.s32.totalorder %v809, 0
        %vm928 = vcmp.lt.s32.totalorder %v816, 0
        %vm929 = vcmp.lt.s32.totalorder %v823, 0
        %vm930 = vcmp.lt.s32.totalorder %v830, 0
        %vm931 = vcmp.lt.s32.totalorder %v837, 0
        %vm932 = vcmp.lt.s32.totalorder %v844, 0
        %vm933 = vcmp.lt.s32.totalorder %v851, 0
        %vm934 = vcmp.lt.s32.totalorder %v858, 0
        %vm935 = vcmp.lt.s32.totalorder %v865, 0
        %vm936 = vcmp.lt.s32.totalorder %v872, 0
        %vm937 = vmand %vm905, %vm873
        %vm938 = vmand %vm906, %vm874
        %vm939 = vmand %vm907, %vm875
        %vm940 = vmand %vm908, %vm876
        %vm941 = vmand %vm909, %vm877
        %vm942 = vmand %vm910, %vm878
        %vm943 = vmand %vm911, %vm879
        %vm944 = vmand %vm912, %vm880
        %vm945 = vmand %vm913, %vm881
        %vm946 = vmand %vm914, %vm882
        %vm947 = vmand %vm915, %vm883
        %vm948 = vmand %vm916, %vm884
        %vm949 = vmand %vm917, %vm885
        %vm950 = vmand %vm918, %vm886
        %vm951 = vmand %vm919, %vm887
        %vm952 = vmand %vm920, %vm888
        %vm953 = vmand %vm921, %vm889
        %vm954 = vmand %vm922, %vm890
        %vm955 = vmand %vm923, %vm891
        %vm956 = vmand %vm924, %vm892
        %vm957 = vmand %vm925, %vm893
        %vm958 = vmand %vm926, %vm894
        %vm959 = vmand %vm927, %vm895
        %vm960 = vmand %vm928, %vm896
        %vm961 = vmand %vm929, %vm897
        %vm962 = vmand %vm930, %vm898
        %vm963 = vmand %vm931, %vm899
        %vm964 = vmand %vm932, %vm900
        %vm965 = vmand %vm933, %vm901
        %vm966 = vmand %vm934, %vm902
        %vm967 = vmand %vm935, %vm903
        %vm968 = vmand %vm936, %vm904
        %v969 = vadd.s32 %v655, 16
        %v970 = vadd.s32 %v662, 16
        %v971 = vadd.s32 %v669, 16
        %v972 = vadd.s32 %v676, 16
        %v973 = vadd.s32 %v683, 16
        %v974 = vadd.s32 %v690, 16
        %v975 = vadd.s32 %v697, 16
        %v976 = vadd.s32 %v704, 16
        %v977 = vadd.s32 %v711, 16
        %v978 = vadd.s32 %v718, 16
        %v979 = vadd.s32 %v725, 16
        %v980 = vadd.s32 %v732, 16
        %v981 = vadd.s32 %v739, 16
        %v982 = vadd.s32 %v746, 16
        %v983 = vadd.s32 %v753, 16
        %v984 = vadd.s32 %v760, 16
        %v985 = vadd.s32 %v767, 16
        %v986 = vadd.s32 %v774, 16
        %v987 = vadd.s32 %v781, 16
        %v988 = vadd.s32 %v788, 16
        %v989 = vadd.s32 %v795, 16
        %v990 = vadd.s32 %v802, 16
        %v991 = vadd.s32 %v809, 16
        %v992 = vadd.s32 %v816, 16
        %v993 = vadd.s32 %v823, 16
        %v994 = vadd.s32 %v830, 16
        %v995 = vadd.s32 %v837, 16
        %v996 = vadd.s32 %v844, 16
        %v997 = vadd.s32 %v851, 16
        %v998 = vadd.s32 %v858, 16
        %v999 = vadd.s32 %v865, 16
        %v1000 = vadd.s32 %v872, 16
        %v1001 = vsel %vm937, %v969, %v655
        %v1002 = vsel %vm938, %v970, %v662
        %v1003 = vsel %vm939, %v971, %v669
        %v1004 = vsel %vm940, %v972, %v676
        %v1005 = vsel %vm941, %v973, %v683
        %v1006 = vsel %vm942, %v974, %v690
        %v1007 = vsel %vm943, %v975, %v697
        %v1008 = vsel %vm944, %v976, %v704
        %v1009 = vsel %vm945, %v977, %v711
        %v1010 = vsel %vm946, %v978, %v718
        %v1011 = vsel %vm947, %v979, %v725
        %v1012 = vsel %vm948, %v980, %v732
        %v1013 = vsel %vm949, %v981, %v739
        %v1014 = vsel %vm950, %v982, %v746
        %v1015 = vsel %vm951, %v983, %v753
        %v1016 = vsel %vm952, %v984, %v760
        %v1017 = vsel %vm953, %v985, %v767
        %v1018 = vsel %vm954, %v986, %v774
        %v1019 = vsel %vm955, %v987, %v781
        %v1020 = vsel %vm956, %v988, %v788
        %v1021 = vsel %vm957, %v989, %v795
        %v1022 = vsel %vm958, %v990, %v802
        %v1023 = vsel %vm959, %v991, %v809
        %v1024 = vsel %vm960, %v992, %v816
        %v1025 = vsel %vm961, %v993, %v823
        %v1026 = vsel %vm962, %v994, %v830
        %v1027 = vsel %vm963, %v995, %v837
        %v1028 = vsel %vm964, %v996, %v844
        %v1029 = vsel %vm965, %v997, %v851
        %v1030 = vsel %vm966, %v998, %v858
        %v1031 = vsel %vm967, %v999, %v865
        %v1032 = vsel %vm968, %v1000, %v872
        %vm1033 = vcmp.lt.s32.totalorder %v1001, 15
        %vm1034 = vcmp.lt.s32.totalorder %v1002, 15
        %vm1035 = vcmp.lt.s32.totalorder %v1003, 15
        %vm1036 = vcmp.lt.s32.totalorder %v1004, 15
        %vm1037 = vcmp.lt.s32.totalorder %v1005, 15
        %vm1038 = vcmp.lt.s32.totalorder %v1006, 15
        %vm1039 = vcmp.lt.s32.totalorder %v1007, 15
        %vm1040 = vcmp.lt.s32.totalorder %v1008, 15
        %vm1041 = vcmp.lt.s32.totalorder %v1009, 15
        %vm1042 = vcmp.lt.s32.totalorder %v1010, 15
        %vm1043 = vcmp.lt.s32.totalorder %v1011, 15
        %vm1044 = vcmp.lt.s32.totalorder %v1012, 15
        %vm1045 = vcmp.lt.s32.totalorder %v1013, 15
        %vm1046 = vcmp.lt.s32.totalorder %v1014, 15
        %vm1047 = vcmp.lt.s32.totalorder %v1015, 15
        %vm1048 = vcmp.lt.s32.totalorder %v1016, 15
        %vm1049 = vcmp.lt.s32.totalorder %v1017, 15
        %vm1050 = vcmp.lt.s32.totalorder %v1018, 15
        %vm1051 = vcmp.lt.s32.totalorder %v1019, 15
        %vm1052 = vcmp.lt.s32.totalorder %v1020, 15
        %vm1053 = vcmp.lt.s32.totalorder %v1021, 15
        %vm1054 = vcmp.lt.s32.totalorder %v1022, 15
        %vm1055 = vcmp.lt.s32.totalorder %v1023, 15
        %vm1056 = vcmp.lt.s32.totalorder %v1024, 15
        %vm1057 = vcmp.lt.s32.totalorder %v1025, 15
        %vm1058 = vcmp.lt.s32.totalorder %v1026, 15
        %vm1059 = vcmp.lt.s32.totalorder %v1027, 15
        %vm1060 = vcmp.lt.s32.totalorder %v1028, 15
        %vm1061 = vcmp.lt.s32.totalorder %v1029, 15
        %vm1062 = vcmp.lt.s32.totalorder %v1030, 15
        %vm1063 = vcmp.lt.s32.totalorder %v1031, 15
        %vm1064 = vcmp.lt.s32.totalorder %v1032, 15
        %vm1065 = vcmp.ge.s32.totalorder %v1001, 1
        %vm1066 = vcmp.ge.s32.totalorder %v1002, 1
        %vm1067 = vcmp.ge.s32.totalorder %v1003, 1
        %vm1068 = vcmp.ge.s32.totalorder %v1004, 1
        %vm1069 = vcmp.ge.s32.totalorder %v1005, 1
        %vm1070 = vcmp.ge.s32.totalorder %v1006, 1
        %vm1071 = vcmp.ge.s32.totalorder %v1007, 1
        %vm1072 = vcmp.ge.s32.totalorder %v1008, 1
        %vm1073 = vcmp.ge.s32.totalorder %v1009, 1
        %vm1074 = vcmp.ge.s32.totalorder %v1010, 1
        %vm1075 = vcmp.ge.s32.totalorder %v1011, 1
        %vm1076 = vcmp.ge.s32.totalorder %v1012, 1
        %vm1077 = vcmp.ge.s32.totalorder %v1013, 1
        %vm1078 = vcmp.ge.s32.totalorder %v1014, 1
        %vm1079 = vcmp.ge.s32.totalorder %v1015, 1
        %vm1080 = vcmp.ge.s32.totalorder %v1016, 1
        %vm1081 = vcmp.ge.s32.totalorder %v1017, 1
        %vm1082 = vcmp.ge.s32.totalorder %v1018, 1
        %vm1083 = vcmp.ge.s32.totalorder %v1019, 1
        %vm1084 = vcmp.ge.s32.totalorder %v1020, 1
        %vm1085 = vcmp.ge.s32.totalorder %v1021, 1
        %vm1086 = vcmp.ge.s32.totalorder %v1022, 1
        %vm1087 = vcmp.ge.s32.totalorder %v1023, 1
        %vm1088 = vcmp.ge.s32.totalorder %v1024, 1
        %vm1089 = vcmp.ge.s32.totalorder %v1025, 1
        %vm1090 = vcmp.ge.s32.totalorder %v1026, 1
        %vm1091 = vcmp.ge.s32.totalorder %v1027, 1
        %vm1092 = vcmp.ge.s32.totalorder %v1028, 1
        %vm1093 = vcmp.ge.s32.totalorder %v1029, 1
        %vm1094 = vcmp.ge.s32.totalorder %v1030, 1
        %vm1095 = vcmp.ge.s32.totalorder %v1031, 1
        %vm1096 = vcmp.ge.s32.totalorder %v1032, 1
        %vm1097 = vcmp.lt.s32.totalorder %v1001, 14
        %vm1098 = vcmp.lt.s32.totalorder %v1002, 14
        %vm1099 = vcmp.lt.s32.totalorder %v1003, 14
        %vm1100 = vcmp.lt.s32.totalorder %v1004, 14
        %vm1101 = vcmp.lt.s32.totalorder %v1005, 14
        %vm1102 = vcmp.lt.s32.totalorder %v1006, 14
        %vm1103 = vcmp.lt.s32.totalorder %v1007, 14
        %vm1104 = vcmp.lt.s32.totalorder %v1008, 14
        %vm1105 = vcmp.lt.s32.totalorder %v1009, 14
        %vm1106 = vcmp.lt.s32.totalorder %v1010, 14
        %vm1107 = vcmp.lt.s32.totalorder %v1011, 14
        %vm1108 = vcmp.lt.s32.totalorder %v1012, 14
        %vm1109 = vcmp.lt.s32.totalorder %v1013, 14
        %vm1110 = vcmp.lt.s32.totalorder %v1014, 14
        %vm1111 = vcmp.lt.s32.totalorder %v1015, 14
        %vm1112 = vcmp.lt.s32.totalorder %v1016, 14
        %vm1113 = vcmp.lt.s32.totalorder %v1017, 14
        %vm1114 = vcmp.lt.s32.totalorder %v1018, 14
        %vm1115 = vcmp.lt.s32.totalorder %v1019, 14
        %vm1116 = vcmp.lt.s32.totalorder %v1020, 14
        %vm1117 = vcmp.lt.s32.totalorder %v1021, 14
        %vm1118 = vcmp.lt.s32.totalorder %v1022, 14
        %vm1119 = vcmp.lt.s32.totalorder %v1023, 14
        %vm1120 = vcmp.lt.s32.totalorder %v1024, 14
        %vm1121 = vcmp.lt.s32.totalorder %v1025, 14
        %vm1122 = vcmp.lt.s32.totalorder %v1026, 14
        %vm1123 = vcmp.lt.s32.totalorder %v1027, 14
        %vm1124 = vcmp.lt.s32.totalorder %v1028, 14
        %vm1125 = vcmp.lt.s32.totalorder %v1029, 14
        %vm1126 = vcmp.lt.s32.totalorder %v1030, 14
        %vm1127 = vcmp.lt.s32.totalorder %v1031, 14
        %vm1128 = vcmp.lt.s32.totalorder %v1032, 14
        %vm1129 = vcmp.ge.s32.totalorder %v1001, 2
        %vm1130 = vcmp.ge.s32.totalorder %v1002, 2
        %vm1131 = vcmp.ge.s32.totalorder %v1003, 2
        %vm1132 = vcmp.ge.s32.totalorder %v1004, 2
        %vm1133 = vcmp.ge.s32.totalorder %v1005, 2
        %vm1134 = vcmp.ge.s32.totalorder %v1006, 2
        %vm1135 = vcmp.ge.s32.totalorder %v1007, 2
        %vm1136 = vcmp.ge.s32.totalorder %v1008, 2
        %vm1137 = vcmp.ge.s32.totalorder %v1009, 2
        %vm1138 = vcmp.ge.s32.totalorder %v1010, 2
        %vm1139 = vcmp.ge.s32.totalorder %v1011, 2
        %vm1140 = vcmp.ge.s32.totalorder %v1012, 2
        %vm1141 = vcmp.ge.s32.totalorder %v1013, 2
        %vm1142 = vcmp.ge.s32.totalorder %v1014, 2
        %vm1143 = vcmp.ge.s32.totalorder %v1015, 2
        %vm1144 = vcmp.ge.s32.totalorder %v1016, 2
        %vm1145 = vcmp.ge.s32.totalorder %v1017, 2
        %vm1146 = vcmp.ge.s32.totalorder %v1018, 2
        %vm1147 = vcmp.ge.s32.totalorder %v1019, 2
        %vm1148 = vcmp.ge.s32.totalorder %v1020, 2
        %vm1149 = vcmp.ge.s32.totalorder %v1021, 2
        %vm1150 = vcmp.ge.s32.totalorder %v1022, 2
        %vm1151 = vcmp.ge.s32.totalorder %v1023, 2
        %vm1152 = vcmp.ge.s32.totalorder %v1024, 2
        %vm1153 = vcmp.ge.s32.totalorder %v1025, 2
        %vm1154 = vcmp.ge.s32.totalorder %v1026, 2
        %vm1155 = vcmp.ge.s32.totalorder %v1027, 2
        %vm1156 = vcmp.ge.s32.totalorder %v1028, 2
        %vm1157 = vcmp.ge.s32.totalorder %v1029, 2
        %vm1158 = vcmp.ge.s32.totalorder %v1030, 2
        %vm1159 = vcmp.ge.s32.totalorder %v1031, 2
        %vm1160 = vcmp.ge.s32.totalorder %v1032, 2
        %vm1161 = vcmp.lt.s32.totalorder %v617, 240
        %vm1162 = vcmp.lt.s32.totalorder %v618, 240
        %vm1163 = vcmp.lt.s32.totalorder %v619, 240
        %vm1164 = vcmp.lt.s32.totalorder %v620, 240
        %vm1165 = vcmp.lt.s32.totalorder %v621, 240
        %vm1166 = vcmp.lt.s32.totalorder %v622, 240
        %vm1167 = vcmp.lt.s32.totalorder %v623, 240
        %vm1168 = vcmp.lt.s32.totalorder %v624, 240
        %vm1169 = vcmp.lt.s32.totalorder %v625, 240
        %vm1170 = vcmp.lt.s32.totalorder %v626, 240
        %vm1171 = vcmp.lt.s32.totalorder %v627, 240
        %vm1172 = vcmp.lt.s32.totalorder %v628, 240
        %vm1173 = vcmp.lt.s32.totalorder %v629, 240
        %vm1174 = vcmp.lt.s32.totalorder %v630, 240
        %vm1175 = vcmp.lt.s32.totalorder %v631, 240
        %vm1176 = vcmp.lt.s32.totalorder %v632, 240
        %vm1177 = vcmp.lt.s32.totalorder %v633, 240
        %vm1178 = vcmp.lt.s32.totalorder %v634, 240
        %vm1179 = vcmp.lt.s32.totalorder %v635, 240
        %vm1180 = vcmp.lt.s32.totalorder %v636, 240
        %vm1181 = vcmp.lt.s32.totalorder %v637, 240
        %vm1182 = vcmp.lt.s32.totalorder %v638, 240
        %vm1183 = vcmp.lt.s32.totalorder %v639, 240
        %vm1184 = vcmp.lt.s32.totalorder %v640, 240
        %vm1185 = vcmp.lt.s32.totalorder %v641, 240
        %vm1186 = vcmp.lt.s32.totalorder %v642, 240
        %vm1187 = vcmp.lt.s32.totalorder %v643, 240
        %vm1188 = vcmp.lt.s32.totalorder %v644, 240
        %vm1189 = vcmp.lt.s32.totalorder %v645, 240
        %vm1190 = vcmp.lt.s32.totalorder %v646, 240
        %vm1191 = vcmp.lt.s32.totalorder %v647, 240
        %vm1192 = vcmp.lt.s32.totalorder %v648, 240
        %vm1193 = vcmp.ge.s32.totalorder %v617, 16
        %vm1194 = vcmp.ge.s32.totalorder %v618, 16
        %vm1195 = vcmp.ge.s32.totalorder %v619, 16
        %vm1196 = vcmp.ge.s32.totalorder %v620, 16
        %vm1197 = vcmp.ge.s32.totalorder %v621, 16
        %vm1198 = vcmp.ge.s32.totalorder %v622, 16
        %vm1199 = vcmp.ge.s32.totalorder %v623, 16
        %vm1200 = vcmp.ge.s32.totalorder %v624, 16
        %vm1201 = vcmp.ge.s32.totalorder %v625, 16
        %vm1202 = vcmp.ge.s32.totalorder %v626, 16
        %vm1203 = vcmp.ge.s32.totalorder %v627, 16
        %vm1204 = vcmp.ge.s32.totalorder %v628, 16
        %vm1205 = vcmp.ge.s32.totalorder %v629, 16
        %vm1206 = vcmp.ge.s32.totalorder %v630, 16
        %vm1207 = vcmp.ge.s32.totalorder %v631, 16
        %vm1208 = vcmp.ge.s32.totalorder %v632, 16
        %vm1209 = vcmp.ge.s32.totalorder %v633, 16
        %vm1210 = vcmp.ge.s32.totalorder %v634, 16
        %vm1211 = vcmp.ge.s32.totalorder %v635, 16
        %vm1212 = vcmp.ge.s32.totalorder %v636, 16
        %vm1213 = vcmp.ge.s32.totalorder %v637, 16
        %vm1214 = vcmp.ge.s32.totalorder %v638, 16
        %vm1215 = vcmp.ge.s32.totalorder %v639, 16
        %vm1216 = vcmp.ge.s32.totalorder %v640, 16
        %vm1217 = vcmp.ge.s32.totalorder %v641, 16
        %vm1218 = vcmp.ge.s32.totalorder %v642, 16
        %vm1219 = vcmp.ge.s32.totalorder %v643, 16
        %vm1220 = vcmp.ge.s32.totalorder %v644, 16
        %vm1221 = vcmp.ge.s32.totalorder %v645, 16
        %vm1222 = vcmp.ge.s32.totalorder %v646, 16
        %vm1223 = vcmp.ge.s32.totalorder %v647, 16
        %vm1224 = vcmp.ge.s32.totalorder %v648, 16
        %vm1225 = vcmp.lt.s32.totalorder %v617, 224
        %vm1226 = vcmp.lt.s32.totalorder %v618, 224
        %vm1227 = vcmp.lt.s32.totalorder %v619, 224
        %vm1228 = vcmp.lt.s32.totalorder %v620, 224
        %vm1229 = vcmp.lt.s32.totalorder %v621, 224
        %vm1230 = vcmp.lt.s32.totalorder %v622, 224
        %vm1231 = vcmp.lt.s32.totalorder %v623, 224
        %vm1232 = vcmp.lt.s32.totalorder %v624, 224
        %vm1233 = vcmp.lt.s32.totalorder %v625, 224
        %vm1234 = vcmp.lt.s32.totalorder %v626, 224
        %vm1235 = vcmp.lt.s32.totalorder %v627, 224
        %vm1236 = vcmp.lt.s32.totalorder %v628, 224
        %vm1237 = vcmp.lt.s32.totalorder %v629, 224
        %vm1238 = vcmp.lt.s32.totalorder %v630, 224
        %vm1239 = vcmp.lt.s32.totalorder %v631, 224
        %vm1240 = vcmp.lt.s32.totalorder %v632, 224
        %vm1241 = vcmp.lt.s32.totalorder %v633, 224
        %vm1242 = vcmp.lt.s32.totalorder %v634, 224
        %vm1243 = vcmp.lt.s32.totalorder %v635, 224
        %vm1244 = vcmp.lt.s32.totalorder %v636, 224
        %vm1245 = vcmp.lt.s32.totalorder %v637, 224
        %vm1246 = vcmp.lt.s32.totalorder %v638, 224
        %vm1247 = vcmp.lt.s32.totalorder %v639, 224
        %vm1248 = vcmp.lt.s32.totalorder %v640, 224
        %vm1249 = vcmp.lt.s32.totalorder %v641, 224
        %vm1250 = vcmp.lt.s32.totalorder %v642, 224
        %vm1251 = vcmp.lt.s32.totalorder %v643, 224
        %vm1252 = vcmp.lt.s32.totalorder %v644, 224
        %vm1253 = vcmp.lt.s32.totalorder %v645, 224
        %vm1254 = vcmp.lt.s32.totalorder %v646, 224
        %vm1255 = vcmp.lt.s32.totalorder %v647, 224
        %vm1256 = vcmp.lt.s32.totalorder %v648, 224
        %vm1257 = vcmp.ge.s32.totalorder %v617, 32
        %vm1258 = vcmp.ge.s32.totalorder %v618, 32
        %vm1259 = vcmp.ge.s32.totalorder %v619, 32
        %vm1260 = vcmp.ge.s32.totalorder %v620, 32
        %vm1261 = vcmp.ge.s32.totalorder %v621, 32
        %vm1262 = vcmp.ge.s32.totalorder %v622, 32
        %vm1263 = vcmp.ge.s32.totalorder %v623, 32
        %vm1264 = vcmp.ge.s32.totalorder %v624, 32
        %vm1265 = vcmp.ge.s32.totalorder %v625, 32
        %vm1266 = vcmp.ge.s32.totalorder %v626, 32
        %vm1267 = vcmp.ge.s32.totalorder %v627, 32
        %vm1268 = vcmp.ge.s32.totalorder %v628, 32
        %vm1269 = vcmp.ge.s32.totalorder %v629, 32
        %vm1270 = vcmp.ge.s32.totalorder %v630, 32
        %vm1271 = vcmp.ge.s32.totalorder %v631, 32
        %vm1272 = vcmp.ge.s32.totalorder %v632, 32
        %vm1273 = vcmp.ge.s32.totalorder %v633, 32
        %vm1274 = vcmp.ge.s32.totalorder %v634, 32
        %vm1275 = vcmp.ge.s32.totalorder %v635, 32
        %vm1276 = vcmp.ge.s32.totalorder %v636, 32
        %vm1277 = vcmp.ge.s32.totalorder %v637, 32
        %vm1278 = vcmp.ge.s32.totalorder %v638, 32
        %vm1279 = vcmp.ge.s32.totalorder %v639, 32
        %vm1280 = vcmp.ge.s32.totalorder %v640, 32
        %vm1281 = vcmp.ge.s32.totalorder %v641, 32
        %vm1282 = vcmp.ge.s32.totalorder %v642, 32
        %vm1283 = vcmp.ge.s32.totalorder %v643, 32
        %vm1284 = vcmp.ge.s32.totalorder %v644, 32
        %vm1285 = vcmp.ge.s32.totalorder %v645, 32
        %vm1286 = vcmp.ge.s32.totalorder %v646, 32
        %vm1287 = vcmp.ge.s32.totalorder %v647, 32
        %vm1288 = vcmp.ge.s32.totalorder %v648, 32
        %v1289 = vrot.slane %v584, 1
        %v1290 = vrot.slane %v585, 1
        %v1291 = vrot.slane %v586, 1
        %v1292 = vrot.slane %v587, 1
        %v1293 = vrot.slane %v588, 1
        %v1294 = vrot.slane %v589, 1
        %v1295 = vrot.slane %v590, 1
        %v1296 = vrot.slane %v591, 1
        %v1297 = vrot.slane %v592, 1
        %v1298 = vrot.slane %v593, 1
        %v1299 = vrot.slane %v594, 1
        %v1300 = vrot.slane %v595, 1
        %v1301 = vrot.slane %v596, 1
        %v1302 = vrot.slane %v597, 1
        %v1303 = vrot.slane %v598, 1
        %v1304 = vrot.slane %v599, 1
        %v1305 = vrot.slane %v600, 1
        %v1306 = vrot.slane %v601, 1
        %v1307 = vrot.slane %v602, 1
        %v1308 = vrot.slane %v603, 1
        %v1309 = vrot.slane %v604, 1
        %v1310 = vrot.slane %v605, 1
        %v1311 = vrot.slane %v606, 1
        %v1312 = vrot.slane %v607, 1
        %v1313 = vrot.slane %v608, 1
        %v1314 = vrot.slane %v609, 1
        %v1315 = vrot.slane %v610, 1
        %v1316 = vrot.slane %v611, 1
        %v1317 = vrot.slane %v612, 1
        %v1318 = vrot.slane %v613, 1
        %v1319 = vrot.slane %v614, 1
        %v1320 = vrot.slane %v615, 1
        %vm1321 = vcmp.lt.s32.totalorder %v617, 7
        %v1322 = vsel %vm1321, %v1319, %v1320
        %v1323 = vsel %vm1321, %v1318, %v1319
        %v1324 = vsel %vm1321, %v1317, %v1318
        %v1325 = vsel %vm1321, %v1316, %v1317
        %v1326 = vsel %vm1321, %v1315, %v1316
        %v1327 = vsel %vm1321, %v1314, %v1315
        %v1328 = vsel %vm1321, %v1313, %v1314
        %v1329 = vsel %vm1321, %v1312, %v1313
        %v1330 = vsel %vm1321, %v1311, %v1312
        %v1331 = vsel %vm1321, %v1310, %v1311
        %v1332 = vsel %vm1321, %v1309, %v1310
        %v1333 = vsel %vm1321, %v1308, %v1309
        %v1334 = vsel %vm1321, %v1307, %v1308
        %v1335 = vsel %vm1321, %v1306, %v1307
        %v1336 = vsel %vm1321, %v1305, %v1306
        %v1337 = vsel %vm1321, %v1304, %v1305
        %v1338 = vsel %vm1321, %v1303, %v1304
        %v1339 = vsel %vm1321, %v1302, %v1303
        %v1340 = vsel %vm1321, %v1301, %v1302
        %v1341 = vsel %vm1321, %v1300, %v1301
        %v1342 = vsel %vm1321, %v1299, %v1300
        %v1343 = vsel %vm1321, %v1298, %v1299
        %v1344 = vsel %vm1321, %v1297, %v1298
        %v1345 = vsel %vm1321, %v1296, %v1297
        %v1346 = vsel %vm1321, %v1295, %v1296
        %v1347 = vsel %vm1321, %v1294, %v1295
        %v1348 = vsel %vm1321, %v1293, %v1294
        %v1349 = vsel %vm1321, %v1292, %v1293
        %v1350 = vsel %vm1321, %v1291, %v1292
        %v1351 = vsel %vm1321, %v1290, %v1291
        %v1352 = vsel %vm1321, %v1289, %v1290
        %v1353 = vsel %vm1321, %v1320, %v1289
        %v1354 = vsel %vm1033, 1, 0
        %v1355 = vsel %vm1034, 1, 0
        %v1356 = vsel %vm1035, 1, 0
        %v1357 = vsel %vm1036, 1, 0
        %v1358 = vsel %vm1037, 1, 0
        %v1359 = vsel %vm1038, 1, 0
        %v1360 = vsel %vm1039, 1, 0
        %v1361 = vsel %vm1040, 1, 0
        %v1362 = vsel %vm1041, 1, 0
        %v1363 = vsel %vm1042, 1, 0
        %v1364 = vsel %vm1043, 1, 0
        %v1365 = vsel %vm1044, 1, 0
        %v1366 = vsel %vm1045, 1, 0
        %v1367 = vsel %vm1046, 1, 0
        %v1368 = vsel %vm1047, 1, 0
        %v1369 = vsel %vm1048, 1, 0
        %v1370 = vsel %vm1049, 1, 0
        %v1371 = vsel %vm1050, 1, 0
        %v1372 = vsel %vm1051, 1, 0
        %v1373 = vsel %vm1052, 1, 0
        %v1374 = vsel %vm1053, 1, 0
        %v1375 = vsel %vm1054, 1, 0
        %v1376 = vsel %vm1055, 1, 0
        %v1377 = vsel %vm1056, 1, 0
        %v1378 = vsel %vm1057, 1, 0
        %v1379 = vsel %vm1058, 1, 0
        %v1380 = vsel %vm1059, 1, 0
        %v1381 = vsel %vm1060, 1, 0
        %v1382 = vsel %vm1061, 1, 0
        %v1383 = vsel %vm1062, 1, 0
        %v1384 = vsel %vm1063, 1, 0
        %v1385 = vsel %vm1064, 1, 0
        %vm1386 = vcmp.eq.s32.totalorder %v1354, 1
        %vm1387 = vcmp.eq.s32.totalorder %v1355, 1
        %vm1388 = vcmp.eq.s32.totalorder %v1356, 1
        %vm1389 = vcmp.eq.s32.totalorder %v1357, 1
        %vm1390 = vcmp.eq.s32.totalorder %v1358, 1
        %vm1391 = vcmp.eq.s32.totalorder %v1359, 1
        %vm1392 = vcmp.eq.s32.totalorder %v1360, 1
        %vm1393 = vcmp.eq.s32.totalorder %v1361, 1
        %vm1394 = vcmp.eq.s32.totalorder %v1362, 1
        %vm1395 = vcmp.eq.s32.totalorder %v1363, 1
        %vm1396 = vcmp.eq.s32.totalorder %v1364, 1
        %vm1397 = vcmp.eq.s32.totalorder %v1365, 1
        %vm1398 = vcmp.eq.s32.totalorder %v1366, 1
        %vm1399 = vcmp.eq.s32.totalorder %v1367, 1
        %vm1400 = vcmp.eq.s32.totalorder %v1368, 1
        %vm1401 = vcmp.eq.s32.totalorder %v1369, 1
        %vm1402 = vcmp.eq.s32.totalorder %v1370, 1
        %vm1403 = vcmp.eq.s32.totalorder %v1371, 1
        %vm1404 = vcmp.eq.s32.totalorder %v1372, 1
        %vm1405 = vcmp.eq.s32.totalorder %v1373, 1
        %vm1406 = vcmp.eq.s32.totalorder %v1374, 1
        %vm1407 = vcmp.eq.s32.totalorder %v1375, 1
        %vm1408 = vcmp.eq.s32.totalorder %v1376, 1
        %vm1409 = vcmp.eq.s32.totalorder %v1377, 1
        %vm1410 = vcmp.eq.s32.totalorder %v1378, 1
        %vm1411 = vcmp.eq.s32.totalorder %v1379, 1
        %vm1412 = vcmp.eq.s32.totalorder %v1380, 1
        %vm1413 = vcmp.eq.s32.totalorder %v1381, 1
        %vm1414 = vcmp.eq.s32.totalorder %v1382, 1
        %vm1415 = vcmp.eq.s32.totalorder %v1383, 1
        %vm1416 = vcmp.eq.s32.totalorder %v1384, 1
        %vm1417 = vcmp.eq.s32.totalorder %v1385, 1
        %v1418 = vsel %vm1386, %v1352, -inf
        %v1419 = vsel %vm1387, %v1351, -inf
        %v1420 = vsel %vm1388, %v1350, -inf
        %v1421 = vsel %vm1389, %v1349, -inf
        %v1422 = vsel %vm1390, %v1348, -inf
        %v1423 = vsel %vm1391, %v1347, -inf
        %v1424 = vsel %vm1392, %v1346, -inf
        %v1425 = vsel %vm1393, %v1345, -inf
        %v1426 = vsel %vm1394, %v1344, -inf
        %v1427 = vsel %vm1395, %v1343, -inf
        %v1428 = vsel %vm1396, %v1342, -inf
        %v1429 = vsel %vm1397, %v1341, -inf
        %v1430 = vsel %vm1398, %v1340, -inf
        %v1431 = vsel %vm1399, %v1339, -inf
        %v1432 = vsel %vm1400, %v1338, -inf
        %v1433 = vsel %vm1401, %v1337, -inf
        %v1434 = vsel %vm1402, %v1336, -inf
        %v1435 = vsel %vm1403, %v1335, -inf
        %v1436 = vsel %vm1404, %v1334, -inf
        %v1437 = vsel %vm1405, %v1333, -inf
        %v1438 = vsel %vm1406, %v1332, -inf
        %v1439 = vsel %vm1407, %v1331, -inf
        %v1440 = vsel %vm1408, %v1330, -inf
        %v1441 = vsel %vm1409, %v1329, -inf
        %v1442 = vsel %vm1410, %v1328, -inf
        %v1443 = vsel %vm1411, %v1327, -inf
        %v1444 = vsel %vm1412, %v1326, -inf
        %v1445 = vsel %vm1413, %v1325, -inf
        %v1446 = vsel %vm1414, %v1324, -inf
        %v1447 = vsel %vm1415, %v1323, -inf
        %v1448 = vsel %vm1416, %v1322, -inf
        %v1449 = vsel %vm1417, %v1353, -inf
        %v1450 = vmax.f32 %v584, %v1418
        %v1451 = vmax.f32 %v585, %v1419
        %v1452 = vmax.f32 %v586, %v1420
        %v1453 = vmax.f32 %v587, %v1421
        %v1454 = vmax.f32 %v588, %v1422
        %v1455 = vmax.f32 %v589, %v1423
        %v1456 = vmax.f32 %v590, %v1424
        %v1457 = vmax.f32 %v591, %v1425
        %v1458 = vmax.f32 %v592, %v1426
        %v1459 = vmax.f32 %v593, %v1427
        %v1460 = vmax.f32 %v594, %v1428
        %v1461 = vmax.f32 %v595, %v1429
        %v1462 = vmax.f32 %v596, %v1430
        %v1463 = vmax.f32 %v597, %v1431
        %v1464 = vmax.f32 %v598, %v1432
        %v1465 = vmax.f32 %v599, %v1433
        %v1466 = vmax.f32 %v600, %v1434
        %v1467 = vmax.f32 %v601, %v1435
        %v1468 = vmax.f32 %v602, %v1436
        %v1469 = vmax.f32 %v603, %v1437
        %v1470 = vmax.f32 %v604, %v1438
        %v1471 = vmax.f32 %v605, %v1439
        %v1472 = vmax.f32 %v606, %v1440
        %v1473 = vmax.f32 %v607, %v1441
        %v1474 = vmax.f32 %v608, %v1442
        %v1475 = vmax.f32 %v609, %v1443
        %v1476 = vmax.f32 %v610, %v1444
        %v1477 = vmax.f32 %v611, %v1445
        %v1478 = vmax.f32 %v612, %v1446
        %v1479 = vmax.f32 %v613, %v1447
        %v1480 = vmax.f32 %v614, %v1448
        %v1481 = vmax.f32 %v615, %v1449
        %v1482 = vrot.slane %v584, 7
        %v1483 = vrot.slane %v585, 7
        %v1484 = vrot.slane %v586, 7
        %v1485 = vrot.slane %v587, 7
        %v1486 = vrot.slane %v588, 7
        %v1487 = vrot.slane %v589, 7
        %v1488 = vrot.slane %v590, 7
        %v1489 = vrot.slane %v591, 7
        %v1490 = vrot.slane %v592, 7
        %v1491 = vrot.slane %v593, 7
        %v1492 = vrot.slane %v594, 7
        %v1493 = vrot.slane %v595, 7
        %v1494 = vrot.slane %v596, 7
        %v1495 = vrot.slane %v597, 7
        %v1496 = vrot.slane %v598, 7
        %v1497 = vrot.slane %v599, 7
        %v1498 = vrot.slane %v600, 7
        %v1499 = vrot.slane %v601, 7
        %v1500 = vrot.slane %v602, 7
        %v1501 = vrot.slane %v603, 7
        %v1502 = vrot.slane %v604, 7
        %v1503 = vrot.slane %v605, 7
        %v1504 = vrot.slane %v606, 7
        %v1505 = vrot.slane %v607, 7
        %v1506 = vrot.slane %v608, 7
        %v1507 = vrot.slane %v609, 7
        %v1508 = vrot.slane %v610, 7
        %v1509 = vrot.slane %v611, 7
        %v1510 = vrot.slane %v612, 7
        %v1511 = vrot.slane %v613, 7
        %v1512 = vrot.slane %v614, 7
        %v1513 = vrot.slane %v615, 7
        %vm1514 = vcmp.lt.s32.totalorder %v617, 1
        %v1515 = vsel %vm1514, %v1512, %v1513
        %v1516 = vsel %vm1514, %v1511, %v1512
        %v1517 = vsel %vm1514, %v1510, %v1511
        %v1518 = vsel %vm1514, %v1509, %v1510
        %v1519 = vsel %vm1514, %v1508, %v1509
        %v1520 = vsel %vm1514, %v1507, %v1508
        %v1521 = vsel %vm1514, %v1506, %v1507
        %v1522 = vsel %vm1514, %v1505, %v1506
        %v1523 = vsel %vm1514, %v1504, %v1505
        %v1524 = vsel %vm1514, %v1503, %v1504
        %v1525 = vsel %vm1514, %v1502, %v1503
        %v1526 = vsel %vm1514, %v1501, %v1502
        %v1527 = vsel %vm1514, %v1500, %v1501
        %v1528 = vsel %vm1514, %v1499, %v1500
        %v1529 = vsel %vm1514, %v1498, %v1499
        %v1530 = vsel %vm1514, %v1497, %v1498
        %v1531 = vsel %vm1514, %v1496, %v1497
        %v1532 = vsel %vm1514, %v1495, %v1496
        %v1533 = vsel %vm1514, %v1494, %v1495
        %v1534 = vsel %vm1514, %v1493, %v1494
        %v1535 = vsel %vm1514, %v1492, %v1493
        %v1536 = vsel %vm1514, %v1491, %v1492
        %v1537 = vsel %vm1514, %v1490, %v1491
        %v1538 = vsel %vm1514, %v1489, %v1490
        %v1539 = vsel %vm1514, %v1488, %v1489
        %v1540 = vsel %vm1514, %v1487, %v1488
        %v1541 = vsel %vm1514, %v1486, %v1487
        %v1542 = vsel %vm1514, %v1485, %v1486
        %v1543 = vsel %vm1514, %v1484, %v1485
        %v1544 = vsel %vm1514, %v1483, %v1484
        %v1545 = vsel %vm1514, %v1482, %v1483
        %v1546 = vsel %vm1514, %v1513, %v1482
        %v1547 = vsel %vm1065, 1, 0
        %v1548 = vsel %vm1066, 1, 0
        %v1549 = vsel %vm1067, 1, 0
        %v1550 = vsel %vm1068, 1, 0
        %v1551 = vsel %vm1069, 1, 0
        %v1552 = vsel %vm1070, 1, 0
        %v1553 = vsel %vm1071, 1, 0
        %v1554 = vsel %vm1072, 1, 0
        %v1555 = vsel %vm1073, 1, 0
        %v1556 = vsel %vm1074, 1, 0
        %v1557 = vsel %vm1075, 1, 0
        %v1558 = vsel %vm1076, 1, 0
        %v1559 = vsel %vm1077, 1, 0
        %v1560 = vsel %vm1078, 1, 0
        %v1561 = vsel %vm1079, 1, 0
        %v1562 = vsel %vm1080, 1, 0
        %v1563 = vsel %vm1081, 1, 0
        %v1564 = vsel %vm1082, 1, 0
        %v1565 = vsel %vm1083, 1, 0
        %v1566 = vsel %vm1084, 1, 0
        %v1567 = vsel %vm1085, 1, 0
        %v1568 = vsel %vm1086, 1, 0
        %v1569 = vsel %vm1087, 1, 0
        %v1570 = vsel %vm1088, 1, 0
        %v1571 = vsel %vm1089, 1, 0
        %v1572 = vsel %vm1090, 1, 0
        %v1573 = vsel %vm1091, 1, 0
        %v1574 = vsel %vm1092, 1, 0
        %v1575 = vsel %vm1093, 1, 0
        %v1576 = vsel %vm1094, 1, 0
        %v1577 = vsel %vm1095, 1, 0
        %v1578 = vsel %vm1096, 1, 0
        %vm1579 = vcmp.eq.s32.totalorder %v1547, 1
        %vm1580 = vcmp.eq.s32.totalorder %v1548, 1
        %vm1581 = vcmp.eq.s32.totalorder %v1549, 1
        %vm1582 = vcmp.eq.s32.totalorder %v1550, 1
        %vm1583 = vcmp.eq.s32.totalorder %v1551, 1
        %vm1584 = vcmp.eq.s32.totalorder %v1552, 1
        %vm1585 = vcmp.eq.s32.totalorder %v1553, 1
        %vm1586 = vcmp.eq.s32.totalorder %v1554, 1
        %vm1587 = vcmp.eq.s32.totalorder %v1555, 1
        %vm1588 = vcmp.eq.s32.totalorder %v1556, 1
        %vm1589 = vcmp.eq.s32.totalorder %v1557, 1
        %vm1590 = vcmp.eq.s32.totalorder %v1558, 1
        %vm1591 = vcmp.eq.s32.totalorder %v1559, 1
        %vm1592 = vcmp.eq.s32.totalorder %v1560, 1
        %vm1593 = vcmp.eq.s32.totalorder %v1561, 1
        %vm1594 = vcmp.eq.s32.totalorder %v1562, 1
        %vm1595 = vcmp.eq.s32.totalorder %v1563, 1
        %vm1596 = vcmp.eq.s32.totalorder %v1564, 1
        %vm1597 = vcmp.eq.s32.totalorder %v1565, 1
        %vm1598 = vcmp.eq.s32.totalorder %v1566, 1
        %vm1599 = vcmp.eq.s32.totalorder %v1567, 1
        %vm1600 = vcmp.eq.s32.totalorder %v1568, 1
        %vm1601 = vcmp.eq.s32.totalorder %v1569, 1
        %vm1602 = vcmp.eq.s32.totalorder %v1570, 1
        %vm1603 = vcmp.eq.s32.totalorder %v1571, 1
        %vm1604 = vcmp.eq.s32.totalorder %v1572, 1
        %vm1605 = vcmp.eq.s32.totalorder %v1573, 1
        %vm1606 = vcmp.eq.s32.totalorder %v1574, 1
        %vm1607 = vcmp.eq.s32.totalorder %v1575, 1
        %vm1608 = vcmp.eq.s32.totalorder %v1576, 1
        %vm1609 = vcmp.eq.s32.totalorder %v1577, 1
        %vm1610 = vcmp.eq.s32.totalorder %v1578, 1
        %v1611 = vsel %vm1579, %v1546, -inf
        %v1612 = vsel %vm1580, %v1545, -inf
        %v1613 = vsel %vm1581, %v1544, -inf
        %v1614 = vsel %vm1582, %v1543, -inf
        %v1615 = vsel %vm1583, %v1542, -inf
        %v1616 = vsel %vm1584, %v1541, -inf
        %v1617 = vsel %vm1585, %v1540, -inf
        %v1618 = vsel %vm1586, %v1539, -inf
        %v1619 = vsel %vm1587, %v1538, -inf
        %v1620 = vsel %vm1588, %v1537, -inf
        %v1621 = vsel %vm1589, %v1536, -inf
        %v1622 = vsel %vm1590, %v1535, -inf
        %v1623 = vsel %vm1591, %v1534, -inf
        %v1624 = vsel %vm1592, %v1533, -inf
        %v1625 = vsel %vm1593, %v1532, -inf
        %v1626 = vsel %vm1594, %v1531, -inf
        %v1627 = vsel %vm1595, %v1530, -inf
        %v1628 = vsel %vm1596, %v1529, -inf
        %v1629 = vsel %vm1597, %v1528, -inf
        %v1630 = vsel %vm1598, %v1527, -inf
        %v1631 = vsel %vm1599, %v1526, -inf
        %v1632 = vsel %vm1600, %v1525, -inf
        %v1633 = vsel %vm1601, %v1524, -inf
        %v1634 = vsel %vm1602, %v1523, -inf
        %v1635 = vsel %vm1603, %v1522, -inf
        %v1636 = vsel %vm1604, %v1521, -inf
        %v1637 = vsel %vm1605, %v1520, -inf
        %v1638 = vsel %vm1606, %v1519, -inf
        %v1639 = vsel %vm1607, %v1518, -inf
        %v1640 = vsel %vm1608, %v1517, -inf
        %v1641 = vsel %vm1609, %v1516, -inf
        %v1642 = vsel %vm1610, %v1515, -inf
        %v1643 = vmax.f32 %v1450, %v1611
        %v1644 = vmax.f32 %v1451, %v1612
        %v1645 = vmax.f32 %v1452, %v1613
        %v1646 = vmax.f32 %v1453, %v1614
        %v1647 = vmax.f32 %v1454, %v1615
        %v1648 = vmax.f32 %v1455, %v1616
        %v1649 = vmax.f32 %v1456, %v1617
        %v1650 = vmax.f32 %v1457, %v1618
        %v1651 = vmax.f32 %v1458, %v1619
        %v1652 = vmax.f32 %v1459, %v1620
        %v1653 = vmax.f32 %v1460, %v1621
        %v1654 = vmax.f32 %v1461, %v1622
        %v1655 = vmax.f32 %v1462, %v1623
        %v1656 = vmax.f32 %v1463, %v1624
        %v1657 = vmax.f32 %v1464, %v1625
        %v1658 = vmax.f32 %v1465, %v1626
        %v1659 = vmax.f32 %v1466, %v1627
        %v1660 = vmax.f32 %v1467, %v1628
        %v1661 = vmax.f32 %v1468, %v1629
        %v1662 = vmax.f32 %v1469, %v1630
        %v1663 = vmax.f32 %v1470, %v1631
        %v1664 = vmax.f32 %v1471, %v1632
        %v1665 = vmax.f32 %v1472, %v1633
        %v1666 = vmax.f32 %v1473, %v1634
        %v1667 = vmax.f32 %v1474, %v1635
        %v1668 = vmax.f32 %v1475, %v1636
        %v1669 = vmax.f32 %v1476, %v1637
        %v1670 = vmax.f32 %v1477, %v1638
        %v1671 = vmax.f32 %v1478, %v1639
        %v1672 = vmax.f32 %v1479, %v1640
        %v1673 = vmax.f32 %v1480, %v1641
        %v1674 = vmax.f32 %v1481, %v1642
        %v1675 = vrot.slane %v584, 2
        %v1676 = vrot.slane %v585, 2
        %v1677 = vrot.slane %v586, 2
        %v1678 = vrot.slane %v587, 2
        %v1679 = vrot.slane %v588, 2
        %v1680 = vrot.slane %v589, 2
        %v1681 = vrot.slane %v590, 2
        %v1682 = vrot.slane %v591, 2
        %v1683 = vrot.slane %v592, 2
        %v1684 = vrot.slane %v593, 2
        %v1685 = vrot.slane %v594, 2
        %v1686 = vrot.slane %v595, 2
        %v1687 = vrot.slane %v596, 2
        %v1688 = vrot.slane %v597, 2
        %v1689 = vrot.slane %v598, 2
        %v1690 = vrot.slane %v599, 2
        %v1691 = vrot.slane %v600, 2
        %v1692 = vrot.slane %v601, 2
        %v1693 = vrot.slane %v602, 2
        %v1694 = vrot.slane %v603, 2
        %v1695 = vrot.slane %v604, 2
        %v1696 = vrot.slane %v605, 2
        %v1697 = vrot.slane %v606, 2
        %v1698 = vrot.slane %v607, 2
        %v1699 = vrot.slane %v608, 2
        %v1700 = vrot.slane %v609, 2
        %v1701 = vrot.slane %v610, 2
        %v1702 = vrot.slane %v611, 2
        %v1703 = vrot.slane %v612, 2
        %v1704 = vrot.slane %v613, 2
        %v1705 = vrot.slane %v614, 2
        %v1706 = vrot.slane %v615, 2
        %vm1707 = vcmp.lt.s32.totalorder %v617, 6
        %v1708 = vsel %vm1707, %v1705, %v1706
        %v1709 = vsel %vm1707, %v1704, %v1705
        %v1710 = vsel %vm1707, %v1703, %v1704
        %v1711 = vsel %vm1707, %v1702, %v1703
        %v1712 = vsel %vm1707, %v1701, %v1702
        %v1713 = vsel %vm1707, %v1700, %v1701
        %v1714 = vsel %vm1707, %v1699, %v1700
        %v1715 = vsel %vm1707, %v1698, %v1699
        %v1716 = vsel %vm1707, %v1697, %v1698
        %v1717 = vsel %vm1707, %v1696, %v1697
        %v1718 = vsel %vm1707, %v1695, %v1696
        %v1719 = vsel %vm1707, %v1694, %v1695
        %v1720 = vsel %vm1707, %v1693, %v1694
        %v1721 = vsel %vm1707, %v1692, %v1693
        %v1722 = vsel %vm1707, %v1691, %v1692
        %v1723 = vsel %vm1707, %v1690, %v1691
        %v1724 = vsel %vm1707, %v1689, %v1690
        %v1725 = vsel %vm1707, %v1688, %v1689
        %v1726 = vsel %vm1707, %v1687, %v1688
        %v1727 = vsel %vm1707, %v1686, %v1687
        %v1728 = vsel %vm1707, %v1685, %v1686
        %v1729 = vsel %vm1707, %v1684, %v1685
        %v1730 = vsel %vm1707, %v1683, %v1684
        %v1731 = vsel %vm1707, %v1682, %v1683
        %v1732 = vsel %vm1707, %v1681, %v1682
        %v1733 = vsel %vm1707, %v1680, %v1681
        %v1734 = vsel %vm1707, %v1679, %v1680
        %v1735 = vsel %vm1707, %v1678, %v1679
        %v1736 = vsel %vm1707, %v1677, %v1678
        %v1737 = vsel %vm1707, %v1676, %v1677
        %v1738 = vsel %vm1707, %v1675, %v1676
        %v1739 = vsel %vm1707, %v1706, %v1675
        %v1740 = vsel %vm1097, 1, 0
        %v1741 = vsel %vm1098, 1, 0
        %v1742 = vsel %vm1099, 1, 0
        %v1743 = vsel %vm1100, 1, 0
        %v1744 = vsel %vm1101, 1, 0
        %v1745 = vsel %vm1102, 1, 0
        %v1746 = vsel %vm1103, 1, 0
        %v1747 = vsel %vm1104, 1, 0
        %v1748 = vsel %vm1105, 1, 0
        %v1749 = vsel %vm1106, 1, 0
        %v1750 = vsel %vm1107, 1, 0
        %v1751 = vsel %vm1108, 1, 0
        %v1752 = vsel %vm1109, 1, 0
        %v1753 = vsel %vm1110, 1, 0
        %v1754 = vsel %vm1111, 1, 0
        %v1755 = vsel %vm1112, 1, 0
        %v1756 = vsel %vm1113, 1, 0
        %v1757 = vsel %vm1114, 1, 0
        %v1758 = vsel %vm1115, 1, 0
        %v1759 = vsel %vm1116, 1, 0
        %v1760 = vsel %vm1117, 1, 0
        %v1761 = vsel %vm1118, 1, 0
        %v1762 = vsel %vm1119, 1, 0
        %v1763 = vsel %vm1120, 1, 0
        %v1764 = vsel %vm1121, 1, 0
        %v1765 = vsel %vm1122, 1, 0
        %v1766 = vsel %vm1123, 1, 0
        %v1767 = vsel %vm1124, 1, 0
        %v1768 = vsel %vm1125, 1, 0
        %v1769 = vsel %vm1126, 1, 0
        %v1770 = vsel %vm1127, 1, 0
        %v1771 = vsel %vm1128, 1, 0
        %vm1772 = vcmp.eq.s32.totalorder %v1740, 1
        %vm1773 = vcmp.eq.s32.totalorder %v1741, 1
        %vm1774 = vcmp.eq.s32.totalorder %v1742, 1
        %vm1775 = vcmp.eq.s32.totalorder %v1743, 1
        %vm1776 = vcmp.eq.s32.totalorder %v1744, 1
        %vm1777 = vcmp.eq.s32.totalorder %v1745, 1
        %vm1778 = vcmp.eq.s32.totalorder %v1746, 1
        %vm1779 = vcmp.eq.s32.totalorder %v1747, 1
        %vm1780 = vcmp.eq.s32.totalorder %v1748, 1
        %vm1781 = vcmp.eq.s32.totalorder %v1749, 1
        %vm1782 = vcmp.eq.s32.totalorder %v1750, 1
        %vm1783 = vcmp.eq.s32.totalorder %v1751, 1
        %vm1784 = vcmp.eq.s32.totalorder %v1752, 1
        %vm1785 = vcmp.eq.s32.totalorder %v1753, 1
        %vm1786 = vcmp.eq.s32.totalorder %v1754, 1
        %vm1787 = vcmp.eq.s32.totalorder %v1755, 1
        %vm1788 = vcmp.eq.s32.totalorder %v1756, 1
        %vm1789 = vcmp.eq.s32.totalorder %v1757, 1
        %vm1790 = vcmp.eq.s32.totalorder %v1758, 1
        %vm1791 = vcmp.eq.s32.totalorder %v1759, 1
        %vm1792 = vcmp.eq.s32.totalorder %v1760, 1
        %vm1793 = vcmp.eq.s32.totalorder %v1761, 1
        %vm1794 = vcmp.eq.s32.totalorder %v1762, 1
        %vm1795 = vcmp.eq.s32.totalorder %v1763, 1
        %vm1796 = vcmp.eq.s32.totalorder %v1764, 1
        %vm1797 = vcmp.eq.s32.totalorder %v1765, 1
        %vm1798 = vcmp.eq.s32.totalorder %v1766, 1
        %vm1799 = vcmp.eq.s32.totalorder %v1767, 1
        %vm1800 = vcmp.eq.s32.totalorder %v1768, 1
        %vm1801 = vcmp.eq.s32.totalorder %v1769, 1
        %vm1802 = vcmp.eq.s32.totalorder %v1770, 1
        %vm1803 = vcmp.eq.s32.totalorder %v1771, 1
        %v1804 = vsel %vm1772, %v1738, -inf
        %v1805 = vsel %vm1773, %v1737, -inf
        %v1806 = vsel %vm1774, %v1736, -inf
        %v1807 = vsel %vm1775, %v1735, -inf
        %v1808 = vsel %vm1776, %v1734, -inf
        %v1809 = vsel %vm1777, %v1733, -inf
        %v1810 = vsel %vm1778, %v1732, -inf
        %v1811 = vsel %vm1779, %v1731, -inf
        %v1812 = vsel %vm1780, %v1730, -inf
        %v1813 = vsel %vm1781, %v1729, -inf
        %v1814 = vsel %vm1782, %v1728, -inf
        %v1815 = vsel %vm1783, %v1727, -inf
        %v1816 = vsel %vm1784, %v1726, -inf
        %v1817 = vsel %vm1785, %v1725, -inf
        %v1818 = vsel %vm1786, %v1724, -inf
        %v1819 = vsel %vm1787, %v1723, -inf
        %v1820 = vsel %vm1788, %v1722, -inf
        %v1821 = vsel %vm1789, %v1721, -inf
        %v1822 = vsel %vm1790, %v1720, -inf
        %v1823 = vsel %vm1791, %v1719, -inf
        %v1824 = vsel %vm1792, %v1718, -inf
        %v1825 = vsel %vm1793, %v1717, -inf
        %v1826 = vsel %vm1794, %v1716, -inf
        %v1827 = vsel %vm1795, %v1715, -inf
        %v1828 = vsel %vm1796, %v1714, -inf
        %v1829 = vsel %vm1797, %v1713, -inf
        %v1830 = vsel %vm1798, %v1712, -inf
        %v1831 = vsel %vm1799, %v1711, -inf
        %v1832 = vsel %vm1800, %v1710, -inf
        %v1833 = vsel %vm1801, %v1709, -inf
        %v1834 = vsel %vm1802, %v1708, -inf
        %v1835 = vsel %vm1803, %v1739, -inf
        %v1836 = vmax.f32 %v1643, %v1804
        %v1837 = vmax.f32 %v1644, %v1805
        %v1838 = vmax.f32 %v1645, %v1806
        %v1839 = vmax.f32 %v1646, %v1807
        %v1840 = vmax.f32 %v1647, %v1808
        %v1841 = vmax.f32 %v1648, %v1809
        %v1842 = vmax.f32 %v1649, %v1810
        %v1843 = vmax.f32 %v1650, %v1811
        %v1844 = vmax.f32 %v1651, %v1812
        %v1845 = vmax.f32 %v1652, %v1813
        %v1846 = vmax.f32 %v1653, %v1814
        %v1847 = vmax.f32 %v1654, %v1815
        %v1848 = vmax.f32 %v1655, %v1816
        %v1849 = vmax.f32 %v1656, %v1817
        %v1850 = vmax.f32 %v1657, %v1818
        %v1851 = vmax.f32 %v1658, %v1819
        %v1852 = vmax.f32 %v1659, %v1820
        %v1853 = vmax.f32 %v1660, %v1821
        %v1854 = vmax.f32 %v1661, %v1822
        %v1855 = vmax.f32 %v1662, %v1823
        %v1856 = vmax.f32 %v1663, %v1824
        %v1857 = vmax.f32 %v1664, %v1825
        %v1858 = vmax.f32 %v1665, %v1826
        %v1859 = vmax.f32 %v1666, %v1827
        %v1860 = vmax.f32 %v1667, %v1828
        %v1861 = vmax.f32 %v1668, %v1829
        %v1862 = vmax.f32 %v1669, %v1830
        %v1863 = vmax.f32 %v1670, %v1831
        %v1864 = vmax.f32 %v1671, %v1832
        %v1865 = vmax.f32 %v1672, %v1833
        %v1866 = vmax.f32 %v1673, %v1834
        %v1867 = vmax.f32 %v1674, %v1835
        %v1868 = vrot.slane %v584, 6
        %v1869 = vrot.slane %v585, 6
        %v1870 = vrot.slane %v586, 6
        %v1871 = vrot.slane %v587, 6
        %v1872 = vrot.slane %v588, 6
        %v1873 = vrot.slane %v589, 6
        %v1874 = vrot.slane %v590, 6
        %v1875 = vrot.slane %v591, 6
        %v1876 = vrot.slane %v592, 6
        %v1877 = vrot.slane %v593, 6
        %v1878 = vrot.slane %v594, 6
        %v1879 = vrot.slane %v595, 6
        %v1880 = vrot.slane %v596, 6
        %v1881 = vrot.slane %v597, 6
        %v1882 = vrot.slane %v598, 6
        %v1883 = vrot.slane %v599, 6
        %v1884 = vrot.slane %v600, 6
        %v1885 = vrot.slane %v601, 6
        %v1886 = vrot.slane %v602, 6
        %v1887 = vrot.slane %v603, 6
        %v1888 = vrot.slane %v604, 6
        %v1889 = vrot.slane %v605, 6
        %v1890 = vrot.slane %v606, 6
        %v1891 = vrot.slane %v607, 6
        %v1892 = vrot.slane %v608, 6
        %v1893 = vrot.slane %v609, 6
        %v1894 = vrot.slane %v610, 6
        %v1895 = vrot.slane %v611, 6
        %v1896 = vrot.slane %v612, 6
        %v1897 = vrot.slane %v613, 6
        %v1898 = vrot.slane %v614, 6
        %v1899 = vrot.slane %v615, 6
        %vm1900 = vcmp.lt.s32.totalorder %v617, 2
        %v1901 = vsel %vm1900, %v1898, %v1899
        %v1902 = vsel %vm1900, %v1897, %v1898
        %v1903 = vsel %vm1900, %v1896, %v1897
        %v1904 = vsel %vm1900, %v1895, %v1896
        %v1905 = vsel %vm1900, %v1894, %v1895
        %v1906 = vsel %vm1900, %v1893, %v1894
        %v1907 = vsel %vm1900, %v1892, %v1893
        %v1908 = vsel %vm1900, %v1891, %v1892
        %v1909 = vsel %vm1900, %v1890, %v1891
        %v1910 = vsel %vm1900, %v1889, %v1890
        %v1911 = vsel %vm1900, %v1888, %v1889
        %v1912 = vsel %vm1900, %v1887, %v1888
        %v1913 = vsel %vm1900, %v1886, %v1887
        %v1914 = vsel %vm1900, %v1885, %v1886
        %v1915 = vsel %vm1900, %v1884, %v1885
        %v1916 = vsel %vm1900, %v1883, %v1884
        %v1917 = vsel %vm1900, %v1882, %v1883
        %v1918 = vsel %vm1900, %v1881, %v1882
        %v1919 = vsel %vm1900, %v1880, %v1881
        %v1920 = vsel %vm1900, %v1879, %v1880
        %v1921 = vsel %vm1900, %v1878, %v1879
        %v1922 = vsel %vm1900, %v1877, %v1878
        %v1923 = vsel %vm1900, %v1876, %v1877
        %v1924 = vsel %vm1900, %v1875, %v1876
        %v1925 = vsel %vm1900, %v1874, %v1875
        %v1926 = vsel %vm1900, %v1873, %v1874
        %v1927 = vsel %vm1900, %v1872, %v1873
        %v1928 = vsel %vm1900, %v1871, %v1872
        %v1929 = vsel %vm1900, %v1870, %v1871
        %v1930 = vsel %vm1900, %v1869, %v1870
        %v1931 = vsel %vm1900, %v1868, %v1869
        %v1932 = vsel %vm1900, %v1899, %v1868
        %v1933 = vsel %vm1129, 1, 0
        %v1934 = vsel %vm1130, 1, 0
        %v1935 = vsel %vm1131, 1, 0
        %v1936 = vsel %vm1132, 1, 0
        %v1937 = vsel %vm1133, 1, 0
        %v1938 = vsel %vm1134, 1, 0
        %v1939 = vsel %vm1135, 1, 0
        %v1940 = vsel %vm1136, 1, 0
        %v1941 = vsel %vm1137, 1, 0
        %v1942 = vsel %vm1138, 1, 0
        %v1943 = vsel %vm1139, 1, 0
        %v1944 = vsel %vm1140, 1, 0
        %v1945 = vsel %vm1141, 1, 0
        %v1946 = vsel %vm1142, 1, 0
        %v1947 = vsel %vm1143, 1, 0
        %v1948 = vsel %vm1144, 1, 0
        %v1949 = vsel %vm1145, 1, 0
        %v1950 = vsel %vm1146, 1, 0
        %v1951 = vsel %vm1147, 1, 0
        %v1952 = vsel %vm1148, 1, 0
        %v1953 = vsel %vm1149, 1, 0
        %v1954 = vsel %vm1150, 1, 0
        %v1955 = vsel %vm1151, 1, 0
        %v1956 = vsel %vm1152, 1, 0
        %v1957 = vsel %vm1153, 1, 0
        %v1958 = vsel %vm1154, 1, 0
        %v1959 = vsel %vm1155, 1, 0
        %v1960 = vsel %vm1156, 1, 0
        %v1961 = vsel %vm1157, 1, 0
        %v1962 = vsel %vm1158, 1, 0
        %v1963 = vsel %vm1159, 1, 0
        %v1964 = vsel %vm1160, 1, 0
        %vm1965 = vcmp.eq.s32.totalorder %v1933, 1
        %vm1966 = vcmp.eq.s32.totalorder %v1934, 1
        %vm1967 = vcmp.eq.s32.totalorder %v1935, 1
        %vm1968 = vcmp.eq.s32.totalorder %v1936, 1
        %vm1969 = vcmp.eq.s32.totalorder %v1937, 1
        %vm1970 = vcmp.eq.s32.totalorder %v1938, 1
        %vm1971 = vcmp.eq.s32.totalorder %v1939, 1
        %vm1972 = vcmp.eq.s32.totalorder %v1940, 1
        %vm1973 = vcmp.eq.s32.totalorder %v1941, 1
        %vm1974 = vcmp.eq.s32.totalorder %v1942, 1
        %vm1975 = vcmp.eq.s32.totalorder %v1943, 1
        %vm1976 = vcmp.eq.s32.totalorder %v1944, 1
        %vm1977 = vcmp.eq.s32.totalorder %v1945, 1
        %vm1978 = vcmp.eq.s32.totalorder %v1946, 1
        %vm1979 = vcmp.eq.s32.totalorder %v1947, 1
        %vm1980 = vcmp.eq.s32.totalorder %v1948, 1
        %vm1981 = vcmp.eq.s32.totalorder %v1949, 1
        %vm1982 = vcmp.eq.s32.totalorder %v1950, 1
        %vm1983 = vcmp.eq.s32.totalorder %v1951, 1
        %vm1984 = vcmp.eq.s32.totalorder %v1952, 1
        %vm1985 = vcmp.eq.s32.totalorder %v1953, 1
        %vm1986 = vcmp.eq.s32.totalorder %v1954, 1
        %vm1987 = vcmp.eq.s32.totalorder %v1955, 1
        %vm1988 = vcmp.eq.s32.totalorder %v1956, 1
        %vm1989 = vcmp.eq.s32.totalorder %v1957, 1
        %vm1990 = vcmp.eq.s32.totalorder %v1958, 1
        %vm1991 = vcmp.eq.s32.totalorder %v1959, 1
        %vm1992 = vcmp.eq.s32.totalorder %v1960, 1
        %vm1993 = vcmp.eq.s32.totalorder %v1961, 1
        %vm1994 = vcmp.eq.s32.totalorder %v1962, 1
        %vm1995 = vcmp.eq.s32.totalorder %v1963, 1
        %vm1996 = vcmp.eq.s32.totalorder %v1964, 1
        %v1997 = vsel %vm1965, %v1932, -inf
        %v1998 = vsel %vm1966, %v1931, -inf
        %v1999 = vsel %vm1967, %v1930, -inf
        %v2000 = vsel %vm1968, %v1929, -inf
        %v2001 = vsel %vm1969, %v1928, -inf
        %v2002 = vsel %vm1970, %v1927, -inf
        %v2003 = vsel %vm1971, %v1926, -inf
        %v2004 = vsel %vm1972, %v1925, -inf
        %v2005 = vsel %vm1973, %v1924, -inf
        %v2006 = vsel %vm1974, %v1923, -inf
        %v2007 = vsel %vm1975, %v1922, -inf
        %v2008 = vsel %vm1976, %v1921, -inf
        %v2009 = vsel %vm1977, %v1920, -inf
        %v2010 = vsel %vm1978, %v1919, -inf
        %v2011 = vsel %vm1979, %v1918, -inf
        %v2012 = vsel %vm1980, %v1917, -inf
        %v2013 = vsel %vm1981, %v1916, -inf
        %v2014 = vsel %vm1982, %v1915, -inf
        %v2015 = vsel %vm1983, %v1914, -inf
        %v2016 = vsel %vm1984, %v1913, -inf
        %v2017 = vsel %vm1985, %v1912, -inf
        %v2018 = vsel %vm1986, %v1911, -inf
        %v2019 = vsel %vm1987, %v1910, -inf
        %v2020 = vsel %vm1988, %v1909, -inf
        %v2021 = vsel %vm1989, %v1908, -inf
        %v2022 = vsel %vm1990, %v1907, -inf
        %v2023 = vsel %vm1991, %v1906, -inf
        %v2024 = vsel %vm1992, %v1905, -inf
        %v2025 = vsel %vm1993, %v1904, -inf
        %v2026 = vsel %vm1994, %v1903, -inf
        %v2027 = vsel %vm1995, %v1902, -inf
        %v2028 = vsel %vm1996, %v1901, -inf
        %v2029 = vmax.f32 %v1836, %v1997
        %v2030 = vmax.f32 %v1837, %v1998
        %v2031 = vmax.f32 %v1838, %v1999
        %v2032 = vmax.f32 %v1839, %v2000
        %v2033 = vmax.f32 %v1840, %v2001
        %v2034 = vmax.f32 %v1841, %v2002
        %v2035 = vmax.f32 %v1842, %v2003
        %v2036 = vmax.f32 %v1843, %v2004
        %v2037 = vmax.f32 %v1844, %v2005
        %v2038 = vmax.f32 %v1845, %v2006
        %v2039 = vmax.f32 %v1846, %v2007
        %v2040 = vmax.f32 %v1847, %v2008
        %v2041 = vmax.f32 %v1848, %v2009
        %v2042 = vmax.f32 %v1849, %v2010
        %v2043 = vmax.f32 %v1850, %v2011
        %v2044 = vmax.f32 %v1851, %v2012
        %v2045 = vmax.f32 %v1852, %v2013
        %v2046 = vmax.f32 %v1853, %v2014
        %v2047 = vmax.f32 %v1854, %v2015
        %v2048 = vmax.f32 %v1855, %v2016
        %v2049 = vmax.f32 %v1856, %v2017
        %v2050 = vmax.f32 %v1857, %v2018
        %v2051 = vmax.f32 %v1858, %v2019
        %v2052 = vmax.f32 %v1859, %v2020
        %v2053 = vmax.f32 %v1860, %v2021
        %v2054 = vmax.f32 %v1861, %v2022
        %v2055 = vmax.f32 %v1862, %v2023
        %v2056 = vmax.f32 %v1863, %v2024
        %v2057 = vmax.f32 %v1864, %v2025
        %v2058 = vmax.f32 %v1865, %v2026
        %v2059 = vmax.f32 %v1866, %v2027
        %v2060 = vmax.f32 %v1867, %v2028
        %v2061 = vsel %vm1161, 1, 0
        %v2062 = vsel %vm1162, 1, 0
        %v2063 = vsel %vm1163, 1, 0
        %v2064 = vsel %vm1164, 1, 0
        %v2065 = vsel %vm1165, 1, 0
        %v2066 = vsel %vm1166, 1, 0
        %v2067 = vsel %vm1167, 1, 0
        %v2068 = vsel %vm1168, 1, 0
        %v2069 = vsel %vm1169, 1, 0
        %v2070 = vsel %vm1170, 1, 0
        %v2071 = vsel %vm1171, 1, 0
        %v2072 = vsel %vm1172, 1, 0
        %v2073 = vsel %vm1173, 1, 0
        %v2074 = vsel %vm1174, 1, 0
        %v2075 = vsel %vm1175, 1, 0
        %v2076 = vsel %vm1176, 1, 0
        %v2077 = vsel %vm1177, 1, 0
        %v2078 = vsel %vm1178, 1, 0
        %v2079 = vsel %vm1179, 1, 0
        %v2080 = vsel %vm1180, 1, 0
        %v2081 = vsel %vm1181, 1, 0
        %v2082 = vsel %vm1182, 1, 0
        %v2083 = vsel %vm1183, 1, 0
        %v2084 = vsel %vm1184, 1, 0
        %v2085 = vsel %vm1185, 1, 0
        %v2086 = vsel %vm1186, 1, 0
        %v2087 = vsel %vm1187, 1, 0
        %v2088 = vsel %vm1188, 1, 0
        %v2089 = vsel %vm1189, 1, 0
        %v2090 = vsel %vm1190, 1, 0
        %v2091 = vsel %vm1191, 1, 0
        %v2092 = vsel %vm1192, 1, 0
        %vm2093 = vcmp.eq.s32.totalorder %v2061, 1
        %vm2094 = vcmp.eq.s32.totalorder %v2062, 1
        %vm2095 = vcmp.eq.s32.totalorder %v2063, 1
        %vm2096 = vcmp.eq.s32.totalorder %v2064, 1
        %vm2097 = vcmp.eq.s32.totalorder %v2065, 1
        %vm2098 = vcmp.eq.s32.totalorder %v2066, 1
        %vm2099 = vcmp.eq.s32.totalorder %v2067, 1
        %vm2100 = vcmp.eq.s32.totalorder %v2068, 1
        %vm2101 = vcmp.eq.s32.totalorder %v2069, 1
        %vm2102 = vcmp.eq.s32.totalorder %v2070, 1
        %vm2103 = vcmp.eq.s32.totalorder %v2071, 1
        %vm2104 = vcmp.eq.s32.totalorder %v2072, 1
        %vm2105 = vcmp.eq.s32.totalorder %v2073, 1
        %vm2106 = vcmp.eq.s32.totalorder %v2074, 1
        %vm2107 = vcmp.eq.s32.totalorder %v2075, 1
        %vm2108 = vcmp.eq.s32.totalorder %v2076, 1
        %vm2109 = vcmp.eq.s32.totalorder %v2077, 1
        %vm2110 = vcmp.eq.s32.totalorder %v2078, 1
        %vm2111 = vcmp.eq.s32.totalorder %v2079, 1
        %vm2112 = vcmp.eq.s32.totalorder %v2080, 1
        %vm2113 = vcmp.eq.s32.totalorder %v2081, 1
        %vm2114 = vcmp.eq.s32.totalorder %v2082, 1
        %vm2115 = vcmp.eq.s32.totalorder %v2083, 1
        %vm2116 = vcmp.eq.s32.totalorder %v2084, 1
        %vm2117 = vcmp.eq.s32.totalorder %v2085, 1
        %vm2118 = vcmp.eq.s32.totalorder %v2086, 1
        %vm2119 = vcmp.eq.s32.totalorder %v2087, 1
        %vm2120 = vcmp.eq.s32.totalorder %v2088, 1
        %vm2121 = vcmp.eq.s32.totalorder %v2089, 1
        %vm2122 = vcmp.eq.s32.totalorder %v2090, 1
        %vm2123 = vcmp.eq.s32.totalorder %v2091, 1
        %vm2124 = vcmp.eq.s32.totalorder %v2092, 1
        %v2125 = vsel %vm2093, %v2031, -inf
        %v2126 = vsel %vm2094, %v2032, -inf
        %v2127 = vsel %vm2095, %v2033, -inf
        %v2128 = vsel %vm2096, %v2034, -inf
        %v2129 = vsel %vm2097, %v2035, -inf
        %v2130 = vsel %vm2098, %v2036, -inf
        %v2131 = vsel %vm2099, %v2037, -inf
        %v2132 = vsel %vm2100, %v2038, -inf
        %v2133 = vsel %vm2101, %v2039, -inf
        %v2134 = vsel %vm2102, %v2040, -inf
        %v2135 = vsel %vm2103, %v2041, -inf
        %v2136 = vsel %vm2104, %v2042, -inf
        %v2137 = vsel %vm2105, %v2043, -inf
        %v2138 = vsel %vm2106, %v2044, -inf
        %v2139 = vsel %vm2107, %v2045, -inf
        %v2140 = vsel %vm2108, %v2046, -inf
        %v2141 = vsel %vm2109, %v2047, -inf
        %v2142 = vsel %vm2110, %v2048, -inf
        %v2143 = vsel %vm2111, %v2049, -inf
        %v2144 = vsel %vm2112, %v2050, -inf
        %v2145 = vsel %vm2113, %v2051, -inf
        %v2146 = vsel %vm2114, %v2052, -inf
        %v2147 = vsel %vm2115, %v2053, -inf
        %v2148 = vsel %vm2116, %v2054, -inf
        %v2149 = vsel %vm2117, %v2055, -inf
        %v2150 = vsel %vm2118, %v2056, -inf
        %v2151 = vsel %vm2119, %v2057, -inf
        %v2152 = vsel %vm2120, %v2058, -inf
        %v2153 = vsel %vm2121, %v2059, -inf
        %v2154 = vsel %vm2122, %v2060, -inf
        %v2155 = vsel %vm2123, %v2029, -inf
        %v2156 = vsel %vm2124, %v2030, -inf
        %v2157 = vmax.f32 %v2029, %v2125
        %v2158 = vmax.f32 %v2030, %v2126
        %v2159 = vmax.f32 %v2031, %v2127
        %v2160 = vmax.f32 %v2032, %v2128
        %v2161 = vmax.f32 %v2033, %v2129
        %v2162 = vmax.f32 %v2034, %v2130
        %v2163 = vmax.f32 %v2035, %v2131
        %v2164 = vmax.f32 %v2036, %v2132
        %v2165 = vmax.f32 %v2037, %v2133
        %v2166 = vmax.f32 %v2038, %v2134
        %v2167 = vmax.f32 %v2039, %v2135
        %v2168 = vmax.f32 %v2040, %v2136
        %v2169 = vmax.f32 %v2041, %v2137
        %v2170 = vmax.f32 %v2042, %v2138
        %v2171 = vmax.f32 %v2043, %v2139
        %v2172 = vmax.f32 %v2044, %v2140
        %v2173 = vmax.f32 %v2045, %v2141
        %v2174 = vmax.f32 %v2046, %v2142
        %v2175 = vmax.f32 %v2047, %v2143
        %v2176 = vmax.f32 %v2048, %v2144
        %v2177 = vmax.f32 %v2049, %v2145
        %v2178 = vmax.f32 %v2050, %v2146
        %v2179 = vmax.f32 %v2051, %v2147
        %v2180 = vmax.f32 %v2052, %v2148
        %v2181 = vmax.f32 %v2053, %v2149
        %v2182 = vmax.f32 %v2054, %v2150
        %v2183 = vmax.f32 %v2055, %v2151
        %v2184 = vmax.f32 %v2056, %v2152
        %v2185 = vmax.f32 %v2057, %v2153
        %v2186 = vmax.f32 %v2058, %v2154
        %v2187 = vmax.f32 %v2059, %v2155
        %v2188 = vmax.f32 %v2060, %v2156
        %v2189 = vsel %vm1193, 1, 0
        %v2190 = vsel %vm1194, 1, 0
        %v2191 = vsel %vm1195, 1, 0
        %v2192 = vsel %vm1196, 1, 0
        %v2193 = vsel %vm1197, 1, 0
        %v2194 = vsel %vm1198, 1, 0
        %v2195 = vsel %vm1199, 1, 0
        %v2196 = vsel %vm1200, 1, 0
        %v2197 = vsel %vm1201, 1, 0
        %v2198 = vsel %vm1202, 1, 0
        %v2199 = vsel %vm1203, 1, 0
        %v2200 = vsel %vm1204, 1, 0
        %v2201 = vsel %vm1205, 1, 0
        %v2202 = vsel %vm1206, 1, 0
        %v2203 = vsel %vm1207, 1, 0
        %v2204 = vsel %vm1208, 1, 0
        %v2205 = vsel %vm1209, 1, 0
        %v2206 = vsel %vm1210, 1, 0
        %v2207 = vsel %vm1211, 1, 0
        %v2208 = vsel %vm1212, 1, 0
        %v2209 = vsel %vm1213, 1, 0
        %v2210 = vsel %vm1214, 1, 0
        %v2211 = vsel %vm1215, 1, 0
        %v2212 = vsel %vm1216, 1, 0
        %v2213 = vsel %vm1217, 1, 0
        %v2214 = vsel %vm1218, 1, 0
        %v2215 = vsel %vm1219, 1, 0
        %v2216 = vsel %vm1220, 1, 0
        %v2217 = vsel %vm1221, 1, 0
        %v2218 = vsel %vm1222, 1, 0
        %v2219 = vsel %vm1223, 1, 0
        %v2220 = vsel %vm1224, 1, 0
        %vm2221 = vcmp.eq.s32.totalorder %v2189, 1
        %vm2222 = vcmp.eq.s32.totalorder %v2190, 1
        %vm2223 = vcmp.eq.s32.totalorder %v2191, 1
        %vm2224 = vcmp.eq.s32.totalorder %v2192, 1
        %vm2225 = vcmp.eq.s32.totalorder %v2193, 1
        %vm2226 = vcmp.eq.s32.totalorder %v2194, 1
        %vm2227 = vcmp.eq.s32.totalorder %v2195, 1
        %vm2228 = vcmp.eq.s32.totalorder %v2196, 1
        %vm2229 = vcmp.eq.s32.totalorder %v2197, 1
        %vm2230 = vcmp.eq.s32.totalorder %v2198, 1
        %vm2231 = vcmp.eq.s32.totalorder %v2199, 1
        %vm2232 = vcmp.eq.s32.totalorder %v2200, 1
        %vm2233 = vcmp.eq.s32.totalorder %v2201, 1
        %vm2234 = vcmp.eq.s32.totalorder %v2202, 1
        %vm2235 = vcmp.eq.s32.totalorder %v2203, 1
        %vm2236 = vcmp.eq.s32.totalorder %v2204, 1
        %vm2237 = vcmp.eq.s32.totalorder %v2205, 1
        %vm2238 = vcmp.eq.s32.totalorder %v2206, 1
        %vm2239 = vcmp.eq.s32.totalorder %v2207, 1
        %vm2240 = vcmp.eq.s32.totalorder %v2208, 1
        %vm2241 = vcmp.eq.s32.totalorder %v2209, 1
        %vm2242 = vcmp.eq.s32.totalorder %v2210, 1
        %vm2243 = vcmp.eq.s32.totalorder %v2211, 1
        %vm2244 = vcmp.eq.s32.totalorder %v2212, 1
        %vm2245 = vcmp.eq.s32.totalorder %v2213, 1
        %vm2246 = vcmp.eq.s32.totalorder %v2214, 1
        %vm2247 = vcmp.eq.s32.totalorder %v2215, 1
        %vm2248 = vcmp.eq.s32.totalorder %v2216, 1
        %vm2249 = vcmp.eq.s32.totalorder %v2217, 1
        %vm2250 = vcmp.eq.s32.totalorder %v2218, 1
        %vm2251 = vcmp.eq.s32.totalorder %v2219, 1
        %vm2252 = vcmp.eq.s32.totalorder %v2220, 1
        %v2253 = vsel %vm2221, %v2059, -inf
        %v2254 = vsel %vm2222, %v2060, -inf
        %v2255 = vsel %vm2223, %v2029, -inf
        %v2256 = vsel %vm2224, %v2030, -inf
        %v2257 = vsel %vm2225, %v2031, -inf
        %v2258 = vsel %vm2226, %v2032, -inf
        %v2259 = vsel %vm2227, %v2033, -inf
        %v2260 = vsel %vm2228, %v2034, -inf
        %v2261 = vsel %vm2229, %v2035, -inf
        %v2262 = vsel %vm2230, %v2036, -inf
        %v2263 = vsel %vm2231, %v2037, -inf
        %v2264 = vsel %vm2232, %v2038, -inf
        %v2265 = vsel %vm2233, %v2039, -inf
        %v2266 = vsel %vm2234, %v2040, -inf
        %v2267 = vsel %vm2235, %v2041, -inf
        %v2268 = vsel %vm2236, %v2042, -inf
        %v2269 = vsel %vm2237, %v2043, -inf
        %v2270 = vsel %vm2238, %v2044, -inf
        %v2271 = vsel %vm2239, %v2045, -inf
        %v2272 = vsel %vm2240, %v2046, -inf
        %v2273 = vsel %vm2241, %v2047, -inf
        %v2274 = vsel %vm2242, %v2048, -inf
        %v2275 = vsel %vm2243, %v2049, -inf
        %v2276 = vsel %vm2244, %v2050, -inf
        %v2277 = vsel %vm2245, %v2051, -inf
        %v2278 = vsel %vm2246, %v2052, -inf
        %v2279 = vsel %vm2247, %v2053, -inf
        %v2280 = vsel %vm2248, %v2054, -inf
        %v2281 = vsel %vm2249, %v2055, -inf
        %v2282 = vsel %vm2250, %v2056, -inf
        %v2283 = vsel %vm2251, %v2057, -inf
        %v2284 = vsel %vm2252, %v2058, -inf
        %v2285 = vmax.f32 %v2157, %v2253
        %v2286 = vmax.f32 %v2158, %v2254
        %v2287 = vmax.f32 %v2159, %v2255
        %v2288 = vmax.f32 %v2160, %v2256
        %v2289 = vmax.f32 %v2161, %v2257
        %v2290 = vmax.f32 %v2162, %v2258
        %v2291 = vmax.f32 %v2163, %v2259
        %v2292 = vmax.f32 %v2164, %v2260
        %v2293 = vmax.f32 %v2165, %v2261
        %v2294 = vmax.f32 %v2166, %v2262
        %v2295 = vmax.f32 %v2167, %v2263
        %v2296 = vmax.f32 %v2168, %v2264
        %v2297 = vmax.f32 %v2169, %v2265
        %v2298 = vmax.f32 %v2170, %v2266
        %v2299 = vmax.f32 %v2171, %v2267
        %v2300 = vmax.f32 %v2172, %v2268
        %v2301 = vmax.f32 %v2173, %v2269
        %v2302 = vmax.f32 %v2174, %v2270
        %v2303 = vmax.f32 %v2175, %v2271
        %v2304 = vmax.f32 %v2176, %v2272
        %v2305 = vmax.f32 %v2177, %v2273
        %v2306 = vmax.f32 %v2178, %v2274
        %v2307 = vmax.f32 %v2179, %v2275
        %v2308 = vmax.f32 %v2180, %v2276
        %v2309 = vmax.f32 %v2181, %v2277
        %v2310 = vmax.f32 %v2182, %v2278
        %v2311 = vmax.f32 %v2183, %v2279
        %v2312 = vmax.f32 %v2184, %v2280
        %v2313 = vmax.f32 %v2185, %v2281
        %v2314 = vmax.f32 %v2186, %v2282
        %v2315 = vmax.f32 %v2187, %v2283
        %v2316 = vmax.f32 %v2188, %v2284
        %v2317 = vsel %vm1225, 1, 0
        %v2318 = vsel %vm1226, 1, 0
        %v2319 = vsel %vm1227, 1, 0
        %v2320 = vsel %vm1228, 1, 0
        %v2321 = vsel %vm1229, 1, 0
        %v2322 = vsel %vm1230, 1, 0
        %v2323 = vsel %vm1231, 1, 0
        %v2324 = vsel %vm1232, 1, 0
        %v2325 = vsel %vm1233, 1, 0
        %v2326 = vsel %vm1234, 1, 0
        %v2327 = vsel %vm1235, 1, 0
        %v2328 = vsel %vm1236, 1, 0
        %v2329 = vsel %vm1237, 1, 0
        %v2330 = vsel %vm1238, 1, 0
        %v2331 = vsel %vm1239, 1, 0
        %v2332 = vsel %vm1240, 1, 0
        %v2333 = vsel %vm1241, 1, 0
        %v2334 = vsel %vm1242, 1, 0
        %v2335 = vsel %vm1243, 1, 0
        %v2336 = vsel %vm1244, 1, 0
        %v2337 = vsel %vm1245, 1, 0
        %v2338 = vsel %vm1246, 1, 0
        %v2339 = vsel %vm1247, 1, 0
        %v2340 = vsel %vm1248, 1, 0
        %v2341 = vsel %vm1249, 1, 0
        %v2342 = vsel %vm1250, 1, 0
        %v2343 = vsel %vm1251, 1, 0
        %v2344 = vsel %vm1252, 1, 0
        %v2345 = vsel %vm1253, 1, 0
        %v2346 = vsel %vm1254, 1, 0
        %v2347 = vsel %vm1255, 1, 0
        %v2348 = vsel %vm1256, 1, 0
        %vm2349 = vcmp.eq.s32.totalorder %v2317, 1
        %vm2350 = vcmp.eq.s32.totalorder %v2318, 1
        %vm2351 = vcmp.eq.s32.totalorder %v2319, 1
        %vm2352 = vcmp.eq.s32.totalorder %v2320, 1
        %vm2353 = vcmp.eq.s32.totalorder %v2321, 1
        %vm2354 = vcmp.eq.s32.totalorder %v2322, 1
        %vm2355 = vcmp.eq.s32.totalorder %v2323, 1
        %vm2356 = vcmp.eq.s32.totalorder %v2324, 1
        %vm2357 = vcmp.eq.s32.totalorder %v2325, 1
        %vm2358 = vcmp.eq.s32.totalorder %v2326, 1
        %vm2359 = vcmp.eq.s32.totalorder %v2327, 1
        %vm2360 = vcmp.eq.s32.totalorder %v2328, 1
        %vm2361 = vcmp.eq.s32.totalorder %v2329, 1
        %vm2362 = vcmp.eq.s32.totalorder %v2330, 1
        %vm2363 = vcmp.eq.s32.totalorder %v2331, 1
        %vm2364 = vcmp.eq.s32.totalorder %v2332, 1
        %vm2365 = vcmp.eq.s32.totalorder %v2333, 1
        %vm2366 = vcmp.eq.s32.totalorder %v2334, 1
        %vm2367 = vcmp.eq.s32.totalorder %v2335, 1
        %vm2368 = vcmp.eq.s32.totalorder %v2336, 1
        %vm2369 = vcmp.eq.s32.totalorder %v2337, 1
        %vm2370 = vcmp.eq.s32.totalorder %v2338, 1
        %vm2371 = vcmp.eq.s32.totalorder %v2339, 1
        %vm2372 = vcmp.eq.s32.totalorder %v2340, 1
        %vm2373 = vcmp.eq.s32.totalorder %v2341, 1
        %vm2374 = vcmp.eq.s32.totalorder %v2342, 1
        %vm2375 = vcmp.eq.s32.totalorder %v2343, 1
        %vm2376 = vcmp.eq.s32.totalorder %v2344, 1
        %vm2377 = vcmp.eq.s32.totalorder %v2345, 1
        %vm2378 = vcmp.eq.s32.totalorder %v2346, 1
        %vm2379 = vcmp.eq.s32.totalorder %v2347, 1
        %vm2380 = vcmp.eq.s32.totalorder %v2348, 1
        %v2381 = vsel %vm2349, %v2033, -inf
        %v2382 = vsel %vm2350, %v2034, -inf
        %v2383 = vsel %vm2351, %v2035, -inf
        %v2384 = vsel %vm2352, %v2036, -inf
        %v2385 = vsel %vm2353, %v2037, -inf
        %v2386 = vsel %vm2354, %v2038, -inf
        %v2387 = vsel %vm2355, %v2039, -inf
        %v2388 = vsel %vm2356, %v2040, -inf
        %v2389 = vsel %vm2357, %v2041, -inf
        %v2390 = vsel %vm2358, %v2042, -inf
        %v2391 = vsel %vm2359, %v2043, -inf
        %v2392 = vsel %vm2360, %v2044, -inf
        %v2393 = vsel %vm2361, %v2045, -inf
        %v2394 = vsel %vm2362, %v2046, -inf
        %v2395 = vsel %vm2363, %v2047, -inf
        %v2396 = vsel %vm2364, %v2048, -inf
        %v2397 = vsel %vm2365, %v2049, -inf
        %v2398 = vsel %vm2366, %v2050, -inf
        %v2399 = vsel %vm2367, %v2051, -inf
        %v2400 = vsel %vm2368, %v2052, -inf
        %v2401 = vsel %vm2369, %v2053, -inf
        %v2402 = vsel %vm2370, %v2054, -inf
        %v2403 = vsel %vm2371, %v2055, -inf
        %v2404 = vsel %vm2372, %v2056, -inf
        %v2405 = vsel %vm2373, %v2057, -inf
        %v2406 = vsel %vm2374, %v2058, -inf
        %v2407 = vsel %vm2375, %v2059, -inf
        %v2408 = vsel %vm2376, %v2060, -inf
        %v2409 = vsel %vm2377, %v2029, -inf
        %v2410 = vsel %vm2378, %v2030, -inf
        %v2411 = vsel %vm2379, %v2031, -inf
        %v2412 = vsel %vm2380, %v2032, -inf
        %v2413 = vmax.f32 %v2285, %v2381
        %v2414 = vmax.f32 %v2286, %v2382
        %v2415 = vmax.f32 %v2287, %v2383
        %v2416 = vmax.f32 %v2288, %v2384
        %v2417 = vmax.f32 %v2289, %v2385
        %v2418 = vmax.f32 %v2290, %v2386
        %v2419 = vmax.f32 %v2291, %v2387
        %v2420 = vmax.f32 %v2292, %v2388
        %v2421 = vmax.f32 %v2293, %v2389
        %v2422 = vmax.f32 %v2294, %v2390
        %v2423 = vmax.f32 %v2295, %v2391
        %v2424 = vmax.f32 %v2296, %v2392
        %v2425 = vmax.f32 %v2297, %v2393
        %v2426 = vmax.f32 %v2298, %v2394
        %v2427 = vmax.f32 %v2299, %v2395
        %v2428 = vmax.f32 %v2300, %v2396
        %v2429 = vmax.f32 %v2301, %v2397
        %v2430 = vmax.f32 %v2302, %v2398
        %v2431 = vmax.f32 %v2303, %v2399
        %v2432 = vmax.f32 %v2304, %v2400
        %v2433 = vmax.f32 %v2305, %v2401
        %v2434 = vmax.f32 %v2306, %v2402
        %v2435 = vmax.f32 %v2307, %v2403
        %v2436 = vmax.f32 %v2308, %v2404
        %v2437 = vmax.f32 %v2309, %v2405
        %v2438 = vmax.f32 %v2310, %v2406
        %v2439 = vmax.f32 %v2311, %v2407
        %v2440 = vmax.f32 %v2312, %v2408
        %v2441 = vmax.f32 %v2313, %v2409
        %v2442 = vmax.f32 %v2314, %v2410
        %v2443 = vmax.f32 %v2315, %v2411
        %v2444 = vmax.f32 %v2316, %v2412
        %v2445 = vsel %vm1257, 1, 0
        %v2446 = vsel %vm1258, 1, 0
        %v2447 = vsel %vm1259, 1, 0
        %v2448 = vsel %vm1260, 1, 0
        %v2449 = vsel %vm1261, 1, 0
        %v2450 = vsel %vm1262, 1, 0
        %v2451 = vsel %vm1263, 1, 0
        %v2452 = vsel %vm1264, 1, 0
        %v2453 = vsel %vm1265, 1, 0
        %v2454 = vsel %vm1266, 1, 0
        %v2455 = vsel %vm1267, 1, 0
        %v2456 = vsel %vm1268, 1, 0
        %v2457 = vsel %vm1269, 1, 0
        %v2458 = vsel %vm1270, 1, 0
        %v2459 = vsel %vm1271, 1, 0
        %v2460 = vsel %vm1272, 1, 0
        %v2461 = vsel %vm1273, 1, 0
        %v2462 = vsel %vm1274, 1, 0
        %v2463 = vsel %vm1275, 1, 0
        %v2464 = vsel %vm1276, 1, 0
        %v2465 = vsel %vm1277, 1, 0
        %v2466 = vsel %vm1278, 1, 0
        %v2467 = vsel %vm1279, 1, 0
        %v2468 = vsel %vm1280, 1, 0
        %v2469 = vsel %vm1281, 1, 0
        %v2470 = vsel %vm1282, 1, 0
        %v2471 = vsel %vm1283, 1, 0
        %v2472 = vsel %vm1284, 1, 0
        %v2473 = vsel %vm1285, 1, 0
        %v2474 = vsel %vm1286, 1, 0
        %v2475 = vsel %vm1287, 1, 0
        %v2476 = vsel %vm1288, 1, 0
        %vm2477 = vcmp.eq.s32.totalorder %v2445, 1
        %vm2478 = vcmp.eq.s32.totalorder %v2446, 1
        %vm2479 = vcmp.eq.s32.totalorder %v2447, 1
        %vm2480 = vcmp.eq.s32.totalorder %v2448, 1
        %vm2481 = vcmp.eq.s32.totalorder %v2449, 1
        %vm2482 = vcmp.eq.s32.totalorder %v2450, 1
        %vm2483 = vcmp.eq.s32.totalorder %v2451, 1
        %vm2484 = vcmp.eq.s32.totalorder %v2452, 1
        %vm2485 = vcmp.eq.s32.totalorder %v2453, 1
        %vm2486 = vcmp.eq.s32.totalorder %v2454, 1
        %vm2487 = vcmp.eq.s32.totalorder %v2455, 1
        %vm2488 = vcmp.eq.s32.totalorder %v2456, 1
        %vm2489 = vcmp.eq.s32.totalorder %v2457, 1
        %vm2490 = vcmp.eq.s32.totalorder %v2458, 1
        %vm2491 = vcmp.eq.s32.totalorder %v2459, 1
        %vm2492 = vcmp.eq.s32.totalorder %v2460, 1
        %vm2493 = vcmp.eq.s32.totalorder %v2461, 1
        %vm2494 = vcmp.eq.s32.totalorder %v2462, 1
        %vm2495 = vcmp.eq.s32.totalorder %v2463, 1
        %vm2496 = vcmp.eq.s32.totalorder %v2464, 1
        %vm2497 = vcmp.eq.s32.totalorder %v2465, 1
        %vm2498 = vcmp.eq.s32.totalorder %v2466, 1
        %vm2499 = vcmp.eq.s32.totalorder %v2467, 1
        %vm2500 = vcmp.eq.s32.totalorder %v2468, 1
        %vm2501 = vcmp.eq.s32.totalorder %v2469, 1
        %vm2502 = vcmp.eq.s32.totalorder %v2470, 1
        %vm2503 = vcmp.eq.s32.totalorder %v2471, 1
        %vm2504 = vcmp.eq.s32.totalorder %v2472, 1
        %vm2505 = vcmp.eq.s32.totalorder %v2473, 1
        %vm2506 = vcmp.eq.s32.totalorder %v2474, 1
        %vm2507 = vcmp.eq.s32.totalorder %v2475, 1
        %vm2508 = vcmp.eq.s32.totalorder %v2476, 1
        %v2509 = vsel %vm2477, %v2057, -inf
        %v2510 = vsel %vm2478, %v2058, -inf
        %v2511 = vsel %vm2479, %v2059, -inf
        %v2512 = vsel %vm2480, %v2060, -inf
        %v2513 = vsel %vm2481, %v2029, -inf
        %v2514 = vsel %vm2482, %v2030, -inf
        %v2515 = vsel %vm2483, %v2031, -inf
        %v2516 = vsel %vm2484, %v2032, -inf
        %v2517 = vsel %vm2485, %v2033, -inf
        %v2518 = vsel %vm2486, %v2034, -inf
        %v2519 = vsel %vm2487, %v2035, -inf
        %v2520 = vsel %vm2488, %v2036, -inf
        %v2521 = vsel %vm2489, %v2037, -inf
        %v2522 = vsel %vm2490, %v2038, -inf
        %v2523 = vsel %vm2491, %v2039, -inf
        %v2524 = vsel %vm2492, %v2040, -inf
        %v2525 = vsel %vm2493, %v2041, -inf
        %v2526 = vsel %vm2494, %v2042, -inf
        %v2527 = vsel %vm2495, %v2043, -inf
        %v2528 = vsel %vm2496, %v2044, -inf
        %v2529 = vsel %vm2497, %v2045, -inf
        %v2530 = vsel %vm2498, %v2046, -inf
        %v2531 = vsel %vm2499, %v2047, -inf
        %v2532 = vsel %vm2500, %v2048, -inf
        %v2533 = vsel %vm2501, %v2049, -inf
        %v2534 = vsel %vm2502, %v2050, -inf
        %v2535 = vsel %vm2503, %v2051, -inf
        %v2536 = vsel %vm2504, %v2052, -inf
        %v2537 = vsel %vm2505, %v2053, -inf
        %v2538 = vsel %vm2506, %v2054, -inf
        %v2539 = vsel %vm2507, %v2055, -inf
        %v2540 = vsel %vm2508, %v2056, -inf
        %v2541 = vmax.f32 %v2413, %v2509
        %v2542 = vmax.f32 %v2414, %v2510
        %v2543 = vmax.f32 %v2415, %v2511
        %v2544 = vmax.f32 %v2416, %v2512
        %v2545 = vmax.f32 %v2417, %v2513
        %v2546 = vmax.f32 %v2418, %v2514
        %v2547 = vmax.f32 %v2419, %v2515
        %v2548 = vmax.f32 %v2420, %v2516
        %v2549 = vmax.f32 %v2421, %v2517
        %v2550 = vmax.f32 %v2422, %v2518
        %v2551 = vmax.f32 %v2423, %v2519
        %v2552 = vmax.f32 %v2424, %v2520
        %v2553 = vmax.f32 %v2425, %v2521
        %v2554 = vmax.f32 %v2426, %v2522
        %v2555 = vmax.f32 %v2427, %v2523
        %v2556 = vmax.f32 %v2428, %v2524
        %v2557 = vmax.f32 %v2429, %v2525
        %v2558 = vmax.f32 %v2430, %v2526
        %v2559 = vmax.f32 %v2431, %v2527
        %v2560 = vmax.f32 %v2432, %v2528
        %v2561 = vmax.f32 %v2433, %v2529
        %v2562 = vmax.f32 %v2434, %v2530
        %v2563 = vmax.f32 %v2435, %v2531
        %v2564 = vmax.f32 %v2436, %v2532
        %v2565 = vmax.f32 %v2437, %v2533
        %v2566 = vmax.f32 %v2438, %v2534
        %v2567 = vmax.f32 %v2439, %v2535
        %v2568 = vmax.f32 %v2440, %v2536
        %v2569 = vmax.f32 %v2441, %v2537
        %v2570 = vmax.f32 %v2442, %v2538
        %v2571 = vmax.f32 %v2443, %v2539
        %v2572 = vmax.f32 %v2444, %v2540
        %v2573 = vrot.slane %v2541, 1
        %v2574 = vrot.slane %v2542, 1
        %v2575 = vrot.slane %v2543, 1
        %v2576 = vrot.slane %v2544, 1
        %v2577 = vrot.slane %v2545, 1
        %v2578 = vrot.slane %v2546, 1
        %v2579 = vrot.slane %v2547, 1
        %v2580 = vrot.slane %v2548, 1
        %v2581 = vrot.slane %v2549, 1
        %v2582 = vrot.slane %v2550, 1
        %v2583 = vrot.slane %v2551, 1
        %v2584 = vrot.slane %v2552, 1
        %v2585 = vrot.slane %v2553, 1
        %v2586 = vrot.slane %v2554, 1
        %v2587 = vrot.slane %v2555, 1
        %v2588 = vrot.slane %v2556, 1
        %v2589 = vrot.slane %v2557, 1
        %v2590 = vrot.slane %v2558, 1
        %v2591 = vrot.slane %v2559, 1
        %v2592 = vrot.slane %v2560, 1
        %v2593 = vrot.slane %v2561, 1
        %v2594 = vrot.slane %v2562, 1
        %v2595 = vrot.slane %v2563, 1
        %v2596 = vrot.slane %v2564, 1
        %v2597 = vrot.slane %v2565, 1
        %v2598 = vrot.slane %v2566, 1
        %v2599 = vrot.slane %v2567, 1
        %v2600 = vrot.slane %v2568, 1
        %v2601 = vrot.slane %v2569, 1
        %v2602 = vrot.slane %v2570, 1
        %v2603 = vrot.slane %v2571, 1
        %v2604 = vrot.slane %v2572, 1
        %v2605 = vsel %vm1321, %v2603, %v2604
        %v2606 = vsel %vm1321, %v2602, %v2603
        %v2607 = vsel %vm1321, %v2601, %v2602
        %v2608 = vsel %vm1321, %v2600, %v2601
        %v2609 = vsel %vm1321, %v2599, %v2600
        %v2610 = vsel %vm1321, %v2598, %v2599
        %v2611 = vsel %vm1321, %v2597, %v2598
        %v2612 = vsel %vm1321, %v2596, %v2597
        %v2613 = vsel %vm1321, %v2595, %v2596
        %v2614 = vsel %vm1321, %v2594, %v2595
        %v2615 = vsel %vm1321, %v2593, %v2594
        %v2616 = vsel %vm1321, %v2592, %v2593
        %v2617 = vsel %vm1321, %v2591, %v2592
        %v2618 = vsel %vm1321, %v2590, %v2591
        %v2619 = vsel %vm1321, %v2589, %v2590
        %v2620 = vsel %vm1321, %v2588, %v2589
        %v2621 = vsel %vm1321, %v2587, %v2588
        %v2622 = vsel %vm1321, %v2586, %v2587
        %v2623 = vsel %vm1321, %v2585, %v2586
        %v2624 = vsel %vm1321, %v2584, %v2585
        %v2625 = vsel %vm1321, %v2583, %v2584
        %v2626 = vsel %vm1321, %v2582, %v2583
        %v2627 = vsel %vm1321, %v2581, %v2582
        %v2628 = vsel %vm1321, %v2580, %v2581
        %v2629 = vsel %vm1321, %v2579, %v2580
        %v2630 = vsel %vm1321, %v2578, %v2579
        %v2631 = vsel %vm1321, %v2577, %v2578
        %v2632 = vsel %vm1321, %v2576, %v2577
        %v2633 = vsel %vm1321, %v2575, %v2576
        %v2634 = vsel %vm1321, %v2574, %v2575
        %v2635 = vsel %vm1321, %v2573, %v2574
        %v2636 = vsel %vm1321, %v2604, %v2573
        %v2637 = vsel %vm1386, %v2635, -inf
        %v2638 = vsel %vm1387, %v2634, -inf
        %v2639 = vsel %vm1388, %v2633, -inf
        %v2640 = vsel %vm1389, %v2632, -inf
        %v2641 = vsel %vm1390, %v2631, -inf
        %v2642 = vsel %vm1391, %v2630, -inf
        %v2643 = vsel %vm1392, %v2629, -inf
        %v2644 = vsel %vm1393, %v2628, -inf
        %v2645 = vsel %vm1394, %v2627, -inf
        %v2646 = vsel %vm1395, %v2626, -inf
        %v2647 = vsel %vm1396, %v2625, -inf
        %v2648 = vsel %vm1397, %v2624, -inf
        %v2649 = vsel %vm1398, %v2623, -inf
        %v2650 = vsel %vm1399, %v2622, -inf
        %v2651 = vsel %vm1400, %v2621, -inf
        %v2652 = vsel %vm1401, %v2620, -inf
        %v2653 = vsel %vm1402, %v2619, -inf
        %v2654 = vsel %vm1403, %v2618, -inf
        %v2655 = vsel %vm1404, %v2617, -inf
        %v2656 = vsel %vm1405, %v2616, -inf
        %v2657 = vsel %vm1406, %v2615, -inf
        %v2658 = vsel %vm1407, %v2614, -inf
        %v2659 = vsel %vm1408, %v2613, -inf
        %v2660 = vsel %vm1409, %v2612, -inf
        %v2661 = vsel %vm1410, %v2611, -inf
        %v2662 = vsel %vm1411, %v2610, -inf
        %v2663 = vsel %vm1412, %v2609, -inf
        %v2664 = vsel %vm1413, %v2608, -inf
        %v2665 = vsel %vm1414, %v2607, -inf
        %v2666 = vsel %vm1415, %v2606, -inf
        %v2667 = vsel %vm1416, %v2605, -inf
        %v2668 = vsel %vm1417, %v2636, -inf
        %v2669 = vmax.f32 %v2541, %v2637
        %v2670 = vmax.f32 %v2542, %v2638
        %v2671 = vmax.f32 %v2543, %v2639
        %v2672 = vmax.f32 %v2544, %v2640
        %v2673 = vmax.f32 %v2545, %v2641
        %v2674 = vmax.f32 %v2546, %v2642
        %v2675 = vmax.f32 %v2547, %v2643
        %v2676 = vmax.f32 %v2548, %v2644
        %v2677 = vmax.f32 %v2549, %v2645
        %v2678 = vmax.f32 %v2550, %v2646
        %v2679 = vmax.f32 %v2551, %v2647
        %v2680 = vmax.f32 %v2552, %v2648
        %v2681 = vmax.f32 %v2553, %v2649
        %v2682 = vmax.f32 %v2554, %v2650
        %v2683 = vmax.f32 %v2555, %v2651
        %v2684 = vmax.f32 %v2556, %v2652
        %v2685 = vmax.f32 %v2557, %v2653
        %v2686 = vmax.f32 %v2558, %v2654
        %v2687 = vmax.f32 %v2559, %v2655
        %v2688 = vmax.f32 %v2560, %v2656
        %v2689 = vmax.f32 %v2561, %v2657
        %v2690 = vmax.f32 %v2562, %v2658
        %v2691 = vmax.f32 %v2563, %v2659
        %v2692 = vmax.f32 %v2564, %v2660
        %v2693 = vmax.f32 %v2565, %v2661
        %v2694 = vmax.f32 %v2566, %v2662
        %v2695 = vmax.f32 %v2567, %v2663
        %v2696 = vmax.f32 %v2568, %v2664
        %v2697 = vmax.f32 %v2569, %v2665
        %v2698 = vmax.f32 %v2570, %v2666
        %v2699 = vmax.f32 %v2571, %v2667
        %v2700 = vmax.f32 %v2572, %v2668
        %v2701 = vrot.slane %v2541, 7
        %v2702 = vrot.slane %v2542, 7
        %v2703 = vrot.slane %v2543, 7
        %v2704 = vrot.slane %v2544, 7
        %v2705 = vrot.slane %v2545, 7
        %v2706 = vrot.slane %v2546, 7
        %v2707 = vrot.slane %v2547, 7
        %v2708 = vrot.slane %v2548, 7
        %v2709 = vrot.slane %v2549, 7
        %v2710 = vrot.slane %v2550, 7
        %v2711 = vrot.slane %v2551, 7
        %v2712 = vrot.slane %v2552, 7
        %v2713 = vrot.slane %v2553, 7
        %v2714 = vrot.slane %v2554, 7
        %v2715 = vrot.slane %v2555, 7
        %v2716 = vrot.slane %v2556, 7
        %v2717 = vrot.slane %v2557, 7
        %v2718 = vrot.slane %v2558, 7
        %v2719 = vrot.slane %v2559, 7
        %v2720 = vrot.slane %v2560, 7
        %v2721 = vrot.slane %v2561, 7
        %v2722 = vrot.slane %v2562, 7
        %v2723 = vrot.slane %v2563, 7
        %v2724 = vrot.slane %v2564, 7
        %v2725 = vrot.slane %v2565, 7
        %v2726 = vrot.slane %v2566, 7
        %v2727 = vrot.slane %v2567, 7
        %v2728 = vrot.slane %v2568, 7
        %v2729 = vrot.slane %v2569, 7
        %v2730 = vrot.slane %v2570, 7
        %v2731 = vrot.slane %v2571, 7
        %v2732 = vrot.slane %v2572, 7
        %v2733 = vsel %vm1514, %v2731, %v2732
        %v2734 = vsel %vm1514, %v2730, %v2731
        %v2735 = vsel %vm1514, %v2729, %v2730
        %v2736 = vsel %vm1514, %v2728, %v2729
        %v2737 = vsel %vm1514, %v2727, %v2728
        %v2738 = vsel %vm1514, %v2726, %v2727
        %v2739 = vsel %vm1514, %v2725, %v2726
        %v2740 = vsel %vm1514, %v2724, %v2725
        %v2741 = vsel %vm1514, %v2723, %v2724
        %v2742 = vsel %vm1514, %v2722, %v2723
        %v2743 = vsel %vm1514, %v2721, %v2722
        %v2744 = vsel %vm1514, %v2720, %v2721
        %v2745 = vsel %vm1514, %v2719, %v2720
        %v2746 = vsel %vm1514, %v2718, %v2719
        %v2747 = vsel %vm1514, %v2717, %v2718
        %v2748 = vsel %vm1514, %v2716, %v2717
        %v2749 = vsel %vm1514, %v2715, %v2716
        %v2750 = vsel %vm1514, %v2714, %v2715
        %v2751 = vsel %vm1514, %v2713, %v2714
        %v2752 = vsel %vm1514, %v2712, %v2713
        %v2753 = vsel %vm1514, %v2711, %v2712
        %v2754 = vsel %vm1514, %v2710, %v2711
        %v2755 = vsel %vm1514, %v2709, %v2710
        %v2756 = vsel %vm1514, %v2708, %v2709
        %v2757 = vsel %vm1514, %v2707, %v2708
        %v2758 = vsel %vm1514, %v2706, %v2707
        %v2759 = vsel %vm1514, %v2705, %v2706
        %v2760 = vsel %vm1514, %v2704, %v2705
        %v2761 = vsel %vm1514, %v2703, %v2704
        %v2762 = vsel %vm1514, %v2702, %v2703
        %v2763 = vsel %vm1514, %v2701, %v2702
        %v2764 = vsel %vm1514, %v2732, %v2701
        %v2765 = vsel %vm1579, %v2764, -inf
        %v2766 = vsel %vm1580, %v2763, -inf
        %v2767 = vsel %vm1581, %v2762, -inf
        %v2768 = vsel %vm1582, %v2761, -inf
        %v2769 = vsel %vm1583, %v2760, -inf
        %v2770 = vsel %vm1584, %v2759, -inf
        %v2771 = vsel %vm1585, %v2758, -inf
        %v2772 = vsel %vm1586, %v2757, -inf
        %v2773 = vsel %vm1587, %v2756, -inf
        %v2774 = vsel %vm1588, %v2755, -inf
        %v2775 = vsel %vm1589, %v2754, -inf
        %v2776 = vsel %vm1590, %v2753, -inf
        %v2777 = vsel %vm1591, %v2752, -inf
        %v2778 = vsel %vm1592, %v2751, -inf
        %v2779 = vsel %vm1593, %v2750, -inf
        %v2780 = vsel %vm1594, %v2749, -inf
        %v2781 = vsel %vm1595, %v2748, -inf
        %v2782 = vsel %vm1596, %v2747, -inf
        %v2783 = vsel %vm1597, %v2746, -inf
        %v2784 = vsel %vm1598, %v2745, -inf
        %v2785 = vsel %vm1599, %v2744, -inf
        %v2786 = vsel %vm1600, %v2743, -inf
        %v2787 = vsel %vm1601, %v2742, -inf
        %v2788 = vsel %vm1602, %v2741, -inf
        %v2789 = vsel %vm1603, %v2740, -inf
        %v2790 = vsel %vm1604, %v2739, -inf
        %v2791 = vsel %vm1605, %v2738, -inf
        %v2792 = vsel %vm1606, %v2737, -inf
        %v2793 = vsel %vm1607, %v2736, -inf
        %v2794 = vsel %vm1608, %v2735, -inf
        %v2795 = vsel %vm1609, %v2734, -inf
        %v2796 = vsel %vm1610, %v2733, -inf
        %v2797 = vmax.f32 %v2669, %v2765
        %v2798 = vmax.f32 %v2670, %v2766
        %v2799 = vmax.f32 %v2671, %v2767
        %v2800 = vmax.f32 %v2672, %v2768
        %v2801 = vmax.f32 %v2673, %v2769
        %v2802 = vmax.f32 %v2674, %v2770
        %v2803 = vmax.f32 %v2675, %v2771
        %v2804 = vmax.f32 %v2676, %v2772
        %v2805 = vmax.f32 %v2677, %v2773
        %v2806 = vmax.f32 %v2678, %v2774
        %v2807 = vmax.f32 %v2679, %v2775
        %v2808 = vmax.f32 %v2680, %v2776
        %v2809 = vmax.f32 %v2681, %v2777
        %v2810 = vmax.f32 %v2682, %v2778
        %v2811 = vmax.f32 %v2683, %v2779
        %v2812 = vmax.f32 %v2684, %v2780
        %v2813 = vmax.f32 %v2685, %v2781
        %v2814 = vmax.f32 %v2686, %v2782
        %v2815 = vmax.f32 %v2687, %v2783
        %v2816 = vmax.f32 %v2688, %v2784
        %v2817 = vmax.f32 %v2689, %v2785
        %v2818 = vmax.f32 %v2690, %v2786
        %v2819 = vmax.f32 %v2691, %v2787
        %v2820 = vmax.f32 %v2692, %v2788
        %v2821 = vmax.f32 %v2693, %v2789
        %v2822 = vmax.f32 %v2694, %v2790
        %v2823 = vmax.f32 %v2695, %v2791
        %v2824 = vmax.f32 %v2696, %v2792
        %v2825 = vmax.f32 %v2697, %v2793
        %v2826 = vmax.f32 %v2698, %v2794
        %v2827 = vmax.f32 %v2699, %v2795
        %v2828 = vmax.f32 %v2700, %v2796
        %v2829 = vrot.slane %v2541, 2
        %v2830 = vrot.slane %v2542, 2
        %v2831 = vrot.slane %v2543, 2
        %v2832 = vrot.slane %v2544, 2
        %v2833 = vrot.slane %v2545, 2
        %v2834 = vrot.slane %v2546, 2
        %v2835 = vrot.slane %v2547, 2
        %v2836 = vrot.slane %v2548, 2
        %v2837 = vrot.slane %v2549, 2
        %v2838 = vrot.slane %v2550, 2
        %v2839 = vrot.slane %v2551, 2
        %v2840 = vrot.slane %v2552, 2
        %v2841 = vrot.slane %v2553, 2
        %v2842 = vrot.slane %v2554, 2
        %v2843 = vrot.slane %v2555, 2
        %v2844 = vrot.slane %v2556, 2
        %v2845 = vrot.slane %v2557, 2
        %v2846 = vrot.slane %v2558, 2
        %v2847 = vrot.slane %v2559, 2
        %v2848 = vrot.slane %v2560, 2
        %v2849 = vrot.slane %v2561, 2
        %v2850 = vrot.slane %v2562, 2
        %v2851 = vrot.slane %v2563, 2
        %v2852 = vrot.slane %v2564, 2
        %v2853 = vrot.slane %v2565, 2
        %v2854 = vrot.slane %v2566, 2
        %v2855 = vrot.slane %v2567, 2
        %v2856 = vrot.slane %v2568, 2
        %v2857 = vrot.slane %v2569, 2
        %v2858 = vrot.slane %v2570, 2
        %v2859 = vrot.slane %v2571, 2
        %v2860 = vrot.slane %v2572, 2
        %v2861 = vsel %vm1707, %v2859, %v2860
        %v2862 = vsel %vm1707, %v2858, %v2859
        %v2863 = vsel %vm1707, %v2857, %v2858
        %v2864 = vsel %vm1707, %v2856, %v2857
        %v2865 = vsel %vm1707, %v2855, %v2856
        %v2866 = vsel %vm1707, %v2854, %v2855
        %v2867 = vsel %vm1707, %v2853, %v2854
        %v2868 = vsel %vm1707, %v2852, %v2853
        %v2869 = vsel %vm1707, %v2851, %v2852
        %v2870 = vsel %vm1707, %v2850, %v2851
        %v2871 = vsel %vm1707, %v2849, %v2850
        %v2872 = vsel %vm1707, %v2848, %v2849
        %v2873 = vsel %vm1707, %v2847, %v2848
        %v2874 = vsel %vm1707, %v2846, %v2847
        %v2875 = vsel %vm1707, %v2845, %v2846
        %v2876 = vsel %vm1707, %v2844, %v2845
        %v2877 = vsel %vm1707, %v2843, %v2844
        %v2878 = vsel %vm1707, %v2842, %v2843
        %v2879 = vsel %vm1707, %v2841, %v2842
        %v2880 = vsel %vm1707, %v2840, %v2841
        %v2881 = vsel %vm1707, %v2839, %v2840
        %v2882 = vsel %vm1707, %v2838, %v2839
        %v2883 = vsel %vm1707, %v2837, %v2838
        %v2884 = vsel %vm1707, %v2836, %v2837
        %v2885 = vsel %vm1707, %v2835, %v2836
        %v2886 = vsel %vm1707, %v2834, %v2835
        %v2887 = vsel %vm1707, %v2833, %v2834
        %v2888 = vsel %vm1707, %v2832, %v2833
        %v2889 = vsel %vm1707, %v2831, %v2832
        %v2890 = vsel %vm1707, %v2830, %v2831
        %v2891 = vsel %vm1707, %v2829, %v2830
        %v2892 = vsel %vm1707, %v2860, %v2829
        %v2893 = vsel %vm1772, %v2891, -inf
        %v2894 = vsel %vm1773, %v2890, -inf
        %v2895 = vsel %vm1774, %v2889, -inf
        %v2896 = vsel %vm1775, %v2888, -inf
        %v2897 = vsel %vm1776, %v2887, -inf
        %v2898 = vsel %vm1777, %v2886, -inf
        %v2899 = vsel %vm1778, %v2885, -inf
        %v2900 = vsel %vm1779, %v2884, -inf
        %v2901 = vsel %vm1780, %v2883, -inf
        %v2902 = vsel %vm1781, %v2882, -inf
        %v2903 = vsel %vm1782, %v2881, -inf
        %v2904 = vsel %vm1783, %v2880, -inf
        %v2905 = vsel %vm1784, %v2879, -inf
        %v2906 = vsel %vm1785, %v2878, -inf
        %v2907 = vsel %vm1786, %v2877, -inf
        %v2908 = vsel %vm1787, %v2876, -inf
        %v2909 = vsel %vm1788, %v2875, -inf
        %v2910 = vsel %vm1789, %v2874, -inf
        %v2911 = vsel %vm1790, %v2873, -inf
        %v2912 = vsel %vm1791, %v2872, -inf
        %v2913 = vsel %vm1792, %v2871, -inf
        %v2914 = vsel %vm1793, %v2870, -inf
        %v2915 = vsel %vm1794, %v2869, -inf
        %v2916 = vsel %vm1795, %v2868, -inf
        %v2917 = vsel %vm1796, %v2867, -inf
        %v2918 = vsel %vm1797, %v2866, -inf
        %v2919 = vsel %vm1798, %v2865, -inf
        %v2920 = vsel %vm1799, %v2864, -inf
        %v2921 = vsel %vm1800, %v2863, -inf
        %v2922 = vsel %vm1801, %v2862, -inf
        %v2923 = vsel %vm1802, %v2861, -inf
        %v2924 = vsel %vm1803, %v2892, -inf
        %v2925 = vmax.f32 %v2797, %v2893
        %v2926 = vmax.f32 %v2798, %v2894
        %v2927 = vmax.f32 %v2799, %v2895
        %v2928 = vmax.f32 %v2800, %v2896
        %v2929 = vmax.f32 %v2801, %v2897
        %v2930 = vmax.f32 %v2802, %v2898
        %v2931 = vmax.f32 %v2803, %v2899
        %v2932 = vmax.f32 %v2804, %v2900
        %v2933 = vmax.f32 %v2805, %v2901
        %v2934 = vmax.f32 %v2806, %v2902
        %v2935 = vmax.f32 %v2807, %v2903
        %v2936 = vmax.f32 %v2808, %v2904
        %v2937 = vmax.f32 %v2809, %v2905
        %v2938 = vmax.f32 %v2810, %v2906
        %v2939 = vmax.f32 %v2811, %v2907
        %v2940 = vmax.f32 %v2812, %v2908
        %v2941 = vmax.f32 %v2813, %v2909
        %v2942 = vmax.f32 %v2814, %v2910
        %v2943 = vmax.f32 %v2815, %v2911
        %v2944 = vmax.f32 %v2816, %v2912
        %v2945 = vmax.f32 %v2817, %v2913
        %v2946 = vmax.f32 %v2818, %v2914
        %v2947 = vmax.f32 %v2819, %v2915
        %v2948 = vmax.f32 %v2820, %v2916
        %v2949 = vmax.f32 %v2821, %v2917
        %v2950 = vmax.f32 %v2822, %v2918
        %v2951 = vmax.f32 %v2823, %v2919
        %v2952 = vmax.f32 %v2824, %v2920
        %v2953 = vmax.f32 %v2825, %v2921
        %v2954 = vmax.f32 %v2826, %v2922
        %v2955 = vmax.f32 %v2827, %v2923
        %v2956 = vmax.f32 %v2828, %v2924
        %v2957 = vrot.slane %v2541, 6
        %v2958 = vrot.slane %v2542, 6
        %v2959 = vrot.slane %v2543, 6
        %v2960 = vrot.slane %v2544, 6
        %v2961 = vrot.slane %v2545, 6
        %v2962 = vrot.slane %v2546, 6
        %v2963 = vrot.slane %v2547, 6
        %v2964 = vrot.slane %v2548, 6
        %v2965 = vrot.slane %v2549, 6
        %v2966 = vrot.slane %v2550, 6
        %v2967 = vrot.slane %v2551, 6
        %v2968 = vrot.slane %v2552, 6
        %v2969 = vrot.slane %v2553, 6
        %v2970 = vrot.slane %v2554, 6
        %v2971 = vrot.slane %v2555, 6
        %v2972 = vrot.slane %v2556, 6
        %v2973 = vrot.slane %v2557, 6
        %v2974 = vrot.slane %v2558, 6
        %v2975 = vrot.slane %v2559, 6
        %v2976 = vrot.slane %v2560, 6
        %v2977 = vrot.slane %v2561, 6
        %v2978 = vrot.slane %v2562, 6
        %v2979 = vrot.slane %v2563, 6
        %v2980 = vrot.slane %v2564, 6
        %v2981 = vrot.slane %v2565, 6
        %v2982 = vrot.slane %v2566, 6
        %v2983 = vrot.slane %v2567, 6
        %v2984 = vrot.slane %v2568, 6
        %v2985 = vrot.slane %v2569, 6
        %v2986 = vrot.slane %v2570, 6
        %v2987 = vrot.slane %v2571, 6
        %v2988 = vrot.slane %v2572, 6
        %v2989 = vsel %vm1900, %v2987, %v2988
        %v2990 = vsel %vm1900, %v2986, %v2987
        %v2991 = vsel %vm1900, %v2985, %v2986
        %v2992 = vsel %vm1900, %v2984, %v2985
        %v2993 = vsel %vm1900, %v2983, %v2984
        %v2994 = vsel %vm1900, %v2982, %v2983
        %v2995 = vsel %vm1900, %v2981, %v2982
        %v2996 = vsel %vm1900, %v2980, %v2981
        %v2997 = vsel %vm1900, %v2979, %v2980
        %v2998 = vsel %vm1900, %v2978, %v2979
        %v2999 = vsel %vm1900, %v2977, %v2978
        %v3000 = vsel %vm1900, %v2976, %v2977
        %v3001 = vsel %vm1900, %v2975, %v2976
        %v3002 = vsel %vm1900, %v2974, %v2975
        %v3003 = vsel %vm1900, %v2973, %v2974
        %v3004 = vsel %vm1900, %v2972, %v2973
        %v3005 = vsel %vm1900, %v2971, %v2972
        %v3006 = vsel %vm1900, %v2970, %v2971
        %v3007 = vsel %vm1900, %v2969, %v2970
        %v3008 = vsel %vm1900, %v2968, %v2969
        %v3009 = vsel %vm1900, %v2967, %v2968
        %v3010 = vsel %vm1900, %v2966, %v2967
        %v3011 = vsel %vm1900, %v2965, %v2966
        %v3012 = vsel %vm1900, %v2964, %v2965
        %v3013 = vsel %vm1900, %v2963, %v2964
        %v3014 = vsel %vm1900, %v2962, %v2963
        %v3015 = vsel %vm1900, %v2961, %v2962
        %v3016 = vsel %vm1900, %v2960, %v2961
        %v3017 = vsel %vm1900, %v2959, %v2960
        %v3018 = vsel %vm1900, %v2958, %v2959
        %v3019 = vsel %vm1900, %v2957, %v2958
        %v3020 = vsel %vm1900, %v2988, %v2957
        %v3021 = vsel %vm1965, %v3020, -inf
        %v3022 = vsel %vm1966, %v3019, -inf
        %v3023 = vsel %vm1967, %v3018, -inf
        %v3024 = vsel %vm1968, %v3017, -inf
        %v3025 = vsel %vm1969, %v3016, -inf
        %v3026 = vsel %vm1970, %v3015, -inf
        %v3027 = vsel %vm1971, %v3014, -inf
        %v3028 = vsel %vm1972, %v3013, -inf
        %v3029 = vsel %vm1973, %v3012, -inf
        %v3030 = vsel %vm1974, %v3011, -inf
        %v3031 = vsel %vm1975, %v3010, -inf
        %v3032 = vsel %vm1976, %v3009, -inf
        %v3033 = vsel %vm1977, %v3008, -inf
        %v3034 = vsel %vm1978, %v3007, -inf
        %v3035 = vsel %vm1979, %v3006, -inf
        %v3036 = vsel %vm1980, %v3005, -inf
        %v3037 = vsel %vm1981, %v3004, -inf
        %v3038 = vsel %vm1982, %v3003, -inf
        %v3039 = vsel %vm1983, %v3002, -inf
        %v3040 = vsel %vm1984, %v3001, -inf
        %v3041 = vsel %vm1985, %v3000, -inf
        %v3042 = vsel %vm1986, %v2999, -inf
        %v3043 = vsel %vm1987, %v2998, -inf
        %v3044 = vsel %vm1988, %v2997, -inf
        %v3045 = vsel %vm1989, %v2996, -inf
        %v3046 = vsel %vm1990, %v2995, -inf
        %v3047 = vsel %vm1991, %v2994, -inf
        %v3048 = vsel %vm1992, %v2993, -inf
        %v3049 = vsel %vm1993, %v2992, -inf
        %v3050 = vsel %vm1994, %v2991, -inf
        %v3051 = vsel %vm1995, %v2990, -inf
        %v3052 = vsel %vm1996, %v2989, -inf
        %v3053 = vmax.f32 %v2925, %v3021
        %v3054 = vmax.f32 %v2926, %v3022
        %v3055 = vmax.f32 %v2927, %v3023
        %v3056 = vmax.f32 %v2928, %v3024
        %v3057 = vmax.f32 %v2929, %v3025
        %v3058 = vmax.f32 %v2930, %v3026
        %v3059 = vmax.f32 %v2931, %v3027
        %v3060 = vmax.f32 %v2932, %v3028
        %v3061 = vmax.f32 %v2933, %v3029
        %v3062 = vmax.f32 %v2934, %v3030
        %v3063 = vmax.f32 %v2935, %v3031
        %v3064 = vmax.f32 %v2936, %v3032
        %v3065 = vmax.f32 %v2937, %v3033
        %v3066 = vmax.f32 %v2938, %v3034
        %v3067 = vmax.f32 %v2939, %v3035
        %v3068 = vmax.f32 %v2940, %v3036
        %v3069 = vmax.f32 %v2941, %v3037
        %v3070 = vmax.f32 %v2942, %v3038
        %v3071 = vmax.f32 %v2943, %v3039
        %v3072 = vmax.f32 %v2944, %v3040
        %v3073 = vmax.f32 %v2945, %v3041
        %v3074 = vmax.f32 %v2946, %v3042
        %v3075 = vmax.f32 %v2947, %v3043
        %v3076 = vmax.f32 %v2948, %v3044
        %v3077 = vmax.f32 %v2949, %v3045
        %v3078 = vmax.f32 %v2950, %v3046
        %v3079 = vmax.f32 %v2951, %v3047
        %v3080 = vmax.f32 %v2952, %v3048
        %v3081 = vmax.f32 %v2953, %v3049
        %v3082 = vmax.f32 %v2954, %v3050
        %v3083 = vmax.f32 %v2955, %v3051
        %v3084 = vmax.f32 %v2956, %v3052
        %v3085 = vsel %vm2093, %v3055, -inf
        %v3086 = vsel %vm2094, %v3056, -inf
        %v3087 = vsel %vm2095, %v3057, -inf
        %v3088 = vsel %vm2096, %v3058, -inf
        %v3089 = vsel %vm2097, %v3059, -inf
        %v3090 = vsel %vm2098, %v3060, -inf
        %v3091 = vsel %vm2099, %v3061, -inf
        %v3092 = vsel %vm2100, %v3062, -inf
        %v3093 = vsel %vm2101, %v3063, -inf
        %v3094 = vsel %vm2102, %v3064, -inf
        %v3095 = vsel %vm2103, %v3065, -inf
        %v3096 = vsel %vm2104, %v3066, -inf
        %v3097 = vsel %vm2105, %v3067, -inf
        %v3098 = vsel %vm2106, %v3068, -inf
        %v3099 = vsel %vm2107, %v3069, -inf
        %v3100 = vsel %vm2108, %v3070, -inf
        %v3101 = vsel %vm2109, %v3071, -inf
        %v3102 = vsel %vm2110, %v3072, -inf
        %v3103 = vsel %vm2111, %v3073, -inf
        %v3104 = vsel %vm2112, %v3074, -inf
        %v3105 = vsel %vm2113, %v3075, -inf
        %v3106 = vsel %vm2114, %v3076, -inf
        %v3107 = vsel %vm2115, %v3077, -inf
        %v3108 = vsel %vm2116, %v3078, -inf
        %v3109 = vsel %vm2117, %v3079, -inf
        %v3110 = vsel %vm2118, %v3080, -inf
        %v3111 = vsel %vm2119, %v3081, -inf
        %v3112 = vsel %vm2120, %v3082, -inf
        %v3113 = vsel %vm2121, %v3083, -inf
        %v3114 = vsel %vm2122, %v3084, -inf
        %v3115 = vsel %vm2123, %v3053, -inf
        %v3116 = vsel %vm2124, %v3054, -inf
        %v3117 = vmax.f32 %v3053, %v3085
        %v3118 = vmax.f32 %v3054, %v3086
        %v3119 = vmax.f32 %v3055, %v3087
        %v3120 = vmax.f32 %v3056, %v3088
        %v3121 = vmax.f32 %v3057, %v3089
        %v3122 = vmax.f32 %v3058, %v3090
        %v3123 = vmax.f32 %v3059, %v3091
        %v3124 = vmax.f32 %v3060, %v3092
        %v3125 = vmax.f32 %v3061, %v3093
        %v3126 = vmax.f32 %v3062, %v3094
        %v3127 = vmax.f32 %v3063, %v3095
        %v3128 = vmax.f32 %v3064, %v3096
        %v3129 = vmax.f32 %v3065, %v3097
        %v3130 = vmax.f32 %v3066, %v3098
        %v3131 = vmax.f32 %v3067, %v3099
        %v3132 = vmax.f32 %v3068, %v3100
        %v3133 = vmax.f32 %v3069, %v3101
        %v3134 = vmax.f32 %v3070, %v3102
        %v3135 = vmax.f32 %v3071, %v3103
        %v3136 = vmax.f32 %v3072, %v3104
        %v3137 = vmax.f32 %v3073, %v3105
        %v3138 = vmax.f32 %v3074, %v3106
        %v3139 = vmax.f32 %v3075, %v3107
        %v3140 = vmax.f32 %v3076, %v3108
        %v3141 = vmax.f32 %v3077, %v3109
        %v3142 = vmax.f32 %v3078, %v3110
        %v3143 = vmax.f32 %v3079, %v3111
        %v3144 = vmax.f32 %v3080, %v3112
        %v3145 = vmax.f32 %v3081, %v3113
        %v3146 = vmax.f32 %v3082, %v3114
        %v3147 = vmax.f32 %v3083, %v3115
        %v3148 = vmax.f32 %v3084, %v3116
        %v3149 = vsel %vm2221, %v3083, -inf
        %v3150 = vsel %vm2222, %v3084, -inf
        %v3151 = vsel %vm2223, %v3053, -inf
        %v3152 = vsel %vm2224, %v3054, -inf
        %v3153 = vsel %vm2225, %v3055, -inf
        %v3154 = vsel %vm2226, %v3056, -inf
        %v3155 = vsel %vm2227, %v3057, -inf
        %v3156 = vsel %vm2228, %v3058, -inf
        %v3157 = vsel %vm2229, %v3059, -inf
        %v3158 = vsel %vm2230, %v3060, -inf
        %v3159 = vsel %vm2231, %v3061, -inf
        %v3160 = vsel %vm2232, %v3062, -inf
        %v3161 = vsel %vm2233, %v3063, -inf
        %v3162 = vsel %vm2234, %v3064, -inf
        %v3163 = vsel %vm2235, %v3065, -inf
        %v3164 = vsel %vm2236, %v3066, -inf
        %v3165 = vsel %vm2237, %v3067, -inf
        %v3166 = vsel %vm2238, %v3068, -inf
        %v3167 = vsel %vm2239, %v3069, -inf
        %v3168 = vsel %vm2240, %v3070, -inf
        %v3169 = vsel %vm2241, %v3071, -inf
        %v3170 = vsel %vm2242, %v3072, -inf
        %v3171 = vsel %vm2243, %v3073, -inf
        %v3172 = vsel %vm2244, %v3074, -inf
        %v3173 = vsel %vm2245, %v3075, -inf
        %v3174 = vsel %vm2246, %v3076, -inf
        %v3175 = vsel %vm2247, %v3077, -inf
        %v3176 = vsel %vm2248, %v3078, -inf
        %v3177 = vsel %vm2249, %v3079, -inf
        %v3178 = vsel %vm2250, %v3080, -inf
        %v3179 = vsel %vm2251, %v3081, -inf
        %v3180 = vsel %vm2252, %v3082, -inf
        %v3181 = vmax.f32 %v3117, %v3149
        %v3182 = vmax.f32 %v3118, %v3150
        %v3183 = vmax.f32 %v3119, %v3151
        %v3184 = vmax.f32 %v3120, %v3152
        %v3185 = vmax.f32 %v3121, %v3153
        %v3186 = vmax.f32 %v3122, %v3154
        %v3187 = vmax.f32 %v3123, %v3155
        %v3188 = vmax.f32 %v3124, %v3156
        %v3189 = vmax.f32 %v3125, %v3157
        %v3190 = vmax.f32 %v3126, %v3158
        %v3191 = vmax.f32 %v3127, %v3159
        %v3192 = vmax.f32 %v3128, %v3160
        %v3193 = vmax.f32 %v3129, %v3161
        %v3194 = vmax.f32 %v3130, %v3162
        %v3195 = vmax.f32 %v3131, %v3163
        %v3196 = vmax.f32 %v3132, %v3164
        %v3197 = vmax.f32 %v3133, %v3165
        %v3198 = vmax.f32 %v3134, %v3166
        %v3199 = vmax.f32 %v3135, %v3167
        %v3200 = vmax.f32 %v3136, %v3168
        %v3201 = vmax.f32 %v3137, %v3169
        %v3202 = vmax.f32 %v3138, %v3170
        %v3203 = vmax.f32 %v3139, %v3171
        %v3204 = vmax.f32 %v3140, %v3172
        %v3205 = vmax.f32 %v3141, %v3173
        %v3206 = vmax.f32 %v3142, %v3174
        %v3207 = vmax.f32 %v3143, %v3175
        %v3208 = vmax.f32 %v3144, %v3176
        %v3209 = vmax.f32 %v3145, %v3177
        %v3210 = vmax.f32 %v3146, %v3178
        %v3211 = vmax.f32 %v3147, %v3179
        %v3212 = vmax.f32 %v3148, %v3180
        %v3213 = vsel %vm2349, %v3057, -inf
        %v3214 = vsel %vm2350, %v3058, -inf
        %v3215 = vsel %vm2351, %v3059, -inf
        %v3216 = vsel %vm2352, %v3060, -inf
        %v3217 = vsel %vm2353, %v3061, -inf
        %v3218 = vsel %vm2354, %v3062, -inf
        %v3219 = vsel %vm2355, %v3063, -inf
        %v3220 = vsel %vm2356, %v3064, -inf
        %v3221 = vsel %vm2357, %v3065, -inf
        %v3222 = vsel %vm2358, %v3066, -inf
        %v3223 = vsel %vm2359, %v3067, -inf
        %v3224 = vsel %vm2360, %v3068, -inf
        %v3225 = vsel %vm2361, %v3069, -inf
        %v3226 = vsel %vm2362, %v3070, -inf
        %v3227 = vsel %vm2363, %v3071, -inf
        %v3228 = vsel %vm2364, %v3072, -inf
        %v3229 = vsel %vm2365, %v3073, -inf
        %v3230 = vsel %vm2366, %v3074, -inf
        %v3231 = vsel %vm2367, %v3075, -inf
        %v3232 = vsel %vm2368, %v3076, -inf
        %v3233 = vsel %vm2369, %v3077, -inf
        %v3234 = vsel %vm2370, %v3078, -inf
        %v3235 = vsel %vm2371, %v3079, -inf
        %v3236 = vsel %vm2372, %v3080, -inf
        %v3237 = vsel %vm2373, %v3081, -inf
        %v3238 = vsel %vm2374, %v3082, -inf
        %v3239 = vsel %vm2375, %v3083, -inf
        %v3240 = vsel %vm2376, %v3084, -inf
        %v3241 = vsel %vm2377, %v3053, -inf
        %v3242 = vsel %vm2378, %v3054, -inf
        %v3243 = vsel %vm2379, %v3055, -inf
        %v3244 = vsel %vm2380, %v3056, -inf
        %v3245 = vmax.f32 %v3181, %v3213
        %v3246 = vmax.f32 %v3182, %v3214
        %v3247 = vmax.f32 %v3183, %v3215
        %v3248 = vmax.f32 %v3184, %v3216
        %v3249 = vmax.f32 %v3185, %v3217
        %v3250 = vmax.f32 %v3186, %v3218
        %v3251 = vmax.f32 %v3187, %v3219
        %v3252 = vmax.f32 %v3188, %v3220
        %v3253 = vmax.f32 %v3189, %v3221
        %v3254 = vmax.f32 %v3190, %v3222
        %v3255 = vmax.f32 %v3191, %v3223
        %v3256 = vmax.f32 %v3192, %v3224
        %v3257 = vmax.f32 %v3193, %v3225
        %v3258 = vmax.f32 %v3194, %v3226
        %v3259 = vmax.f32 %v3195, %v3227
        %v3260 = vmax.f32 %v3196, %v3228
        %v3261 = vmax.f32 %v3197, %v3229
        %v3262 = vmax.f32 %v3198, %v3230
        %v3263 = vmax.f32 %v3199, %v3231
        %v3264 = vmax.f32 %v3200, %v3232
        %v3265 = vmax.f32 %v3201, %v3233
        %v3266 = vmax.f32 %v3202, %v3234
        %v3267 = vmax.f32 %v3203, %v3235
        %v3268 = vmax.f32 %v3204, %v3236
        %v3269 = vmax.f32 %v3205, %v3237
        %v3270 = vmax.f32 %v3206, %v3238
        %v3271 = vmax.f32 %v3207, %v3239
        %v3272 = vmax.f32 %v3208, %v3240
        %v3273 = vmax.f32 %v3209, %v3241
        %v3274 = vmax.f32 %v3210, %v3242
        %v3275 = vmax.f32 %v3211, %v3243
        %v3276 = vmax.f32 %v3212, %v3244
        %v3277 = vsel %vm2477, %v3081, -inf
        %v3278 = vsel %vm2478, %v3082, -inf
        %v3279 = vsel %vm2479, %v3083, -inf
        %v3280 = vsel %vm2480, %v3084, -inf
        %v3281 = vsel %vm2481, %v3053, -inf
        %v3282 = vsel %vm2482, %v3054, -inf
        %v3283 = vsel %vm2483, %v3055, -inf
        %v3284 = vsel %vm2484, %v3056, -inf
        %v3285 = vsel %vm2485, %v3057, -inf
        %v3286 = vsel %vm2486, %v3058, -inf
        %v3287 = vsel %vm2487, %v3059, -inf
        %v3288 = vsel %vm2488, %v3060, -inf
        %v3289 = vsel %vm2489, %v3061, -inf
        %v3290 = vsel %vm2490, %v3062, -inf
        %v3291 = vsel %vm2491, %v3063, -inf
        %v3292 = vsel %vm2492, %v3064, -inf
        %v3293 = vsel %vm2493, %v3065, -inf
        %v3294 = vsel %vm2494, %v3066, -inf
        %v3295 = vsel %vm2495, %v3067, -inf
        %v3296 = vsel %vm2496, %v3068, -inf
        %v3297 = vsel %vm2497, %v3069, -inf
        %v3298 = vsel %vm2498, %v3070, -inf
        %v3299 = vsel %vm2499, %v3071, -inf
        %v3300 = vsel %vm2500, %v3072, -inf
        %v3301 = vsel %vm2501, %v3073, -inf
        %v3302 = vsel %vm2502, %v3074, -inf
        %v3303 = vsel %vm2503, %v3075, -inf
        %v3304 = vsel %vm2504, %v3076, -inf
        %v3305 = vsel %vm2505, %v3077, -inf
        %v3306 = vsel %vm2506, %v3078, -inf
        %v3307 = vsel %vm2507, %v3079, -inf
        %v3308 = vsel %vm2508, %v3080, -inf
        %v3309 = vmax.f32 %v3245, %v3277
        %v3310 = vmax.f32 %v3246, %v3278
        %v3311 = vmax.f32 %v3247, %v3279
        %v3312 = vmax.f32 %v3248, %v3280
        %v3313 = vmax.f32 %v3249, %v3281
        %v3314 = vmax.f32 %v3250, %v3282
        %v3315 = vmax.f32 %v3251, %v3283
        %v3316 = vmax.f32 %v3252, %v3284
        %v3317 = vmax.f32 %v3253, %v3285
        %v3318 = vmax.f32 %v3254, %v3286
        %v3319 = vmax.f32 %v3255, %v3287
        %v3320 = vmax.f32 %v3256, %v3288
        %v3321 = vmax.f32 %v3257, %v3289
        %v3322 = vmax.f32 %v3258, %v3290
        %v3323 = vmax.f32 %v3259, %v3291
        %v3324 = vmax.f32 %v3260, %v3292
        %v3325 = vmax.f32 %v3261, %v3293
        %v3326 = vmax.f32 %v3262, %v3294
        %v3327 = vmax.f32 %v3263, %v3295
        %v3328 = vmax.f32 %v3264, %v3296
        %v3329 = vmax.f32 %v3265, %v3297
        %v3330 = vmax.f32 %v3266, %v3298
        %v3331 = vmax.f32 %v3267, %v3299
        %v3332 = vmax.f32 %v3268, %v3300
        %v3333 = vmax.f32 %v3269, %v3301
        %v3334 = vmax.f32 %v3270, %v3302
        %v3335 = vmax.f32 %v3271, %v3303
        %v3336 = vmax.f32 %v3272, %v3304
        %v3337 = vmax.f32 %v3273, %v3305
        %v3338 = vmax.f32 %v3274, %v3306
        %v3339 = vmax.f32 %v3275, %v3307
        %v3340 = vmax.f32 %v3276, %v3308
        %v3341 = vrot.slane %v3309, 1
        %v3342 = vrot.slane %v3310, 1
        %v3343 = vrot.slane %v3311, 1
        %v3344 = vrot.slane %v3312, 1
        %v3345 = vrot.slane %v3313, 1
        %v3346 = vrot.slane %v3314, 1
        %v3347 = vrot.slane %v3315, 1
        %v3348 = vrot.slane %v3316, 1
        %v3349 = vrot.slane %v3317, 1
        %v3350 = vrot.slane %v3318, 1
        %v3351 = vrot.slane %v3319, 1
        %v3352 = vrot.slane %v3320, 1
        %v3353 = vrot.slane %v3321, 1
        %v3354 = vrot.slane %v3322, 1
        %v3355 = vrot.slane %v3323, 1
        %v3356 = vrot.slane %v3324, 1
        %v3357 = vrot.slane %v3325, 1
        %v3358 = vrot.slane %v3326, 1
        %v3359 = vrot.slane %v3327, 1
        %v3360 = vrot.slane %v3328, 1
        %v3361 = vrot.slane %v3329, 1
        %v3362 = vrot.slane %v3330, 1
        %v3363 = vrot.slane %v3331, 1
        %v3364 = vrot.slane %v3332, 1
        %v3365 = vrot.slane %v3333, 1
        %v3366 = vrot.slane %v3334, 1
        %v3367 = vrot.slane %v3335, 1
        %v3368 = vrot.slane %v3336, 1
        %v3369 = vrot.slane %v3337, 1
        %v3370 = vrot.slane %v3338, 1
        %v3371 = vrot.slane %v3339, 1
        %v3372 = vrot.slane %v3340, 1
        %v3373 = vsel %vm1321, %v3371, %v3372
        %v3374 = vsel %vm1321, %v3370, %v3371
        %v3375 = vsel %vm1321, %v3369, %v3370
        %v3376 = vsel %vm1321, %v3368, %v3369
        %v3377 = vsel %vm1321, %v3367, %v3368
        %v3378 = vsel %vm1321, %v3366, %v3367
        %v3379 = vsel %vm1321, %v3365, %v3366
        %v3380 = vsel %vm1321, %v3364, %v3365
        %v3381 = vsel %vm1321, %v3363, %v3364
        %v3382 = vsel %vm1321, %v3362, %v3363
        %v3383 = vsel %vm1321, %v3361, %v3362
        %v3384 = vsel %vm1321, %v3360, %v3361
        %v3385 = vsel %vm1321, %v3359, %v3360
        %v3386 = vsel %vm1321, %v3358, %v3359
        %v3387 = vsel %vm1321, %v3357, %v3358
        %v3388 = vsel %vm1321, %v3356, %v3357
        %v3389 = vsel %vm1321, %v3355, %v3356
        %v3390 = vsel %vm1321, %v3354, %v3355
        %v3391 = vsel %vm1321, %v3353, %v3354
        %v3392 = vsel %vm1321, %v3352, %v3353
        %v3393 = vsel %vm1321, %v3351, %v3352
        %v3394 = vsel %vm1321, %v3350, %v3351
        %v3395 = vsel %vm1321, %v3349, %v3350
        %v3396 = vsel %vm1321, %v3348, %v3349
        %v3397 = vsel %vm1321, %v3347, %v3348
        %v3398 = vsel %vm1321, %v3346, %v3347
        %v3399 = vsel %vm1321, %v3345, %v3346
        %v3400 = vsel %vm1321, %v3344, %v3345
        %v3401 = vsel %vm1321, %v3343, %v3344
        %v3402 = vsel %vm1321, %v3342, %v3343
        %v3403 = vsel %vm1321, %v3341, %v3342
        %v3404 = vsel %vm1321, %v3372, %v3341
        %v3405 = vsel %vm1386, %v3403, -inf
        %v3406 = vsel %vm1387, %v3402, -inf
        %v3407 = vsel %vm1388, %v3401, -inf
        %v3408 = vsel %vm1389, %v3400, -inf
        %v3409 = vsel %vm1390, %v3399, -inf
        %v3410 = vsel %vm1391, %v3398, -inf
        %v3411 = vsel %vm1392, %v3397, -inf
        %v3412 = vsel %vm1393, %v3396, -inf
        %v3413 = vsel %vm1394, %v3395, -inf
        %v3414 = vsel %vm1395, %v3394, -inf
        %v3415 = vsel %vm1396, %v3393, -inf
        %v3416 = vsel %vm1397, %v3392, -inf
        %v3417 = vsel %vm1398, %v3391, -inf
        %v3418 = vsel %vm1399, %v3390, -inf
        %v3419 = vsel %vm1400, %v3389, -inf
        %v3420 = vsel %vm1401, %v3388, -inf
        %v3421 = vsel %vm1402, %v3387, -inf
        %v3422 = vsel %vm1403, %v3386, -inf
        %v3423 = vsel %vm1404, %v3385, -inf
        %v3424 = vsel %vm1405, %v3384, -inf
        %v3425 = vsel %vm1406, %v3383, -inf
        %v3426 = vsel %vm1407, %v3382, -inf
        %v3427 = vsel %vm1408, %v3381, -inf
        %v3428 = vsel %vm1409, %v3380, -inf
        %v3429 = vsel %vm1410, %v3379, -inf
        %v3430 = vsel %vm1411, %v3378, -inf
        %v3431 = vsel %vm1412, %v3377, -inf
        %v3432 = vsel %vm1413, %v3376, -inf
        %v3433 = vsel %vm1414, %v3375, -inf
        %v3434 = vsel %vm1415, %v3374, -inf
        %v3435 = vsel %vm1416, %v3373, -inf
        %v3436 = vsel %vm1417, %v3404, -inf
        %v3437 = vmax.f32 %v3309, %v3405
        %v3438 = vmax.f32 %v3310, %v3406
        %v3439 = vmax.f32 %v3311, %v3407
        %v3440 = vmax.f32 %v3312, %v3408
        %v3441 = vmax.f32 %v3313, %v3409
        %v3442 = vmax.f32 %v3314, %v3410
        %v3443 = vmax.f32 %v3315, %v3411
        %v3444 = vmax.f32 %v3316, %v3412
        %v3445 = vmax.f32 %v3317, %v3413
        %v3446 = vmax.f32 %v3318, %v3414
        %v3447 = vmax.f32 %v3319, %v3415
        %v3448 = vmax.f32 %v3320, %v3416
        %v3449 = vmax.f32 %v3321, %v3417
        %v3450 = vmax.f32 %v3322, %v3418
        %v3451 = vmax.f32 %v3323, %v3419
        %v3452 = vmax.f32 %v3324, %v3420
        %v3453 = vmax.f32 %v3325, %v3421
        %v3454 = vmax.f32 %v3326, %v3422
        %v3455 = vmax.f32 %v3327, %v3423
        %v3456 = vmax.f32 %v3328, %v3424
        %v3457 = vmax.f32 %v3329, %v3425
        %v3458 = vmax.f32 %v3330, %v3426
        %v3459 = vmax.f32 %v3331, %v3427
        %v3460 = vmax.f32 %v3332, %v3428
        %v3461 = vmax.f32 %v3333, %v3429
        %v3462 = vmax.f32 %v3334, %v3430
        %v3463 = vmax.f32 %v3335, %v3431
        %v3464 = vmax.f32 %v3336, %v3432
        %v3465 = vmax.f32 %v3337, %v3433
        %v3466 = vmax.f32 %v3338, %v3434
        %v3467 = vmax.f32 %v3339, %v3435
        %v3468 = vmax.f32 %v3340, %v3436
        %v3469 = vrot.slane %v3309, 7
        %v3470 = vrot.slane %v3310, 7
        %v3471 = vrot.slane %v3311, 7
        %v3472 = vrot.slane %v3312, 7
        %v3473 = vrot.slane %v3313, 7
        %v3474 = vrot.slane %v3314, 7
        %v3475 = vrot.slane %v3315, 7
        %v3476 = vrot.slane %v3316, 7
        %v3477 = vrot.slane %v3317, 7
        %v3478 = vrot.slane %v3318, 7
        %v3479 = vrot.slane %v3319, 7
        %v3480 = vrot.slane %v3320, 7
        %v3481 = vrot.slane %v3321, 7
        %v3482 = vrot.slane %v3322, 7
        %v3483 = vrot.slane %v3323, 7
        %v3484 = vrot.slane %v3324, 7
        %v3485 = vrot.slane %v3325, 7
        %v3486 = vrot.slane %v3326, 7
        %v3487 = vrot.slane %v3327, 7
        %v3488 = vrot.slane %v3328, 7
        %v3489 = vrot.slane %v3329, 7
        %v3490 = vrot.slane %v3330, 7
        %v3491 = vrot.slane %v3331, 7
        %v3492 = vrot.slane %v3332, 7
        %v3493 = vrot.slane %v3333, 7
        %v3494 = vrot.slane %v3334, 7
        %v3495 = vrot.slane %v3335, 7
        %v3496 = vrot.slane %v3336, 7
        %v3497 = vrot.slane %v3337, 7
        %v3498 = vrot.slane %v3338, 7
        %v3499 = vrot.slane %v3339, 7
        %v3500 = vrot.slane %v3340, 7
        %v3501 = vsel %vm1514, %v3499, %v3500
        %v3502 = vsel %vm1514, %v3498, %v3499
        %v3503 = vsel %vm1514, %v3497, %v3498
        %v3504 = vsel %vm1514, %v3496, %v3497
        %v3505 = vsel %vm1514, %v3495, %v3496
        %v3506 = vsel %vm1514, %v3494, %v3495
        %v3507 = vsel %vm1514, %v3493, %v3494
        %v3508 = vsel %vm1514, %v3492, %v3493
        %v3509 = vsel %vm1514, %v3491, %v3492
        %v3510 = vsel %vm1514, %v3490, %v3491
        %v3511 = vsel %vm1514, %v3489, %v3490
        %v3512 = vsel %vm1514, %v3488, %v3489
        %v3513 = vsel %vm1514, %v3487, %v3488
        %v3514 = vsel %vm1514, %v3486, %v3487
        %v3515 = vsel %vm1514, %v3485, %v3486
        %v3516 = vsel %vm1514, %v3484, %v3485
        %v3517 = vsel %vm1514, %v3483, %v3484
        %v3518 = vsel %vm1514, %v3482, %v3483
        %v3519 = vsel %vm1514, %v3481, %v3482
        %v3520 = vsel %vm1514, %v3480, %v3481
        %v3521 = vsel %vm1514, %v3479, %v3480
        %v3522 = vsel %vm1514, %v3478, %v3479
        %v3523 = vsel %vm1514, %v3477, %v3478
        %v3524 = vsel %vm1514, %v3476, %v3477
        %v3525 = vsel %vm1514, %v3475, %v3476
        %v3526 = vsel %vm1514, %v3474, %v3475
        %v3527 = vsel %vm1514, %v3473, %v3474
        %v3528 = vsel %vm1514, %v3472, %v3473
        %v3529 = vsel %vm1514, %v3471, %v3472
        %v3530 = vsel %vm1514, %v3470, %v3471
        %v3531 = vsel %vm1514, %v3469, %v3470
        %v3532 = vsel %vm1514, %v3500, %v3469
        %v3533 = vsel %vm1579, %v3532, -inf
        %v3534 = vsel %vm1580, %v3531, -inf
        %v3535 = vsel %vm1581, %v3530, -inf
        %v3536 = vsel %vm1582, %v3529, -inf
        %v3537 = vsel %vm1583, %v3528, -inf
        %v3538 = vsel %vm1584, %v3527, -inf
        %v3539 = vsel %vm1585, %v3526, -inf
        %v3540 = vsel %vm1586, %v3525, -inf
        %v3541 = vsel %vm1587, %v3524, -inf
        %v3542 = vsel %vm1588, %v3523, -inf
        %v3543 = vsel %vm1589, %v3522, -inf
        %v3544 = vsel %vm1590, %v3521, -inf
        %v3545 = vsel %vm1591, %v3520, -inf
        %v3546 = vsel %vm1592, %v3519, -inf
        %v3547 = vsel %vm1593, %v3518, -inf
        %v3548 = vsel %vm1594, %v3517, -inf
        %v3549 = vsel %vm1595, %v3516, -inf
        %v3550 = vsel %vm1596, %v3515, -inf
        %v3551 = vsel %vm1597, %v3514, -inf
        %v3552 = vsel %vm1598, %v3513, -inf
        %v3553 = vsel %vm1599, %v3512, -inf
        %v3554 = vsel %vm1600, %v3511, -inf
        %v3555 = vsel %vm1601, %v3510, -inf
        %v3556 = vsel %vm1602, %v3509, -inf
        %v3557 = vsel %vm1603, %v3508, -inf
        %v3558 = vsel %vm1604, %v3507, -inf
        %v3559 = vsel %vm1605, %v3506, -inf
        %v3560 = vsel %vm1606, %v3505, -inf
        %v3561 = vsel %vm1607, %v3504, -inf
        %v3562 = vsel %vm1608, %v3503, -inf
        %v3563 = vsel %vm1609, %v3502, -inf
        %v3564 = vsel %vm1610, %v3501, -inf
        %v3565 = vmax.f32 %v3437, %v3533
        %v3566 = vmax.f32 %v3438, %v3534
        %v3567 = vmax.f32 %v3439, %v3535
        %v3568 = vmax.f32 %v3440, %v3536
        %v3569 = vmax.f32 %v3441, %v3537
        %v3570 = vmax.f32 %v3442, %v3538
        %v3571 = vmax.f32 %v3443, %v3539
        %v3572 = vmax.f32 %v3444, %v3540
        %v3573 = vmax.f32 %v3445, %v3541
        %v3574 = vmax.f32 %v3446, %v3542
        %v3575 = vmax.f32 %v3447, %v3543
        %v3576 = vmax.f32 %v3448, %v3544
        %v3577 = vmax.f32 %v3449, %v3545
        %v3578 = vmax.f32 %v3450, %v3546
        %v3579 = vmax.f32 %v3451, %v3547
        %v3580 = vmax.f32 %v3452, %v3548
        %v3581 = vmax.f32 %v3453, %v3549
        %v3582 = vmax.f32 %v3454, %v3550
        %v3583 = vmax.f32 %v3455, %v3551
        %v3584 = vmax.f32 %v3456, %v3552
        %v3585 = vmax.f32 %v3457, %v3553
        %v3586 = vmax.f32 %v3458, %v3554
        %v3587 = vmax.f32 %v3459, %v3555
        %v3588 = vmax.f32 %v3460, %v3556
        %v3589 = vmax.f32 %v3461, %v3557
        %v3590 = vmax.f32 %v3462, %v3558
        %v3591 = vmax.f32 %v3463, %v3559
        %v3592 = vmax.f32 %v3464, %v3560
        %v3593 = vmax.f32 %v3465, %v3561
        %v3594 = vmax.f32 %v3466, %v3562
        %v3595 = vmax.f32 %v3467, %v3563
        %v3596 = vmax.f32 %v3468, %v3564
        %v3597 = vrot.slane %v3309, 2
        %v3598 = vrot.slane %v3310, 2
        %v3599 = vrot.slane %v3311, 2
        %v3600 = vrot.slane %v3312, 2
        %v3601 = vrot.slane %v3313, 2
        %v3602 = vrot.slane %v3314, 2
        %v3603 = vrot.slane %v3315, 2
        %v3604 = vrot.slane %v3316, 2
        %v3605 = vrot.slane %v3317, 2
        %v3606 = vrot.slane %v3318, 2
        %v3607 = vrot.slane %v3319, 2
        %v3608 = vrot.slane %v3320, 2
        %v3609 = vrot.slane %v3321, 2
        %v3610 = vrot.slane %v3322, 2
        %v3611 = vrot.slane %v3323, 2
        %v3612 = vrot.slane %v3324, 2
        %v3613 = vrot.slane %v3325, 2
        %v3614 = vrot.slane %v3326, 2
        %v3615 = vrot.slane %v3327, 2
        %v3616 = vrot.slane %v3328, 2
        %v3617 = vrot.slane %v3329, 2
        %v3618 = vrot.slane %v3330, 2
        %v3619 = vrot.slane %v3331, 2
        %v3620 = vrot.slane %v3332, 2
        %v3621 = vrot.slane %v3333, 2
        %v3622 = vrot.slane %v3334, 2
        %v3623 = vrot.slane %v3335, 2
        %v3624 = vrot.slane %v3336, 2
        %v3625 = vrot.slane %v3337, 2
        %v3626 = vrot.slane %v3338, 2
        %v3627 = vrot.slane %v3339, 2
        %v3628 = vrot.slane %v3340, 2
        %v3629 = vsel %vm1707, %v3627, %v3628
        %v3630 = vsel %vm1707, %v3626, %v3627
        %v3631 = vsel %vm1707, %v3625, %v3626
        %v3632 = vsel %vm1707, %v3624, %v3625
        %v3633 = vsel %vm1707, %v3623, %v3624
        %v3634 = vsel %vm1707, %v3622, %v3623
        %v3635 = vsel %vm1707, %v3621, %v3622
        %v3636 = vsel %vm1707, %v3620, %v3621
        %v3637 = vsel %vm1707, %v3619, %v3620
        %v3638 = vsel %vm1707, %v3618, %v3619
        %v3639 = vsel %vm1707, %v3617, %v3618
        %v3640 = vsel %vm1707, %v3616, %v3617
        %v3641 = vsel %vm1707, %v3615, %v3616
        %v3642 = vsel %vm1707, %v3614, %v3615
        %v3643 = vsel %vm1707, %v3613, %v3614
        %v3644 = vsel %vm1707, %v3612, %v3613
        %v3645 = vsel %vm1707, %v3611, %v3612
        %v3646 = vsel %vm1707, %v3610, %v3611
        %v3647 = vsel %vm1707, %v3609, %v3610
        %v3648 = vsel %vm1707, %v3608, %v3609
        %v3649 = vsel %vm1707, %v3607, %v3608
        %v3650 = vsel %vm1707, %v3606, %v3607
        %v3651 = vsel %vm1707, %v3605, %v3606
        %v3652 = vsel %vm1707, %v3604, %v3605
        %v3653 = vsel %vm1707, %v3603, %v3604
        %v3654 = vsel %vm1707, %v3602, %v3603
        %v3655 = vsel %vm1707, %v3601, %v3602
        %v3656 = vsel %vm1707, %v3600, %v3601
        %v3657 = vsel %vm1707, %v3599, %v3600
        %v3658 = vsel %vm1707, %v3598, %v3599
        %v3659 = vsel %vm1707, %v3597, %v3598
        %v3660 = vsel %vm1707, %v3628, %v3597
        %v3661 = vsel %vm1772, %v3659, -inf
        %v3662 = vsel %vm1773, %v3658, -inf
        %v3663 = vsel %vm1774, %v3657, -inf
        %v3664 = vsel %vm1775, %v3656, -inf
        %v3665 = vsel %vm1776, %v3655, -inf
        %v3666 = vsel %vm1777, %v3654, -inf
        %v3667 = vsel %vm1778, %v3653, -inf
        %v3668 = vsel %vm1779, %v3652, -inf
        %v3669 = vsel %vm1780, %v3651, -inf
        %v3670 = vsel %vm1781, %v3650, -inf
        %v3671 = vsel %vm1782, %v3649, -inf
        %v3672 = vsel %vm1783, %v3648, -inf
        %v3673 = vsel %vm1784, %v3647, -inf
        %v3674 = vsel %vm1785, %v3646, -inf
        %v3675 = vsel %vm1786, %v3645, -inf
        %v3676 = vsel %vm1787, %v3644, -inf
        %v3677 = vsel %vm1788, %v3643, -inf
        %v3678 = vsel %vm1789, %v3642, -inf
        %v3679 = vsel %vm1790, %v3641, -inf
        %v3680 = vsel %vm1791, %v3640, -inf
        %v3681 = vsel %vm1792, %v3639, -inf
        %v3682 = vsel %vm1793, %v3638, -inf
        %v3683 = vsel %vm1794, %v3637, -inf
        %v3684 = vsel %vm1795, %v3636, -inf
        %v3685 = vsel %vm1796, %v3635, -inf
        %v3686 = vsel %vm1797, %v3634, -inf
        %v3687 = vsel %vm1798, %v3633, -inf
        %v3688 = vsel %vm1799, %v3632, -inf
        %v3689 = vsel %vm1800, %v3631, -inf
        %v3690 = vsel %vm1801, %v3630, -inf
        %v3691 = vsel %vm1802, %v3629, -inf
        %v3692 = vsel %vm1803, %v3660, -inf
        %v3693 = vmax.f32 %v3565, %v3661
        %v3694 = vmax.f32 %v3566, %v3662
        %v3695 = vmax.f32 %v3567, %v3663
        %v3696 = vmax.f32 %v3568, %v3664
        %v3697 = vmax.f32 %v3569, %v3665
        %v3698 = vmax.f32 %v3570, %v3666
        %v3699 = vmax.f32 %v3571, %v3667
        %v3700 = vmax.f32 %v3572, %v3668
        %v3701 = vmax.f32 %v3573, %v3669
        %v3702 = vmax.f32 %v3574, %v3670
        %v3703 = vmax.f32 %v3575, %v3671
        %v3704 = vmax.f32 %v3576, %v3672
        %v3705 = vmax.f32 %v3577, %v3673
        %v3706 = vmax.f32 %v3578, %v3674
        %v3707 = vmax.f32 %v3579, %v3675
        %v3708 = vmax.f32 %v3580, %v3676
        %v3709 = vmax.f32 %v3581, %v3677
        %v3710 = vmax.f32 %v3582, %v3678
        %v3711 = vmax.f32 %v3583, %v3679
        %v3712 = vmax.f32 %v3584, %v3680
        %v3713 = vmax.f32 %v3585, %v3681
        %v3714 = vmax.f32 %v3586, %v3682
        %v3715 = vmax.f32 %v3587, %v3683
        %v3716 = vmax.f32 %v3588, %v3684
        %v3717 = vmax.f32 %v3589, %v3685
        %v3718 = vmax.f32 %v3590, %v3686
        %v3719 = vmax.f32 %v3591, %v3687
        %v3720 = vmax.f32 %v3592, %v3688
        %v3721 = vmax.f32 %v3593, %v3689
        %v3722 = vmax.f32 %v3594, %v3690
        %v3723 = vmax.f32 %v3595, %v3691
        %v3724 = vmax.f32 %v3596, %v3692
        %v3725 = vrot.slane %v3309, 6
        %v3726 = vrot.slane %v3310, 6
        %v3727 = vrot.slane %v3311, 6
        %v3728 = vrot.slane %v3312, 6
        %v3729 = vrot.slane %v3313, 6
        %v3730 = vrot.slane %v3314, 6
        %v3731 = vrot.slane %v3315, 6
        %v3732 = vrot.slane %v3316, 6
        %v3733 = vrot.slane %v3317, 6
        %v3734 = vrot.slane %v3318, 6
        %v3735 = vrot.slane %v3319, 6
        %v3736 = vrot.slane %v3320, 6
        %v3737 = vrot.slane %v3321, 6
        %v3738 = vrot.slane %v3322, 6
        %v3739 = vrot.slane %v3323, 6
        %v3740 = vrot.slane %v3324, 6
        %v3741 = vrot.slane %v3325, 6
        %v3742 = vrot.slane %v3326, 6
        %v3743 = vrot.slane %v3327, 6
        %v3744 = vrot.slane %v3328, 6
        %v3745 = vrot.slane %v3329, 6
        %v3746 = vrot.slane %v3330, 6
        %v3747 = vrot.slane %v3331, 6
        %v3748 = vrot.slane %v3332, 6
        %v3749 = vrot.slane %v3333, 6
        %v3750 = vrot.slane %v3334, 6
        %v3751 = vrot.slane %v3335, 6
        %v3752 = vrot.slane %v3336, 6
        %v3753 = vrot.slane %v3337, 6
        %v3754 = vrot.slane %v3338, 6
        %v3755 = vrot.slane %v3339, 6
        %v3756 = vrot.slane %v3340, 6
        %v3757 = vsel %vm1900, %v3755, %v3756
        %v3758 = vsel %vm1900, %v3754, %v3755
        %v3759 = vsel %vm1900, %v3753, %v3754
        %v3760 = vsel %vm1900, %v3752, %v3753
        %v3761 = vsel %vm1900, %v3751, %v3752
        %v3762 = vsel %vm1900, %v3750, %v3751
        %v3763 = vsel %vm1900, %v3749, %v3750
        %v3764 = vsel %vm1900, %v3748, %v3749
        %v3765 = vsel %vm1900, %v3747, %v3748
        %v3766 = vsel %vm1900, %v3746, %v3747
        %v3767 = vsel %vm1900, %v3745, %v3746
        %v3768 = vsel %vm1900, %v3744, %v3745
        %v3769 = vsel %vm1900, %v3743, %v3744
        %v3770 = vsel %vm1900, %v3742, %v3743
        %v3771 = vsel %vm1900, %v3741, %v3742
        %v3772 = vsel %vm1900, %v3740, %v3741
        %v3773 = vsel %vm1900, %v3739, %v3740
        %v3774 = vsel %vm1900, %v3738, %v3739
        %v3775 = vsel %vm1900, %v3737, %v3738
        %v3776 = vsel %vm1900, %v3736, %v3737
        %v3777 = vsel %vm1900, %v3735, %v3736
        %v3778 = vsel %vm1900, %v3734, %v3735
        %v3779 = vsel %vm1900, %v3733, %v3734
        %v3780 = vsel %vm1900, %v3732, %v3733
        %v3781 = vsel %vm1900, %v3731, %v3732
        %v3782 = vsel %vm1900, %v3730, %v3731
        %v3783 = vsel %vm1900, %v3729, %v3730
        %v3784 = vsel %vm1900, %v3728, %v3729
        %v3785 = vsel %vm1900, %v3727, %v3728
        %v3786 = vsel %vm1900, %v3726, %v3727
        %v3787 = vsel %vm1900, %v3725, %v3726
        %v3788 = vsel %vm1900, %v3756, %v3725
        %v3789 = vsel %vm1965, %v3788, -inf
        %v3790 = vsel %vm1966, %v3787, -inf
        %v3791 = vsel %vm1967, %v3786, -inf
        %v3792 = vsel %vm1968, %v3785, -inf
        %v3793 = vsel %vm1969, %v3784, -inf
        %v3794 = vsel %vm1970, %v3783, -inf
        %v3795 = vsel %vm1971, %v3782, -inf
        %v3796 = vsel %vm1972, %v3781, -inf
        %v3797 = vsel %vm1973, %v3780, -inf
        %v3798 = vsel %vm1974, %v3779, -inf
        %v3799 = vsel %vm1975, %v3778, -inf
        %v3800 = vsel %vm1976, %v3777, -inf
        %v3801 = vsel %vm1977, %v3776, -inf
        %v3802 = vsel %vm1978, %v3775, -inf
        %v3803 = vsel %vm1979, %v3774, -inf
        %v3804 = vsel %vm1980, %v3773, -inf
        %v3805 = vsel %vm1981, %v3772, -inf
        %v3806 = vsel %vm1982, %v3771, -inf
        %v3807 = vsel %vm1983, %v3770, -inf
        %v3808 = vsel %vm1984, %v3769, -inf
        %v3809 = vsel %vm1985, %v3768, -inf
        %v3810 = vsel %vm1986, %v3767, -inf
        %v3811 = vsel %vm1987, %v3766, -inf
        %v3812 = vsel %vm1988, %v3765, -inf
        %v3813 = vsel %vm1989, %v3764, -inf
        %v3814 = vsel %vm1990, %v3763, -inf
        %v3815 = vsel %vm1991, %v3762, -inf
        %v3816 = vsel %vm1992, %v3761, -inf
        %v3817 = vsel %vm1993, %v3760, -inf
        %v3818 = vsel %vm1994, %v3759, -inf
        %v3819 = vsel %vm1995, %v3758, -inf
        %v3820 = vsel %vm1996, %v3757, -inf
        %v3821 = vmax.f32 %v3693, %v3789
        %v3822 = vmax.f32 %v3694, %v3790
        %v3823 = vmax.f32 %v3695, %v3791
        %v3824 = vmax.f32 %v3696, %v3792
        %v3825 = vmax.f32 %v3697, %v3793
        %v3826 = vmax.f32 %v3698, %v3794
        %v3827 = vmax.f32 %v3699, %v3795
        %v3828 = vmax.f32 %v3700, %v3796
        %v3829 = vmax.f32 %v3701, %v3797
        %v3830 = vmax.f32 %v3702, %v3798
        %v3831 = vmax.f32 %v3703, %v3799
        %v3832 = vmax.f32 %v3704, %v3800
        %v3833 = vmax.f32 %v3705, %v3801
        %v3834 = vmax.f32 %v3706, %v3802
        %v3835 = vmax.f32 %v3707, %v3803
        %v3836 = vmax.f32 %v3708, %v3804
        %v3837 = vmax.f32 %v3709, %v3805
        %v3838 = vmax.f32 %v3710, %v3806
        %v3839 = vmax.f32 %v3711, %v3807
        %v3840 = vmax.f32 %v3712, %v3808
        %v3841 = vmax.f32 %v3713, %v3809
        %v3842 = vmax.f32 %v3714, %v3810
        %v3843 = vmax.f32 %v3715, %v3811
        %v3844 = vmax.f32 %v3716, %v3812
        %v3845 = vmax.f32 %v3717, %v3813
        %v3846 = vmax.f32 %v3718, %v3814
        %v3847 = vmax.f32 %v3719, %v3815
        %v3848 = vmax.f32 %v3720, %v3816
        %v3849 = vmax.f32 %v3721, %v3817
        %v3850 = vmax.f32 %v3722, %v3818
        %v3851 = vmax.f32 %v3723, %v3819
        %v3852 = vmax.f32 %v3724, %v3820
        %v3853 = vsel %vm2093, %v3823, -inf
        %v3854 = vsel %vm2094, %v3824, -inf
        %v3855 = vsel %vm2095, %v3825, -inf
        %v3856 = vsel %vm2096, %v3826, -inf
        %v3857 = vsel %vm2097, %v3827, -inf
        %v3858 = vsel %vm2098, %v3828, -inf
        %v3859 = vsel %vm2099, %v3829, -inf
        %v3860 = vsel %vm2100, %v3830, -inf
        %v3861 = vsel %vm2101, %v3831, -inf
        %v3862 = vsel %vm2102, %v3832, -inf
        %v3863 = vsel %vm2103, %v3833, -inf
        %v3864 = vsel %vm2104, %v3834, -inf
        %v3865 = vsel %vm2105, %v3835, -inf
        %v3866 = vsel %vm2106, %v3836, -inf
        %v3867 = vsel %vm2107, %v3837, -inf
        %v3868 = vsel %vm2108, %v3838, -inf
        %v3869 = vsel %vm2109, %v3839, -inf
        %v3870 = vsel %vm2110, %v3840, -inf
        %v3871 = vsel %vm2111, %v3841, -inf
        %v3872 = vsel %vm2112, %v3842, -inf
        %v3873 = vsel %vm2113, %v3843, -inf
        %v3874 = vsel %vm2114, %v3844, -inf
        %v3875 = vsel %vm2115, %v3845, -inf
        %v3876 = vsel %vm2116, %v3846, -inf
        %v3877 = vsel %vm2117, %v3847, -inf
        %v3878 = vsel %vm2118, %v3848, -inf
        %v3879 = vsel %vm2119, %v3849, -inf
        %v3880 = vsel %vm2120, %v3850, -inf
        %v3881 = vsel %vm2121, %v3851, -inf
        %v3882 = vsel %vm2122, %v3852, -inf
        %v3883 = vsel %vm2123, %v3821, -inf
        %v3884 = vsel %vm2124, %v3822, -inf
        %v3885 = vmax.f32 %v3821, %v3853
        %v3886 = vmax.f32 %v3822, %v3854
        %v3887 = vmax.f32 %v3823, %v3855
        %v3888 = vmax.f32 %v3824, %v3856
        %v3889 = vmax.f32 %v3825, %v3857
        %v3890 = vmax.f32 %v3826, %v3858
        %v3891 = vmax.f32 %v3827, %v3859
        %v3892 = vmax.f32 %v3828, %v3860
        %v3893 = vmax.f32 %v3829, %v3861
        %v3894 = vmax.f32 %v3830, %v3862
        %v3895 = vmax.f32 %v3831, %v3863
        %v3896 = vmax.f32 %v3832, %v3864
        %v3897 = vmax.f32 %v3833, %v3865
        %v3898 = vmax.f32 %v3834, %v3866
        %v3899 = vmax.f32 %v3835, %v3867
        %v3900 = vmax.f32 %v3836, %v3868
        %v3901 = vmax.f32 %v3837, %v3869
        %v3902 = vmax.f32 %v3838, %v3870
        %v3903 = vmax.f32 %v3839, %v3871
        %v3904 = vmax.f32 %v3840, %v3872
        %v3905 = vmax.f32 %v3841, %v3873
        %v3906 = vmax.f32 %v3842, %v3874
        %v3907 = vmax.f32 %v3843, %v3875
        %v3908 = vmax.f32 %v3844, %v3876
        %v3909 = vmax.f32 %v3845, %v3877
        %v3910 = vmax.f32 %v3846, %v3878
        %v3911 = vmax.f32 %v3847, %v3879
        %v3912 = vmax.f32 %v3848, %v3880
        %v3913 = vmax.f32 %v3849, %v3881
        %v3914 = vmax.f32 %v3850, %v3882
        %v3915 = vmax.f32 %v3851, %v3883
        %v3916 = vmax.f32 %v3852, %v3884
        %v3917 = vsel %vm2221, %v3851, -inf
        %v3918 = vsel %vm2222, %v3852, -inf
        %v3919 = vsel %vm2223, %v3821, -inf
        %v3920 = vsel %vm2224, %v3822, -inf
        %v3921 = vsel %vm2225, %v3823, -inf
        %v3922 = vsel %vm2226, %v3824, -inf
        %v3923 = vsel %vm2227, %v3825, -inf
        %v3924 = vsel %vm2228, %v3826, -inf
        %v3925 = vsel %vm2229, %v3827, -inf
        %v3926 = vsel %vm2230, %v3828, -inf
        %v3927 = vsel %vm2231, %v3829, -inf
        %v3928 = vsel %vm2232, %v3830, -inf
        %v3929 = vsel %vm2233, %v3831, -inf
        %v3930 = vsel %vm2234, %v3832, -inf
        %v3931 = vsel %vm2235, %v3833, -inf
        %v3932 = vsel %vm2236, %v3834, -inf
        %v3933 = vsel %vm2237, %v3835, -inf
        %v3934 = vsel %vm2238, %v3836, -inf
        %v3935 = vsel %vm2239, %v3837, -inf
        %v3936 = vsel %vm2240, %v3838, -inf
        %v3937 = vsel %vm2241, %v3839, -inf
        %v3938 = vsel %vm2242, %v3840, -inf
        %v3939 = vsel %vm2243, %v3841, -inf
        %v3940 = vsel %vm2244, %v3842, -inf
        %v3941 = vsel %vm2245, %v3843, -inf
        %v3942 = vsel %vm2246, %v3844, -inf
        %v3943 = vsel %vm2247, %v3845, -inf
        %v3944 = vsel %vm2248, %v3846, -inf
        %v3945 = vsel %vm2249, %v3847, -inf
        %v3946 = vsel %vm2250, %v3848, -inf
        %v3947 = vsel %vm2251, %v3849, -inf
        %v3948 = vsel %vm2252, %v3850, -inf
        %v3949 = vmax.f32 %v3885, %v3917
        %v3950 = vmax.f32 %v3886, %v3918
        %v3951 = vmax.f32 %v3887, %v3919
        %v3952 = vmax.f32 %v3888, %v3920
        %v3953 = vmax.f32 %v3889, %v3921
        %v3954 = vmax.f32 %v3890, %v3922
        %v3955 = vmax.f32 %v3891, %v3923
        %v3956 = vmax.f32 %v3892, %v3924
        %v3957 = vmax.f32 %v3893, %v3925
        %v3958 = vmax.f32 %v3894, %v3926
        %v3959 = vmax.f32 %v3895, %v3927
        %v3960 = vmax.f32 %v3896, %v3928
        %v3961 = vmax.f32 %v3897, %v3929
        %v3962 = vmax.f32 %v3898, %v3930
        %v3963 = vmax.f32 %v3899, %v3931
        %v3964 = vmax.f32 %v3900, %v3932
        %v3965 = vmax.f32 %v3901, %v3933
        %v3966 = vmax.f32 %v3902, %v3934
        %v3967 = vmax.f32 %v3903, %v3935
        %v3968 = vmax.f32 %v3904, %v3936
        %v3969 = vmax.f32 %v3905, %v3937
        %v3970 = vmax.f32 %v3906, %v3938
        %v3971 = vmax.f32 %v3907, %v3939
        %v3972 = vmax.f32 %v3908, %v3940
        %v3973 = vmax.f32 %v3909, %v3941
        %v3974 = vmax.f32 %v3910, %v3942
        %v3975 = vmax.f32 %v3911, %v3943
        %v3976 = vmax.f32 %v3912, %v3944
        %v3977 = vmax.f32 %v3913, %v3945
        %v3978 = vmax.f32 %v3914, %v3946
        %v3979 = vmax.f32 %v3915, %v3947
        %v3980 = vmax.f32 %v3916, %v3948
        %v3981 = vsel %vm2349, %v3825, -inf
        %v3982 = vsel %vm2350, %v3826, -inf
        %v3983 = vsel %vm2351, %v3827, -inf
        %v3984 = vsel %vm2352, %v3828, -inf
        %v3985 = vsel %vm2353, %v3829, -inf
        %v3986 = vsel %vm2354, %v3830, -inf
        %v3987 = vsel %vm2355, %v3831, -inf
        %v3988 = vsel %vm2356, %v3832, -inf
        %v3989 = vsel %vm2357, %v3833, -inf
        %v3990 = vsel %vm2358, %v3834, -inf
        %v3991 = vsel %vm2359, %v3835, -inf
        %v3992 = vsel %vm2360, %v3836, -inf
        %v3993 = vsel %vm2361, %v3837, -inf
        %v3994 = vsel %vm2362, %v3838, -inf
        %v3995 = vsel %vm2363, %v3839, -inf
        %v3996 = vsel %vm2364, %v3840, -inf
        %v3997 = vsel %vm2365, %v3841, -inf
        %v3998 = vsel %vm2366, %v3842, -inf
        %v3999 = vsel %vm2367, %v3843, -inf
        %v4000 = vsel %vm2368, %v3844, -inf
        %v4001 = vsel %vm2369, %v3845, -inf
        %v4002 = vsel %vm2370, %v3846, -inf
        %v4003 = vsel %vm2371, %v3847, -inf
        %v4004 = vsel %vm2372, %v3848, -inf
        %v4005 = vsel %vm2373, %v3849, -inf
        %v4006 = vsel %vm2374, %v3850, -inf
        %v4007 = vsel %vm2375, %v3851, -inf
        %v4008 = vsel %vm2376, %v3852, -inf
        %v4009 = vsel %vm2377, %v3821, -inf
        %v4010 = vsel %vm2378, %v3822, -inf
        %v4011 = vsel %vm2379, %v3823, -inf
        %v4012 = vsel %vm2380, %v3824, -inf
        %v4013 = vmax.f32 %v3949, %v3981
        %v4014 = vmax.f32 %v3950, %v3982
        %v4015 = vmax.f32 %v3951, %v3983
        %v4016 = vmax.f32 %v3952, %v3984
        %v4017 = vmax.f32 %v3953, %v3985
        %v4018 = vmax.f32 %v3954, %v3986
        %v4019 = vmax.f32 %v3955, %v3987
        %v4020 = vmax.f32 %v3956, %v3988
        %v4021 = vmax.f32 %v3957, %v3989
        %v4022 = vmax.f32 %v3958, %v3990
        %v4023 = vmax.f32 %v3959, %v3991
        %v4024 = vmax.f32 %v3960, %v3992
        %v4025 = vmax.f32 %v3961, %v3993
        %v4026 = vmax.f32 %v3962, %v3994
        %v4027 = vmax.f32 %v3963, %v3995
        %v4028 = vmax.f32 %v3964, %v3996
        %v4029 = vmax.f32 %v3965, %v3997
        %v4030 = vmax.f32 %v3966, %v3998
        %v4031 = vmax.f32 %v3967, %v3999
        %v4032 = vmax.f32 %v3968, %v4000
        %v4033 = vmax.f32 %v3969, %v4001
        %v4034 = vmax.f32 %v3970, %v4002
        %v4035 = vmax.f32 %v3971, %v4003
        %v4036 = vmax.f32 %v3972, %v4004
        %v4037 = vmax.f32 %v3973, %v4005
        %v4038 = vmax.f32 %v3974, %v4006
        %v4039 = vmax.f32 %v3975, %v4007
        %v4040 = vmax.f32 %v3976, %v4008
        %v4041 = vmax.f32 %v3977, %v4009
        %v4042 = vmax.f32 %v3978, %v4010
        %v4043 = vmax.f32 %v3979, %v4011
        %v4044 = vmax.f32 %v3980, %v4012
        %v4045 = vsel %vm2477, %v3849, -inf
        %v4046 = vsel %vm2478, %v3850, -inf
        %v4047 = vsel %vm2479, %v3851, -inf
        %v4048 = vsel %vm2480, %v3852, -inf
        %v4049 = vsel %vm2481, %v3821, -inf
        %v4050 = vsel %vm2482, %v3822, -inf
        %v4051 = vsel %vm2483, %v3823, -inf
        %v4052 = vsel %vm2484, %v3824, -inf
        %v4053 = vsel %vm2485, %v3825, -inf
        %v4054 = vsel %vm2486, %v3826, -inf
        %v4055 = vsel %vm2487, %v3827, -inf
        %v4056 = vsel %vm2488, %v3828, -inf
        %v4057 = vsel %vm2489, %v3829, -inf
        %v4058 = vsel %vm2490, %v3830, -inf
        %v4059 = vsel %vm2491, %v3831, -inf
        %v4060 = vsel %vm2492, %v3832, -inf
        %v4061 = vsel %vm2493, %v3833, -inf
        %v4062 = vsel %vm2494, %v3834, -inf
        %v4063 = vsel %vm2495, %v3835, -inf
        %v4064 = vsel %vm2496, %v3836, -inf
        %v4065 = vsel %vm2497, %v3837, -inf
        %v4066 = vsel %vm2498, %v3838, -inf
        %v4067 = vsel %vm2499, %v3839, -inf
        %v4068 = vsel %vm2500, %v3840, -inf
        %v4069 = vsel %vm2501, %v3841, -inf
        %v4070 = vsel %vm2502, %v3842, -inf
        %v4071 = vsel %vm2503, %v3843, -inf
        %v4072 = vsel %vm2504, %v3844, -inf
        %v4073 = vsel %vm2505, %v3845, -inf
        %v4074 = vsel %vm2506, %v3846, -inf
        %v4075 = vsel %vm2507, %v3847, -inf
        %v4076 = vsel %vm2508, %v3848, -inf
        %v4077 = vmax.f32 %v4013, %v4045
        %v4078 = vmax.f32 %v4014, %v4046
        %v4079 = vmax.f32 %v4015, %v4047
        %v4080 = vmax.f32 %v4016, %v4048
        %v4081 = vmax.f32 %v4017, %v4049
        %v4082 = vmax.f32 %v4018, %v4050
        %v4083 = vmax.f32 %v4019, %v4051
        %v4084 = vmax.f32 %v4020, %v4052
        %v4085 = vmax.f32 %v4021, %v4053
        %v4086 = vmax.f32 %v4022, %v4054
        %v4087 = vmax.f32 %v4023, %v4055
        %v4088 = vmax.f32 %v4024, %v4056
        %v4089 = vmax.f32 %v4025, %v4057
        %v4090 = vmax.f32 %v4026, %v4058
        %v4091 = vmax.f32 %v4027, %v4059
        %v4092 = vmax.f32 %v4028, %v4060
        %v4093 = vmax.f32 %v4029, %v4061
        %v4094 = vmax.f32 %v4030, %v4062
        %v4095 = vmax.f32 %v4031, %v4063
        %v4096 = vmax.f32 %v4032, %v4064
        %v4097 = vmax.f32 %v4033, %v4065
        %v4098 = vmax.f32 %v4034, %v4066
        %v4099 = vmax.f32 %v4035, %v4067
        %v4100 = vmax.f32 %v4036, %v4068
        %v4101 = vmax.f32 %v4037, %v4069
        %v4102 = vmax.f32 %v4038, %v4070
        %v4103 = vmax.f32 %v4039, %v4071
        %v4104 = vmax.f32 %v4040, %v4072
        %v4105 = vmax.f32 %v4041, %v4073
        %v4106 = vmax.f32 %v4042, %v4074
        %v4107 = vmax.f32 %v4043, %v4075
        %v4108 = vmax.f32 %v4044, %v4076
        %v4109 = vld [vmem:[#allocation7] sm:$0xff]
        %v4110 = vld [vmem:[#allocation7 + $0x8] sm:$0xff]
        %v4111 = vld [vmem:[#allocation7 + $0x10] sm:$0xff]
        %v4112 = vld [vmem:[#allocation7 + $0x18] sm:$0xff]
        %v4113 = vld [vmem:[#allocation7 + $0x20] sm:$0xff]
        %v4114 = vld [vmem:[#allocation7 + $0x28] sm:$0xff]
        %v4115 = vld [vmem:[#allocation7 + $0x30] sm:$0xff]
        %v4116 = vld [vmem:[#allocation7 + $0x38] sm:$0xff]
        %v4117 = vld [vmem:[#allocation7 + $0x40] sm:$0xff]
        %v4118 = vld [vmem:[#allocation7 + $0x48] sm:$0xff]
        %v4119 = vld [vmem:[#allocation7 + $0x50] sm:$0xff]
        %v4120 = vld [vmem:[#allocation7 + $0x58] sm:$0xff]
        %v4121 = vld [vmem:[#allocation7 + $0x60] sm:$0xff]
        %v4122 = vld [vmem:[#allocation7 + $0x68] sm:$0xff]
        %v4123 = vld [vmem:[#allocation7 + $0x70] sm:$0xff]
        %v4124 = vld [vmem:[#allocation7 + $0x78] sm:$0xff]
        %s4125 = scalar_lea.vmem [#allocation7], 128
        %v4126 = vld [vmem:[%s4125] sm:$0xff]
        %v4127 = vld [vmem:[%s4125 + $0x8] sm:$0xff]
        %v4128 = vld [vmem:[%s4125 + $0x10] sm:$0xff]
        %v4129 = vld [vmem:[%s4125 + $0x18] sm:$0xff]
        %v4130 = vld [vmem:[%s4125 + $0x20] sm:$0xff]
        %v4131 = vld [vmem:[%s4125 + $0x28] sm:$0xff]
        %v4132 = vld [vmem:[%s4125 + $0x30] sm:$0xff]
        %v4133 = vld [vmem:[%s4125 + $0x38] sm:$0xff]
        %v4134 = vld [vmem:[%s4125 + $0x40] sm:$0xff]
        %v4135 = vld [vmem:[%s4125 + $0x48] sm:$0xff]
        %v4136 = vld [vmem:[%s4125 + $0x50] sm:$0xff]
        %v4137 = vld [vmem:[%s4125 + $0x58] sm:$0xff]
        %v4138 = vld [vmem:[%s4125 + $0x60] sm:$0xff]
        %v4139 = vld [vmem:[%s4125 + $0x68] sm:$0xff]
        %v4140 = vld [vmem:[%s4125 + $0x70] sm:$0xff]
        %v4141 = vld [vmem:[%s4125 + $0x78] sm:$0xff]
        %4142 = vmatprep.subr.mxu0 0.0
        %4143 = vmatpush1.msra.mxu0 %v4126
        %4144 = vmatprep.subr.mxu0 0.0
        %4145 = vmatpush1.msra.mxu0 %v4127
        %4146 = vmatprep.subr.mxu0 0.0
        %4147 = vmatpush1.msra.mxu0 %v4128
        %4148 = vmatprep.subr.mxu0 0.0
        %4149 = vmatpush1.msra.mxu0 %v4129
        %4150 = vmatprep.subr.mxu0 0.0
        %4151 = vmatpush1.msra.mxu0 %v4130
        %4152 = vmatprep.subr.mxu0 0.0
        %4153 = vmatpush1.msra.mxu0 %v4131
        %4154 = vmatprep.subr.mxu0 0.0
        %4155 = vmatpush1.msra.mxu0 %v4132
        %4156 = vmatprep.subr.mxu0 0.0
        %4157 = vmatpush1.msra.mxu0 %v4133
        %4158 = vmatprep.subr.mxu0 0.0
        %4159 = vmatpush1.msra.mxu0 %v4134
        %4160 = vmatprep.subr.mxu0 0.0
        %4161 = vmatpush1.msra.mxu0 %v4135
        %4162 = vmatprep.subr.mxu0 0.0
        %4163 = vmatpush1.msra.mxu0 %v4136
        %4164 = vmatprep.subr.mxu0 0.0
        %4165 = vmatpush1.msra.mxu0 %v4137
        %4166 = vmatprep.subr.mxu0 0.0
        %4167 = vmatpush1.msra.mxu0 %v4138
        %4168 = vmatprep.subr.mxu0 0.0
        %4169 = vmatpush1.msra.mxu0 %v4139
        %4170 = vmatprep.subr.mxu0 0.0
        %4171 = vmatpush1.msra.mxu0 %v4140
        %4172 = vmatprep.subr.mxu0 0.0
        %4173 = vmatpush1.msra.mxu0 %v4141
        %4174 = vmatprep.subr.mxu0 0.0
        %4175 = vmatpush1.msra.mxu0 0.0
        %4176 = vmatprep.subr.mxu0 0.0
        %4177 = vmatpush1.msra.mxu0 0.0
        %4178 = vmatprep.subr.mxu0 0.0
        %4179 = vmatpush1.msra.mxu0 0.0
        %4180 = vmatprep.subr.mxu0 0.0
        %4181 = vmatpush1.msra.mxu0 0.0
        %4182 = vmatprep.subr.mxu0 0.0
        %4183 = vmatpush1.msra.mxu0 0.0
        %4184 = vmatprep.subr.mxu0 0.0
        %4185 = vmatpush1.msra.mxu0 0.0
        %4186 = vmatprep.subr.mxu0 0.0
        %4187 = vmatpush1.msra.mxu0 0.0
        %4188 = vmatprep.subr.mxu0 0.0
        %4189 = vmatpush1.msra.mxu0 0.0
        %4190 = vmatprep.subr.mxu0 0.0
        %4191 = vmatpush1.msra.mxu0 0.0
        %4192 = vmatprep.subr.mxu0 0.0
        %4193 = vmatpush1.msra.mxu0 0.0
        %4194 = vmatprep.subr.mxu0 0.0
        %4195 = vmatpush1.msra.mxu0 0.0
        %4196 = vmatprep.subr.mxu0 0.0
        %4197 = vmatpush1.msra.mxu0 0.0
        %4198 = vmatprep.subr.mxu0 0.0
        %4199 = vmatpush1.msra.mxu0 0.0
        %4200 = vmatprep.subr.mxu0 0.0
        %4201 = vmatpush1.msra.mxu0 0.0
        %4202 = vmatprep.subr.mxu0 0.0
        %4203 = vmatpush1.msra.mxu0 0.0
        %4204 = vmatprep.subr.mxu0 0.0
        %4205 = vmatpush1.msra.mxu0 0.0
        %4206 = vmatprep.mubr.f32.mxu0 0.0
        %4207 = vmatmul.mubr.f32.gmra.mrb[0].mxu0 %v2541
        %v4208 = vpop.f32.mrb[0].mxu0
        %v4209 = vadd.f32 0.0, %v4208
        %v4210 = vpop.f32.mrb[0].mxu0
        %4211 = vmatprep.mubr.f32.mxu0 0.0
        %4212 = vmatmul.mubr.f32.gmra.mrb[0].mxu0 %v2542
        %v4213 = vpop.f32.mrb[0].mxu0
        %v4214 = vadd.f32 0.0, %v4213
        %v4215 = vpop.f32.mrb[0].mxu0
        %4216 = vmatprep.mubr.f32.mxu0 0.0
        %4217 = vmatmul.mubr.f32.gmra.mrb[0].mxu0 %v2543
        %v4218 = vpop.f32.mrb[0].mxu0
        %v4219 = vadd.f32 0.0, %v4218
        %v4220 = vpop.f32.mrb[0].mxu0
        %4221 = vmatprep.mubr.f32.mxu0 0.0
        %4222 = vmatmul.mubr.f32.gmra.mrb[0].mxu0 %v2544
        %v4223 = vpop.f32.mrb[0].mxu0
        %v4224 = vadd.f32 0.0, %v4223
        %v4225 = vpop.f32.mrb[0].mxu0
        %4226 = vmatprep.mubr.f32.mxu0 0.0
        %4227 = vmatmul.mubr.f32.gmra.mrb[0].mxu0 %v2545
        %v4228 = vpop.f32.mrb[0].mxu0
        %v4229 = vadd.f32 0.0, %v4228
        %v4230 = vpop.f32.mrb[0].mxu0
        %4231 = vmatprep.mubr.f32.mxu0 0.0
        %4232 = vmatmul.mubr.f32.gmra.mrb[0].mxu0 %v2546
        %v4233 = vpop.f32.mrb[0].mxu0
        %v4234 = vadd.f32 0.0, %v4233
        %v4235 = vpop.f32.mrb[0].mxu0
        %4236 = vmatprep.mubr.f32.mxu0 0.0
        %4237 = vmatmul.mubr.f32.gmra.mrb[0].mxu0 %v2547
        %v4238 = vpop.f32.mrb[0].mxu0
        %v4239 = vadd.f32 0.0, %v4238
        %v4240 = vpop.f32.mrb[0].mxu0
        %4241 = vmatprep.mubr.f32.mxu0 0.0
        %4242 = vmatmul.mubr.f32.gmra.mrb[0].mxu0 %v2548
        %v4243 = vpop.f32.mrb[0].mxu0
        %v4244 = vadd.f32 0.0, %v4243
        %v4245 = vpop.f32.mrb[0].mxu0
        %4246 = vmatprep.mubr.f32.mxu0 0.0
        %4247 = vmatmul.mubr.f32.gmra.mrb[0].mxu0 %v2549
        %v4248 = vpop.f32.mrb[0].mxu0
        %v4249 = vadd.f32 0.0, %v4248
        %v4250 = vpop.f32.mrb[0].mxu0
        %4251 = vmatprep.mubr.f32.mxu0 0.0
        %4252 = vmatmul.mubr.f32.gmra.mrb[0].mxu0 %v2550
        %v4253 = vpop.f32.mrb[0].mxu0
        %v4254 = vadd.f32 0.0, %v4253
        %v4255 = vpop.f32.mrb[0].mxu0
        %4256 = vmatprep.mubr.f32.mxu0 0.0
        %4257 = vmatmul.mubr.f32.gmra.mrb[0].mxu0 %v2551
        %v4258 = vpop.f32.mrb[0].mxu0
        %v4259 = vadd.f32 0.0, %v4258
        %v4260 = vpop.f32.mrb[0].mxu0
        %4261 = vmatprep.mubr.f32.mxu0 0.0
        %4262 = vmatmul.mubr.f32.gmra.mrb[0].mxu0 %v2552
        %v4263 = vpop.f32.mrb[0].mxu0
        %v4264 = vadd.f32 0.0, %v4263
        %v4265 = vpop.f32.mrb[0].mxu0
        %4266 = vmatprep.mubr.f32.mxu0 0.0
        %4267 = vmatmul.mubr.f32.gmra.mrb[0].mxu0 %v2553
        %v4268 = vpop.f32.mrb[0].mxu0
        %v4269 = vadd.f32 0.0, %v4268
        %v4270 = vpop.f32.mrb[0].mxu0
        %4271 = vmatprep.mubr.f32.mxu0 0.0
        %4272 = vmatmul.mubr.f32.gmra.mrb[0].mxu0 %v2554
        %v4273 = vpop.f32.mrb[0].mxu0
        %v4274 = vadd.f32 0.0, %v4273
        %v4275 = vpop.f32.mrb[0].mxu0
        %4276 = vmatprep.mubr.f32.mxu0 0.0
        %4277 = vmatmul.mubr.f32.gmra.mrb[0].mxu0 %v2555
        %v4278 = vpop.f32.mrb[0].mxu0
        %v4279 = vadd.f32 0.0, %v4278
        %v4280 = vpop.f32.mrb[0].mxu0
        %4281 = vmatprep.mubr.f32.mxu0 0.0
        %4282 = vmatmul.mubr.f32.gmra.mrb[0].mxu0 %v2556
        %v4283 = vpop.f32.mrb[0].mxu0
        %v4284 = vadd.f32 0.0, %v4283
        %v4285 = vpop.f32.mrb[0].mxu0
        %4286 = vmatprep.mubr.f32.mxu0 0.0
        %4287 = vmatmul.mubr.f32.gmra.mrb[0].mxu0 %v2557
        %v4288 = vpop.f32.mrb[0].mxu0
        %v4289 = vadd.f32 0.0, %v4288
        %v4290 = vpop.f32.mrb[0].mxu0
        %4291 = vmatprep.mubr.f32.mxu0 0.0
        %4292 = vmatmul.mubr.f32.gmra.mrb[0].mxu0 %v2558
        %v4293 = vpop.f32.mrb[0].mxu0
        %v4294 = vadd.f32 0.0, %v4293
        %v4295 = vpop.f32.mrb[0].mxu0
        %4296 = vmatprep.mubr.f32.mxu0 0.0
        %4297 = vmatmul.mubr.f32.gmra.mrb[0].mxu0 %v2559
        %v4298 = vpop.f32.mrb[0].mxu0
        %v4299 = vadd.f32 0.0, %v4298
        %v4300 = vpop.f32.mrb[0].mxu0
        %4301 = vmatprep.mubr.f32.mxu0 0.0
        %4302 = vmatmul.mubr.f32.gmra.mrb[0].mxu0 %v2560
        %v4303 = vpop.f32.mrb[0].mxu0
        %v4304 = vadd.f32 0.0, %v4303
        %v4305 = vpop.f32.mrb[0].mxu0
        %4306 = vmatprep.mubr.f32.mxu0 0.0
        %4307 = vmatmul.mubr.f32.gmra.mrb[0].mxu0 %v2561
        %v4308 = vpop.f32.mrb[0].mxu0
        %v4309 = vadd.f32 0.0, %v4308
        %v4310 = vpop.f32.mrb[0].mxu0
        %4311 = vmatprep.mubr.f32.mxu0 0.0
        %4312 = vmatmul.mubr.f32.gmra.mrb[0].mxu0 %v2562
        %v4313 = vpop.f32.mrb[0].mxu0
        %v4314 = vadd.f32 0.0, %v4313
        %v4315 = vpop.f32.mrb[0].mxu0
        %4316 = vmatprep.mubr.f32.mxu0 0.0
        %4317 = vmatmul.mubr.f32.gmra.mrb[0].mxu0 %v2563
        %v4318 = vpop.f32.mrb[0].mxu0
        %v4319 = vadd.f32 0.0, %v4318
        %v4320 = vpop.f32.mrb[0].mxu0
        %4321 = vmatprep.mubr.f32.mxu0 0.0
        %4322 = vmatmul.mubr.f32.gmra.mrb[0].mxu0 %v2564
        %v4323 = vpop.f32.mrb[0].mxu0
        %v4324 = vadd.f32 0.0, %v4323
        %v4325 = vpop.f32.mrb[0].mxu0
        %4326 = vmatprep.mubr.f32.mxu0 0.0
        %4327 = vmatmul.mubr.f32.gmra.mrb[0].mxu0 %v2565
        %v4328 = vpop.f32.mrb[0].mxu0
        %v4329 = vadd.f32 0.0, %v4328
        %v4330 = vpop.f32.mrb[0].mxu0
        %4331 = vmatprep.mubr.f32.mxu0 0.0
        %4332 = vmatmul.mubr.f32.gmra.mrb[0].mxu0 %v2566
        %v4333 = vpop.f32.mrb[0].mxu0
        %v4334 = vadd.f32 0.0, %v4333
        %v4335 = vpop.f32.mrb[0].mxu0
        %4336 = vmatprep.mubr.f32.mxu0 0.0
        %4337 = vmatmul.mubr.f32.gmra.mrb[0].mxu0 %v2567
        %v4338 = vpop.f32.mrb[0].mxu0
        %v4339 = vadd.f32 0.0, %v4338
        %v4340 = vpop.f32.mrb[0].mxu0
        %4341 = vmatprep.mubr.f32.mxu0 0.0
        %4342 = vmatmul.mubr.f32.gmra.mrb[0].mxu0 %v2568
        %v4343 = vpop.f32.mrb[0].mxu0
        %v4344 = vadd.f32 0.0, %v4343
        %v4345 = vpop.f32.mrb[0].mxu0
        %4346 = vmatprep.mubr.f32.mxu0 0.0
        %4347 = vmatmul.mubr.f32.gmra.mrb[0].mxu0 %v2569
        %v4348 = vpop.f32.mrb[0].mxu0
        %v4349 = vadd.f32 0.0, %v4348
        %v4350 = vpop.f32.mrb[0].mxu0
        %4351 = vmatprep.mubr.f32.mxu0 0.0
        %4352 = vmatmul.mubr.f32.gmra.mrb[0].mxu0 %v2570
        %v4353 = vpop.f32.mrb[0].mxu0
        %v4354 = vadd.f32 0.0, %v4353
        %v4355 = vpop.f32.mrb[0].mxu0
        %4356 = vmatprep.mubr.f32.mxu0 0.0
        %4357 = vmatmul.mubr.f32.gmra.mrb[0].mxu0 %v2571
        %v4358 = vpop.f32.mrb[0].mxu0
        %v4359 = vadd.f32 0.0, %v4358
        %v4360 = vpop.f32.mrb[0].mxu0
        %4361 = vmatprep.mubr.f32.mxu0 0.0
        %4362 = vmatmul.mubr.f32.gmra.mrb[0].mxu0 %v2572
        %v4363 = vpop.f32.mrb[0].mxu0
        %v4364 = vadd.f32 0.0, %v4363
        %v4365 = vpop.f32.mrb[0].mxu0
        %4366 = vdwg.mxu0
        %4367 = vmatprep.subr.mxu0 0.0
        %4368 = vmatpush1.msra.mxu0 %v4109
        %4369 = vmatprep.subr.mxu0 0.0
        %4370 = vmatpush1.msra.mxu0 %v4110
        %4371 = vmatprep.subr.mxu0 0.0
        %4372 = vmatpush1.msra.mxu0 %v4111
        %4373 = vmatprep.subr.mxu0 0.0
        %4374 = vmatpush1.msra.mxu0 %v4112
        %4375 = vmatprep.subr.mxu0 0.0
        %4376 = vmatpush1.msra.mxu0 %v4113
        %4377 = vmatprep.subr.mxu0 0.0
        %4378 = vmatpush1.msra.mxu0 %v4114
        %4379 = vmatprep.subr.mxu0 0.0
        %4380 = vmatpush1.msra.mxu0 %v4115
        %4381 = vmatprep.subr.mxu0 0.0
        %4382 = vmatpush1.msra.mxu0 %v4116
        %4383 = vmatprep.subr.mxu0 0.0
        %4384 = vmatpush1.msra.mxu0 %v4117
        %4385 = vmatprep.subr.mxu0 0.0
        %4386 = vmatpush1.msra.mxu0 %v4118
        %4387 = vmatprep.subr.mxu0 0.0
        %4388 = vmatpush1.msra.mxu0 %v4119
        %4389 = vmatprep.subr.mxu0 0.0
        %4390 = vmatpush1.msra.mxu0 %v4120
        %4391 = vmatprep.subr.mxu0 0.0
        %4392 = vmatpush1.msra.mxu0 %v4121
        %4393 = vmatprep.subr.mxu0 0.0
        %4394 = vmatpush1.msra.mxu0 %v4122
        %4395 = vmatprep.subr.mxu0 0.0
        %4396 = vmatpush1.msra.mxu0 %v4123
        %4397 = vmatprep.subr.mxu0 0.0
        %4398 = vmatpush1.msra.mxu0 %v4124
        %4399 = vmatprep.subr.mxu0 0.0
        %4400 = vmatpush1.msra.mxu0 0.0
        %4401 = vmatprep.subr.mxu0 0.0
        %4402 = vmatpush1.msra.mxu0 0.0
        %4403 = vmatprep.subr.mxu0 0.0
        %4404 = vmatpush1.msra.mxu0 0.0
        %4405 = vmatprep.subr.mxu0 0.0
        %4406 = vmatpush1.msra.mxu0 0.0
        %4407 = vmatprep.subr.mxu0 0.0
        %4408 = vmatpush1.msra.mxu0 0.0
        %4409 = vmatprep.subr.mxu0 0.0
        %4410 = vmatpush1.msra.mxu0 0.0
        %4411 = vmatprep.subr.mxu0 0.0
        %4412 = vmatpush1.msra.mxu0 0.0
        %4413 = vmatprep.subr.mxu0 0.0
        %4414 = vmatpush1.msra.mxu0 0.0
        %4415 = vmatprep.subr.mxu0 0.0
        %4416 = vmatpush1.msra.mxu0 0.0
        %4417 = vmatprep.subr.mxu0 0.0
        %4418 = vmatpush1.msra.mxu0 0.0
        %4419 = vmatprep.subr.mxu0 0.0
        %4420 = vmatpush1.msra.mxu0 0.0
        %4421 = vmatprep.subr.mxu0 0.0
        %4422 = vmatpush1.msra.mxu0 0.0
        %4423 = vmatprep.subr.mxu0 0.0
        %4424 = vmatpush1.msra.mxu0 0.0
        %4425 = vmatprep.subr.mxu0 0.0
        %4426 = vmatpush1.msra.mxu0 0.0
        %4427 = vmatprep.subr.mxu0 0.0
        %4428 = vmatpush1.msra.mxu0 0.0
        %4429 = vmatprep.subr.mxu0 0.0
        %4430 = vmatpush1.msra.mxu0 0.0
        %4431 = vmatprep.mubr.f32.mxu0 0.0
        %4432 = vmatmul.mubr.f32.gmra.mrb[0].mxu0 %v584
        %v4433 = vpop.f32.mrb[0].mxu0
        %v4434 = vadd.f32 %v4209, %v4433
        %v4435 = vpop.f32.mrb[0].mxu0
        %4436 = vmatprep.mubr.f32.mxu0 0.0
        %4437 = vmatmul.mubr.f32.gmra.mrb[0].mxu0 %v585
        %v4438 = vpop.f32.mrb[0].mxu0
        %v4439 = vadd.f32 %v4214, %v4438
        %v4440 = vpop.f32.mrb[0].mxu0
        %4441 = vmatprep.mubr.f32.mxu0 0.0
        %4442 = vmatmul.mubr.f32.gmra.mrb[0].mxu0 %v586
        %v4443 = vpop.f32.mrb[0].mxu0
        %v4444 = vadd.f32 %v4219, %v4443
        %v4445 = vpop.f32.mrb[0].mxu0
        %4446 = vmatprep.mubr.f32.mxu0 0.0
        %4447 = vmatmul.mubr.f32.gmra.mrb[0].mxu0 %v587
        %v4448 = vpop.f32.mrb[0].mxu0
        %v4449 = vadd.f32 %v4224, %v4448
        %v4450 = vpop.f32.mrb[0].mxu0
        %4451 = vmatprep.mubr.f32.mxu0 0.0
        %4452 = vmatmul.mubr.f32.gmra.mrb[0].mxu0 %v588
        %v4453 = vpop.f32.mrb[0].mxu0
        %v4454 = vadd.f32 %v4229, %v4453
        %v4455 = vpop.f32.mrb[0].mxu0
        %4456 = vmatprep.mubr.f32.mxu0 0.0
        %4457 = vmatmul.mubr.f32.gmra.mrb[0].mxu0 %v589
        %v4458 = vpop.f32.mrb[0].mxu0
        %v4459 = vadd.f32 %v4234, %v4458
        %v4460 = vpop.f32.mrb[0].mxu0
        %4461 = vmatprep.mubr.f32.mxu0 0.0
        %4462 = vmatmul.mubr.f32.gmra.mrb[0].mxu0 %v590
        %v4463 = vpop.f32.mrb[0].mxu0
        %v4464 = vadd.f32 %v4239, %v4463
        %v4465 = vpop.f32.mrb[0].mxu0
        %4466 = vmatprep.mubr.f32.mxu0 0.0
        %4467 = vmatmul.mubr.f32.gmra.mrb[0].mxu0 %v591
        %v4468 = vpop.f32.mrb[0].mxu0
        %v4469 = vadd.f32 %v4244, %v4468
        %v4470 = vpop.f32.mrb[0].mxu0
        %4471 = vmatprep.mubr.f32.mxu0 0.0
        %4472 = vmatmul.mubr.f32.gmra.mrb[0].mxu0 %v592
        %v4473 = vpop.f32.mrb[0].mxu0
        %v4474 = vadd.f32 %v4249, %v4473
        %v4475 = vpop.f32.mrb[0].mxu0
        %4476 = vmatprep.mubr.f32.mxu0 0.0
        %4477 = vmatmul.mubr.f32.gmra.mrb[0].mxu0 %v593
        %v4478 = vpop.f32.mrb[0].mxu0
        %v4479 = vadd.f32 %v4254, %v4478
        %v4480 = vpop.f32.mrb[0].mxu0
        %4481 = vmatprep.mubr.f32.mxu0 0.0
        %4482 = vmatmul.mubr.f32.gmra.mrb[0].mxu0 %v594
        %v4483 = vpop.f32.mrb[0].mxu0
        %v4484 = vadd.f32 %v4259, %v4483
        %v4485 = vpop.f32.mrb[0].mxu0
        %4486 = vmatprep.mubr.f32.mxu0 0.0
        %4487 = vmatmul.mubr.f32.gmra.mrb[0].mxu0 %v595
        %v4488 = vpop.f32.mrb[0].mxu0
        %v4489 = vadd.f32 %v4264, %v4488
        %v4490 = vpop.f32.mrb[0].mxu0
        %4491 = vmatprep.mubr.f32.mxu0 0.0
        %4492 = vmatmul.mubr.f32.gmra.mrb[0].mxu0 %v596
        %v4493 = vpop.f32.mrb[0].mxu0
        %v4494 = vadd.f32 %v4269, %v4493
        %v4495 = vpop.f32.mrb[0].mxu0
        %4496 = vmatprep.mubr.f32.mxu0 0.0
        %4497 = vmatmul.mubr.f32.gmra.mrb[0].mxu0 %v597
        %v4498 = vpop.f32.mrb[0].mxu0
        %v4499 = vadd.f32 %v4274, %v4498
        %v4500 = vpop.f32.mrb[0].mxu0
        %4501 = vmatprep.mubr.f32.mxu0 0.0
        %4502 = vmatmul.mubr.f32.gmra.mrb[0].mxu0 %v598
        %v4503 = vpop.f32.mrb[0].mxu0
        %v4504 = vadd.f32 %v4279, %v4503
        %v4505 = vpop.f32.mrb[0].mxu0
        %4506 = vmatprep.mubr.f32.mxu0 0.0
        %4507 = vmatmul.mubr.f32.gmra.mrb[0].mxu0 %v599
        %v4508 = vpop.f32.mrb[0].mxu0
        %v4509 = vadd.f32 %v4284, %v4508
        %v4510 = vpop.f32.mrb[0].mxu0
        %4511 = vmatprep.mubr.f32.mxu0 0.0
        %4512 = vmatmul.mubr.f32.gmra.mrb[0].mxu0 %v600
        %v4513 = vpop.f32.mrb[0].mxu0
        %v4514 = vadd.f32 %v4289, %v4513
        %v4515 = vpop.f32.mrb[0].mxu0
        %4516 = vmatprep.mubr.f32.mxu0 0.0
        %4517 = vmatmul.mubr.f32.gmra.mrb[0].mxu0 %v601
        %v4518 = vpop.f32.mrb[0].mxu0
        %v4519 = vadd.f32 %v4294, %v4518
        %v4520 = vpop.f32.mrb[0].mxu0
        %4521 = vmatprep.mubr.f32.mxu0 0.0
        %4522 = vmatmul.mubr.f32.gmra.mrb[0].mxu0 %v602
        %v4523 = vpop.f32.mrb[0].mxu0
        %v4524 = vadd.f32 %v4299, %v4523
        %v4525 = vpop.f32.mrb[0].mxu0
        %4526 = vmatprep.mubr.f32.mxu0 0.0
        %4527 = vmatmul.mubr.f32.gmra.mrb[0].mxu0 %v603
        %v4528 = vpop.f32.mrb[0].mxu0
        %v4529 = vadd.f32 %v4304, %v4528
        %v4530 = vpop.f32.mrb[0].mxu0
        %4531 = vmatprep.mubr.f32.mxu0 0.0
        %4532 = vmatmul.mubr.f32.gmra.mrb[0].mxu0 %v604
        %v4533 = vpop.f32.mrb[0].mxu0
        %v4534 = vadd.f32 %v4309, %v4533
        %v4535 = vpop.f32.mrb[0].mxu0
        %4536 = vmatprep.mubr.f32.mxu0 0.0
        %4537 = vmatmul.mubr.f32.gmra.mrb[0].mxu0 %v605
        %v4538 = vpop.f32.mrb[0].mxu0
        %v4539 = vadd.f32 %v4314, %v4538
        %v4540 = vpop.f32.mrb[0].mxu0
        %4541 = vmatprep.mubr.f32.mxu0 0.0
        %4542 = vmatmul.mubr.f32.gmra.mrb[0].mxu0 %v606
        %v4543 = vpop.f32.mrb[0].mxu0
        %v4544 = vadd.f32 %v4319, %v4543
        %v4545 = vpop.f32.mrb[0].mxu0
        %4546 = vmatprep.mubr.f32.mxu0 0.0
        %4547 = vmatmul.mubr.f32.gmra.mrb[0].mxu0 %v607
        %v4548 = vpop.f32.mrb[0].mxu0
        %v4549 = vadd.f32 %v4324, %v4548
        %v4550 = vpop.f32.mrb[0].mxu0
        %4551 = vmatprep.mubr.f32.mxu0 0.0
        %4552 = vmatmul.mubr.f32.gmra.mrb[0].mxu0 %v608
        %v4553 = vpop.f32.mrb[0].mxu0
        %v4554 = vadd.f32 %v4329, %v4553
        %v4555 = vpop.f32.mrb[0].mxu0
        %4556 = vmatprep.mubr.f32.mxu0 0.0
        %4557 = vmatmul.mubr.f32.gmra.mrb[0].mxu0 %v609
        %v4558 = vpop.f32.mrb[0].mxu0
        %v4559 = vadd.f32 %v4334, %v4558
        %v4560 = vpop.f32.mrb[0].mxu0
        %4561 = vmatprep.mubr.f32.mxu0 0.0
        %4562 = vmatmul.mubr.f32.gmra.mrb[0].mxu0 %v610
        %v4563 = vpop.f32.mrb[0].mxu0
        %v4564 = vadd.f32 %v4339, %v4563
        %v4565 = vpop.f32.mrb[0].mxu0
        %4566 = vmatprep.mubr.f32.mxu0 0.0
        %4567 = vmatmul.mubr.f32.gmra.mrb[0].mxu0 %v611
        %v4568 = vpop.f32.mrb[0].mxu0
        %v4569 = vadd.f32 %v4344, %v4568
        %v4570 = vpop.f32.mrb[0].mxu0
        %4571 = vmatprep.mubr.f32.mxu0 0.0
        %4572 = vmatmul.mubr.f32.gmra.mrb[0].mxu0 %v612
        %v4573 = vpop.f32.mrb[0].mxu0
        %v4574 = vadd.f32 %v4349, %v4573
        %v4575 = vpop.f32.mrb[0].mxu0
        %4576 = vmatprep.mubr.f32.mxu0 0.0
        %4577 = vmatmul.mubr.f32.gmra.mrb[0].mxu0 %v613
        %v4578 = vpop.f32.mrb[0].mxu0
        %v4579 = vadd.f32 %v4354, %v4578
        %v4580 = vpop.f32.mrb[0].mxu0
        %4581 = vmatprep.mubr.f32.mxu0 0.0
        %4582 = vmatmul.mubr.f32.gmra.mrb[0].mxu0 %v614
        %v4583 = vpop.f32.mrb[0].mxu0
        %v4584 = vadd.f32 %v4359, %v4583
        %v4585 = vpop.f32.mrb[0].mxu0
        %4586 = vmatprep.mubr.f32.mxu0 0.0
        %4587 = vmatmul.mubr.f32.gmra.mrb[0].mxu0 %v615
        %v4588 = vpop.f32.mrb[0].mxu0
        %v4589 = vadd.f32 %v4364, %v4588
        %v4590 = vpop.f32.mrb[0].mxu0
        %4591 = vdwg.mxu0
        %s4592 = scalar_lea.vmem [#allocation7], 256
        %v4593 = vld [vmem:[%s4592] sm:$0xff]
        %v4594 = vld [vmem:[%s4592 + $0x8] sm:$0xff]
        %v4595 = vld [vmem:[%s4592 + $0x10] sm:$0xff]
        %v4596 = vld [vmem:[%s4592 + $0x18] sm:$0xff]
        %v4597 = vld [vmem:[%s4592 + $0x20] sm:$0xff]
        %v4598 = vld [vmem:[%s4592 + $0x28] sm:$0xff]
        %v4599 = vld [vmem:[%s4592 + $0x30] sm:$0xff]
        %v4600 = vld [vmem:[%s4592 + $0x38] sm:$0xff]
        %v4601 = vld [vmem:[%s4592 + $0x40] sm:$0xff]
        %v4602 = vld [vmem:[%s4592 + $0x48] sm:$0xff]
        %v4603 = vld [vmem:[%s4592 + $0x50] sm:$0xff]
        %v4604 = vld [vmem:[%s4592 + $0x58] sm:$0xff]
        %v4605 = vld [vmem:[%s4592 + $0x60] sm:$0xff]
        %v4606 = vld [vmem:[%s4592 + $0x68] sm:$0xff]
        %v4607 = vld [vmem:[%s4592 + $0x70] sm:$0xff]
        %v4608 = vld [vmem:[%s4592 + $0x78] sm:$0xff]
        %4609 = vmatprep.subr.mxu0 0.0
        %4610 = vmatpush1.msra.mxu0 %v4593
        %4611 = vmatprep.subr.mxu0 0.0
        %4612 = vmatpush1.msra.mxu0 %v4594
        %4613 = vmatprep.subr.mxu0 0.0
        %4614 = vmatpush1.msra.mxu0 %v4595
        %4615 = vmatprep.subr.mxu0 0.0
        %4616 = vmatpush1.msra.mxu0 %v4596
        %4617 = vmatprep.subr.mxu0 0.0
        %4618 = vmatpush1.msra.mxu0 %v4597
        %4619 = vmatprep.subr.mxu0 0.0
        %4620 = vmatpush1.msra.mxu0 %v4598
        %4621 = vmatprep.subr.mxu0 0.0
        %4622 = vmatpush1.msra.mxu0 %v4599
        %4623 = vmatprep.subr.mxu0 0.0
        %4624 = vmatpush1.msra.mxu0 %v4600
        %4625 = vmatprep.subr.mxu0 0.0
        %4626 = vmatpush1.msra.mxu0 %v4601
        %4627 = vmatprep.subr.mxu0 0.0
        %4628 = vmatpush1.msra.mxu0 %v4602
        %4629 = vmatprep.subr.mxu0 0.0
        %4630 = vmatpush1.msra.mxu0 %v4603
        %4631 = vmatprep.subr.mxu0 0.0
        %4632 = vmatpush1.msra.mxu0 %v4604
        %4633 = vmatprep.subr.mxu0 0.0
        %4634 = vmatpush1.msra.mxu0 %v4605
        %4635 = vmatprep.subr.mxu0 0.0
        %4636 = vmatpush1.msra.mxu0 %v4606
        %4637 = vmatprep.subr.mxu0 0.0
        %4638 = vmatpush1.msra.mxu0 %v4607
        %4639 = vmatprep.subr.mxu0 0.0
        %4640 = vmatpush1.msra.mxu0 %v4608
        %4641 = vmatprep.subr.mxu0 0.0
        %4642 = vmatpush1.msra.mxu0 0.0
        %4643 = vmatprep.subr.mxu0 0.0
        %4644 = vmatpush1.msra.mxu0 0.0
        %4645 = vmatprep.subr.mxu0 0.0
        %4646 = vmatpush1.msra.mxu0 0.0
        %4647 = vmatprep.subr.mxu0 0.0
        %4648 = vmatpush1.msra.mxu0 0.0
        %4649 = vmatprep.subr.mxu0 0.0
        %4650 = vmatpush1.msra.mxu0 0.0
        %4651 = vmatprep.subr.mxu0 0.0
        %4652 = vmatpush1.msra.mxu0 0.0
        %4653 = vmatprep.subr.mxu0 0.0
        %4654 = vmatpush1.msra.mxu0 0.0
        %4655 = vmatprep.subr.mxu0 0.0
        %4656 = vmatpush1.msra.mxu0 0.0
        %4657 = vmatprep.subr.mxu0 0.0
        %4658 = vmatpush1.msra.mxu0 0.0
        %4659 = vmatprep.subr.mxu0 0.0
        %4660 = vmatpush1.msra.mxu0 0.0
        %4661 = vmatprep.subr.mxu0 0.0
        %4662 = vmatpush1.msra.mxu0 0.0
        %4663 = vmatprep.subr.mxu0 0.0
        %4664 = vmatpush1.msra.mxu0 0.0
        %4665 = vmatprep.subr.mxu0 0.0
        %4666 = vmatpush1.msra.mxu0 0.0
        %4667 = vmatprep.subr.mxu0 0.0
        %4668 = vmatpush1.msra.mxu0 0.0
        %4669 = vmatprep.subr.mxu0 0.0
        %4670 = vmatpush1.msra.mxu0 0.0
        %4671 = vmatprep.subr.mxu0 0.0
        %4672 = vmatpush1.msra.mxu0 0.0
        %4673 = vmatprep.mubr.f32.mxu0 0.0
        %4674 = vmatmul.mubr.f32.gmra.mrb[0].mxu0 %v3309
        %v4675 = vpop.f32.mrb[0].mxu0
        %v4676 = vadd.f32 0.0, %v4675
        %v4677 = vpop.f32.mrb[0].mxu0
        %4678 = vmatprep.mubr.f32.mxu0 0.0
        %4679 = vmatmul.mubr.f32.gmra.mrb[0].mxu0 %v3310
        %v4680 = vpop.f32.mrb[0].mxu0
        %v4681 = vadd.f32 0.0, %v4680
        %v4682 = vpop.f32.mrb[0].mxu0
        %4683 = vmatprep.mubr.f32.mxu0 0.0
        %4684 = vmatmul.mubr.f32.gmra.mrb[0].mxu0 %v3311
        %v4685 = vpop.f32.mrb[0].mxu0
        %v4686 = vadd.f32 0.0, %v4685
        %v4687 = vpop.f32.mrb[0].mxu0
        %4688 = vmatprep.mubr.f32.mxu0 0.0
        %4689 = vmatmul.mubr.f32.gmra.mrb[0].mxu0 %v3312
        %v4690 = vpop.f32.mrb[0].mxu0
        %v4691 = vadd.f32 0.0, %v4690
        %v4692 = vpop.f32.mrb[0].mxu0
        %4693 = vmatprep.mubr.f32.mxu0 0.0
        %4694 = vmatmul.mubr.f32.gmra.mrb[0].mxu0 %v3313
        %v4695 = vpop.f32.mrb[0].mxu0
        %v4696 = vadd.f32 0.0, %v4695
        %v4697 = vpop.f32.mrb[0].mxu0
        %4698 = vmatprep.mubr.f32.mxu0 0.0
        %4699 = vmatmul.mubr.f32.gmra.mrb[0].mxu0 %v3314
        %v4700 = vpop.f32.mrb[0].mxu0
        %v4701 = vadd.f32 0.0, %v4700
        %v4702 = vpop.f32.mrb[0].mxu0
        %4703 = vmatprep.mubr.f32.mxu0 0.0
        %4704 = vmatmul.mubr.f32.gmra.mrb[0].mxu0 %v3315
        %v4705 = vpop.f32.mrb[0].mxu0
        %v4706 = vadd.f32 0.0, %v4705
        %v4707 = vpop.f32.mrb[0].mxu0
        %4708 = vmatprep.mubr.f32.mxu0 0.0
        %4709 = vmatmul.mubr.f32.gmra.mrb[0].mxu0 %v3316
        %v4710 = vpop.f32.mrb[0].mxu0
        %v4711 = vadd.f32 0.0, %v4710
        %v4712 = vpop.f32.mrb[0].mxu0
        %4713 = vmatprep.mubr.f32.mxu0 0.0
        %4714 = vmatmul.mubr.f32.gmra.mrb[0].mxu0 %v3317
        %v4715 = vpop.f32.mrb[0].mxu0
        %v4716 = vadd.f32 0.0, %v4715
        %v4717 = vpop.f32.mrb[0].mxu0
        %4718 = vmatprep.mubr.f32.mxu0 0.0
        %4719 = vmatmul.mubr.f32.gmra.mrb[0].mxu0 %v3318
        %v4720 = vpop.f32.mrb[0].mxu0
        %v4721 = vadd.f32 0.0, %v4720
        %v4722 = vpop.f32.mrb[0].mxu0
        %4723 = vmatprep.mubr.f32.mxu0 0.0
        %4724 = vmatmul.mubr.f32.gmra.mrb[0].mxu0 %v3319
        %v4725 = vpop.f32.mrb[0].mxu0
        %v4726 = vadd.f32 0.0, %v4725
        %v4727 = vpop.f32.mrb[0].mxu0
        %4728 = vmatprep.mubr.f32.mxu0 0.0
        %4729 = vmatmul.mubr.f32.gmra.mrb[0].mxu0 %v3320
        %v4730 = vpop.f32.mrb[0].mxu0
        %v4731 = vadd.f32 0.0, %v4730
        %v4732 = vpop.f32.mrb[0].mxu0
        %4733 = vmatprep.mubr.f32.mxu0 0.0
        %4734 = vmatmul.mubr.f32.gmra.mrb[0].mxu0 %v3321
        %v4735 = vpop.f32.mrb[0].mxu0
        %v4736 = vadd.f32 0.0, %v4735
        %v4737 = vpop.f32.mrb[0].mxu0
        %4738 = vmatprep.mubr.f32.mxu0 0.0
        %4739 = vmatmul.mubr.f32.gmra.mrb[0].mxu0 %v3322
        %v4740 = vpop.f32.mrb[0].mxu0
        %v4741 = vadd.f32 0.0, %v4740
        %v4742 = vpop.f32.mrb[0].mxu0
        %4743 = vmatprep.mubr.f32.mxu0 0.0
        %4744 = vmatmul.mubr.f32.gmra.mrb[0].mxu0 %v3323
        %v4745 = vpop.f32.mrb[0].mxu0
        %v4746 = vadd.f32 0.0, %v4745
        %v4747 = vpop.f32.mrb[0].mxu0
        %4748 = vmatprep.mubr.f32.mxu0 0.0
        %4749 = vmatmul.mubr.f32.gmra.mrb[0].mxu0 %v3324
        %v4750 = vpop.f32.mrb[0].mxu0
        %v4751 = vadd.f32 0.0, %v4750
        %v4752 = vpop.f32.mrb[0].mxu0
        %4753 = vmatprep.mubr.f32.mxu0 0.0
        %4754 = vmatmul.mubr.f32.gmra.mrb[0].mxu0 %v3325
        %v4755 = vpop.f32.mrb[0].mxu0
        %v4756 = vadd.f32 0.0, %v4755
        %v4757 = vpop.f32.mrb[0].mxu0
        %4758 = vmatprep.mubr.f32.mxu0 0.0
        %4759 = vmatmul.mubr.f32.gmra.mrb[0].mxu0 %v3326
        %v4760 = vpop.f32.mrb[0].mxu0
        %v4761 = vadd.f32 0.0, %v4760
        %v4762 = vpop.f32.mrb[0].mxu0
        %4763 = vmatprep.mubr.f32.mxu0 0.0
        %4764 = vmatmul.mubr.f32.gmra.mrb[0].mxu0 %v3327
        %v4765 = vpop.f32.mrb[0].mxu0
        %v4766 = vadd.f32 0.0, %v4765
        %v4767 = vpop.f32.mrb[0].mxu0
        %4768 = vmatprep.mubr.f32.mxu0 0.0
        %4769 = vmatmul.mubr.f32.gmra.mrb[0].mxu0 %v3328
        %v4770 = vpop.f32.mrb[0].mxu0
        %v4771 = vadd.f32 0.0, %v4770
        %v4772 = vpop.f32.mrb[0].mxu0
        %4773 = vmatprep.mubr.f32.mxu0 0.0
        %4774 = vmatmul.mubr.f32.gmra.mrb[0].mxu0 %v3329
        %v4775 = vpop.f32.mrb[0].mxu0
        %v4776 = vadd.f32 0.0, %v4775
        %v4777 = vpop.f32.mrb[0].mxu0
        %4778 = vmatprep.mubr.f32.mxu0 0.0
        %4779 = vmatmul.mubr.f32.gmra.mrb[0].mxu0 %v3330
        %v4780 = vpop.f32.mrb[0].mxu0
        %v4781 = vadd.f32 0.0, %v4780
        %v4782 = vpop.f32.mrb[0].mxu0
        %4783 = vmatprep.mubr.f32.mxu0 0.0
        %4784 = vmatmul.mubr.f32.gmra.mrb[0].mxu0 %v3331
        %v4785 = vpop.f32.mrb[0].mxu0
        %v4786 = vadd.f32 0.0, %v4785
        %v4787 = vpop.f32.mrb[0].mxu0
        %4788 = vmatprep.mubr.f32.mxu0 0.0
        %4789 = vmatmul.mubr.f32.gmra.mrb[0].mxu0 %v3332
        %v4790 = vpop.f32.mrb[0].mxu0
        %v4791 = vadd.f32 0.0, %v4790
        %v4792 = vpop.f32.mrb[0].mxu0
        %4793 = vmatprep.mubr.f32.mxu0 0.0
        %4794 = vmatmul.mubr.f32.gmra.mrb[0].mxu0 %v3333
        %v4795 = vpop.f32.mrb[0].mxu0
        %v4796 = vadd.f32 0.0, %v4795
        %v4797 = vpop.f32.mrb[0].mxu0
        %4798 = vmatprep.mubr.f32.mxu0 0.0
        %4799 = vmatmul.mubr.f32.gmra.mrb[0].mxu0 %v3334
        %v4800 = vpop.f32.mrb[0].mxu0
        %v4801 = vadd.f32 0.0, %v4800
        %v4802 = vpop.f32.mrb[0].mxu0
        %4803 = vmatprep.mubr.f32.mxu0 0.0
        %4804 = vmatmul.mubr.f32.gmra.mrb[0].mxu0 %v3335
        %v4805 = vpop.f32.mrb[0].mxu0
        %v4806 = vadd.f32 0.0, %v4805
        %v4807 = vpop.f32.mrb[0].mxu0
        %4808 = vmatprep.mubr.f32.mxu0 0.0
        %4809 = vmatmul.mubr.f32.gmra.mrb[0].mxu0 %v3336
        %v4810 = vpop.f32.mrb[0].mxu0
        %v4811 = vadd.f32 0.0, %v4810
        %v4812 = vpop.f32.mrb[0].mxu0
        %4813 = vmatprep.mubr.f32.mxu0 0.0
        %4814 = vmatmul.mubr.f32.gmra.mrb[0].mxu0 %v3337
        %v4815 = vpop.f32.mrb[0].mxu0
        %v4816 = vadd.f32 0.0, %v4815
        %v4817 = vpop.f32.mrb[0].mxu0
        %4818 = vmatprep.mubr.f32.mxu0 0.0
        %4819 = vmatmul.mubr.f32.gmra.mrb[0].mxu0 %v3338
        %v4820 = vpop.f32.mrb[0].mxu0
        %v4821 = vadd.f32 0.0, %v4820
        %v4822 = vpop.f32.mrb[0].mxu0
        %4823 = vmatprep.mubr.f32.mxu0 0.0
        %4824 = vmatmul.mubr.f32.gmra.mrb[0].mxu0 %v3339
        %v4825 = vpop.f32.mrb[0].mxu0
        %v4826 = vadd.f32 0.0, %v4825
        %v4827 = vpop.f32.mrb[0].mxu0
        %4828 = vmatprep.mubr.f32.mxu0 0.0
        %4829 = vmatmul.mubr.f32.gmra.mrb[0].mxu0 %v3340
        %v4830 = vpop.f32.mrb[0].mxu0
        %v4831 = vadd.f32 0.0, %v4830
        %v4832 = vpop.f32.mrb[0].mxu0
        %4833 = vdwg.mxu0
        %v4834 = vadd.f32 %v4434, %v4676
        %v4835 = vadd.f32 %v4439, %v4681
        %v4836 = vadd.f32 %v4444, %v4686
        %v4837 = vadd.f32 %v4449, %v4691
        %v4838 = vadd.f32 %v4454, %v4696
        %v4839 = vadd.f32 %v4459, %v4701
        %v4840 = vadd.f32 %v4464, %v4706
        %v4841 = vadd.f32 %v4469, %v4711
        %v4842 = vadd.f32 %v4474, %v4716
        %v4843 = vadd.f32 %v4479, %v4721
        %v4844 = vadd.f32 %v4484, %v4726
        %v4845 = vadd.f32 %v4489, %v4731
        %v4846 = vadd.f32 %v4494, %v4736
        %v4847 = vadd.f32 %v4499, %v4741
        %v4848 = vadd.f32 %v4504, %v4746
        %v4849 = vadd.f32 %v4509, %v4751
        %v4850 = vadd.f32 %v4514, %v4756
        %v4851 = vadd.f32 %v4519, %v4761
        %v4852 = vadd.f32 %v4524, %v4766
        %v4853 = vadd.f32 %v4529, %v4771
        %v4854 = vadd.f32 %v4534, %v4776
        %v4855 = vadd.f32 %v4539, %v4781
        %v4856 = vadd.f32 %v4544, %v4786
        %v4857 = vadd.f32 %v4549, %v4791
        %v4858 = vadd.f32 %v4554, %v4796
        %v4859 = vadd.f32 %v4559, %v4801
        %v4860 = vadd.f32 %v4564, %v4806
        %v4861 = vadd.f32 %v4569, %v4811
        %v4862 = vadd.f32 %v4574, %v4816
        %v4863 = vadd.f32 %v4579, %v4821
        %v4864 = vadd.f32 %v4584, %v4826
        %v4865 = vadd.f32 %v4589, %v4831
        %s4866 = scalar_lea.vmem [#allocation7], 384
        %v4867 = vld [vmem:[%s4866] sm:$0xff]
        %v4868 = vld [vmem:[%s4866 + $0x8] sm:$0xff]
        %v4869 = vld [vmem:[%s4866 + $0x10] sm:$0xff]
        %v4870 = vld [vmem:[%s4866 + $0x18] sm:$0xff]
        %v4871 = vld [vmem:[%s4866 + $0x20] sm:$0xff]
        %v4872 = vld [vmem:[%s4866 + $0x28] sm:$0xff]
        %v4873 = vld [vmem:[%s4866 + $0x30] sm:$0xff]
        %v4874 = vld [vmem:[%s4866 + $0x38] sm:$0xff]
        %v4875 = vld [vmem:[%s4866 + $0x40] sm:$0xff]
        %v4876 = vld [vmem:[%s4866 + $0x48] sm:$0xff]
        %v4877 = vld [vmem:[%s4866 + $0x50] sm:$0xff]
        %v4878 = vld [vmem:[%s4866 + $0x58] sm:$0xff]
        %v4879 = vld [vmem:[%s4866 + $0x60] sm:$0xff]
        %v4880 = vld [vmem:[%s4866 + $0x68] sm:$0xff]
        %v4881 = vld [vmem:[%s4866 + $0x70] sm:$0xff]
        %v4882 = vld [vmem:[%s4866 + $0x78] sm:$0xff]
        %4883 = vmatprep.subr.mxu0 0.0
        %4884 = vmatpush1.msra.mxu0 %v4867
        %4885 = vmatprep.subr.mxu0 0.0
        %4886 = vmatpush1.msra.mxu0 %v4868
        %4887 = vmatprep.subr.mxu0 0.0
        %4888 = vmatpush1.msra.mxu0 %v4869
        %4889 = vmatprep.subr.mxu0 0.0
        %4890 = vmatpush1.msra.mxu0 %v4870
        %4891 = vmatprep.subr.mxu0 0.0
        %4892 = vmatpush1.msra.mxu0 %v4871
        %4893 = vmatprep.subr.mxu0 0.0
        %4894 = vmatpush1.msra.mxu0 %v4872
        %4895 = vmatprep.subr.mxu0 0.0
        %4896 = vmatpush1.msra.mxu0 %v4873
        %4897 = vmatprep.subr.mxu0 0.0
        %4898 = vmatpush1.msra.mxu0 %v4874
        %4899 = vmatprep.subr.mxu0 0.0
        %4900 = vmatpush1.msra.mxu0 %v4875
        %4901 = vmatprep.subr.mxu0 0.0
        %4902 = vmatpush1.msra.mxu0 %v4876
        %4903 = vmatprep.subr.mxu0 0.0
        %4904 = vmatpush1.msra.mxu0 %v4877
        %4905 = vmatprep.subr.mxu0 0.0
        %4906 = vmatpush1.msra.mxu0 %v4878
        %4907 = vmatprep.subr.mxu0 0.0
        %4908 = vmatpush1.msra.mxu0 %v4879
        %4909 = vmatprep.subr.mxu0 0.0
        %4910 = vmatpush1.msra.mxu0 %v4880
        %4911 = vmatprep.subr.mxu0 0.0
        %4912 = vmatpush1.msra.mxu0 %v4881
        %4913 = vmatprep.subr.mxu0 0.0
        %4914 = vmatpush1.msra.mxu0 %v4882
        %4915 = vmatprep.subr.mxu0 0.0
        %4916 = vmatpush1.msra.mxu0 0.0
        %4917 = vmatprep.subr.mxu0 0.0
        %4918 = vmatpush1.msra.mxu0 0.0
        %4919 = vmatprep.subr.mxu0 0.0
        %4920 = vmatpush1.msra.mxu0 0.0
        %4921 = vmatprep.subr.mxu0 0.0
        %4922 = vmatpush1.msra.mxu0 0.0
        %4923 = vmatprep.subr.mxu0 0.0
        %4924 = vmatpush1.msra.mxu0 0.0
        %4925 = vmatprep.subr.mxu0 0.0
        %4926 = vmatpush1.msra.mxu0 0.0
        %4927 = vmatprep.subr.mxu0 0.0
        %4928 = vmatpush1.msra.mxu0 0.0
        %4929 = vmatprep.subr.mxu0 0.0
        %4930 = vmatpush1.msra.mxu0 0.0
        %4931 = vmatprep.subr.mxu0 0.0
        %4932 = vmatpush1.msra.mxu0 0.0
        %4933 = vmatprep.subr.mxu0 0.0
        %4934 = vmatpush1.msra.mxu0 0.0
        %4935 = vmatprep.subr.mxu0 0.0
        %4936 = vmatpush1.msra.mxu0 0.0
        %4937 = vmatprep.subr.mxu0 0.0
        %4938 = vmatpush1.msra.mxu0 0.0
        %4939 = vmatprep.subr.mxu0 0.0
        %4940 = vmatpush1.msra.mxu0 0.0
        %4941 = vmatprep.subr.mxu0 0.0
        %4942 = vmatpush1.msra.mxu0 0.0
        %4943 = vmatprep.subr.mxu0 0.0
        %4944 = vmatpush1.msra.mxu0 0.0
        %4945 = vmatprep.subr.mxu0 0.0
        %4946 = vmatpush1.msra.mxu0 0.0
        %4947 = vmatprep.mubr.f32.mxu0 0.0
        %4948 = vmatmul.mubr.f32.gmra.mrb[0].mxu0 %v4077
        %v4949 = vpop.f32.mrb[0].mxu0
        %v4950 = vadd.f32 0.0, %v4949
        %v4951 = vpop.f32.mrb[0].mxu0
        %4952 = vmatprep.mubr.f32.mxu0 0.0
        %4953 = vmatmul.mubr.f32.gmra.mrb[0].mxu0 %v4078
        %v4954 = vpop.f32.mrb[0].mxu0
        %v4955 = vadd.f32 0.0, %v4954
        %v4956 = vpop.f32.mrb[0].mxu0
        %4957 = vmatprep.mubr.f32.mxu0 0.0
        %4958 = vmatmul.mubr.f32.gmra.mrb[0].mxu0 %v4079
        %v4959 = vpop.f32.mrb[0].mxu0
        %v4960 = vadd.f32 0.0, %v4959
        %v4961 = vpop.f32.mrb[0].mxu0
        %4962 = vmatprep.mubr.f32.mxu0 0.0
        %4963 = vmatmul.mubr.f32.gmra.mrb[0].mxu0 %v4080
        %v4964 = vpop.f32.mrb[0].mxu0
        %v4965 = vadd.f32 0.0, %v4964
        %v4966 = vpop.f32.mrb[0].mxu0
        %4967 = vmatprep.mubr.f32.mxu0 0.0
        %4968 = vmatmul.mubr.f32.gmra.mrb[0].mxu0 %v4081
        %v4969 = vpop.f32.mrb[0].mxu0
        %v4970 = vadd.f32 0.0, %v4969
        %v4971 = vpop.f32.mrb[0].mxu0
        %4972 = vmatprep.mubr.f32.mxu0 0.0
        %4973 = vmatmul.mubr.f32.gmra.mrb[0].mxu0 %v4082
        %v4974 = vpop.f32.mrb[0].mxu0
        %v4975 = vadd.f32 0.0, %v4974
        %v4976 = vpop.f32.mrb[0].mxu0
        %4977 = vmatprep.mubr.f32.mxu0 0.0
        %4978 = vmatmul.mubr.f32.gmra.mrb[0].mxu0 %v4083
        %v4979 = vpop.f32.mrb[0].mxu0
        %v4980 = vadd.f32 0.0, %v4979
        %v4981 = vpop.f32.mrb[0].mxu0
        %4982 = vmatprep.mubr.f32.mxu0 0.0
        %4983 = vmatmul.mubr.f32.gmra.mrb[0].mxu0 %v4084
        %v4984 = vpop.f32.mrb[0].mxu0
        %v4985 = vadd.f32 0.0, %v4984
        %v4986 = vpop.f32.mrb[0].mxu0
        %4987 = vmatprep.mubr.f32.mxu0 0.0
        %4988 = vmatmul.mubr.f32.gmra.mrb[0].mxu0 %v4085
        %v4989 = vpop.f32.mrb[0].mxu0
        %v4990 = vadd.f32 0.0, %v4989
        %v4991 = vpop.f32.mrb[0].mxu0
        %4992 = vmatprep.mubr.f32.mxu0 0.0
        %4993 = vmatmul.mubr.f32.gmra.mrb[0].mxu0 %v4086
        %v4994 = vpop.f32.mrb[0].mxu0
        %v4995 = vadd.f32 0.0, %v4994
        %v4996 = vpop.f32.mrb[0].mxu0
        %4997 = vmatprep.mubr.f32.mxu0 0.0
        %4998 = vmatmul.mubr.f32.gmra.mrb[0].mxu0 %v4087
        %v4999 = vpop.f32.mrb[0].mxu0
        %v5000 = vadd.f32 0.0, %v4999
        %v5001 = vpop.f32.mrb[0].mxu0
        %5002 = vmatprep.mubr.f32.mxu0 0.0
        %5003 = vmatmul.mubr.f32.gmra.mrb[0].mxu0 %v4088
        %v5004 = vpop.f32.mrb[0].mxu0
        %v5005 = vadd.f32 0.0, %v5004
        %v5006 = vpop.f32.mrb[0].mxu0
        %5007 = vmatprep.mubr.f32.mxu0 0.0
        %5008 = vmatmul.mubr.f32.gmra.mrb[0].mxu0 %v4089
        %v5009 = vpop.f32.mrb[0].mxu0
        %v5010 = vadd.f32 0.0, %v5009
        %v5011 = vpop.f32.mrb[0].mxu0
        %5012 = vmatprep.mubr.f32.mxu0 0.0
        %5013 = vmatmul.mubr.f32.gmra.mrb[0].mxu0 %v4090
        %v5014 = vpop.f32.mrb[0].mxu0
        %v5015 = vadd.f32 0.0, %v5014
        %v5016 = vpop.f32.mrb[0].mxu0
        %5017 = vmatprep.mubr.f32.mxu0 0.0
        %5018 = vmatmul.mubr.f32.gmra.mrb[0].mxu0 %v4091
        %v5019 = vpop.f32.mrb[0].mxu0
        %v5020 = vadd.f32 0.0, %v5019
        %v5021 = vpop.f32.mrb[0].mxu0
        %5022 = vmatprep.mubr.f32.mxu0 0.0
        %5023 = vmatmul.mubr.f32.gmra.mrb[0].mxu0 %v4092
        %v5024 = vpop.f32.mrb[0].mxu0
        %v5025 = vadd.f32 0.0, %v5024
        %v5026 = vpop.f32.mrb[0].mxu0
        %5027 = vmatprep.mubr.f32.mxu0 0.0
        %5028 = vmatmul.mubr.f32.gmra.mrb[0].mxu0 %v4093
        %v5029 = vpop.f32.mrb[0].mxu0
        %v5030 = vadd.f32 0.0, %v5029
        %v5031 = vpop.f32.mrb[0].mxu0
        %5032 = vmatprep.mubr.f32.mxu0 0.0
        %5033 = vmatmul.mubr.f32.gmra.mrb[0].mxu0 %v4094
        %v5034 = vpop.f32.mrb[0].mxu0
        %v5035 = vadd.f32 0.0, %v5034
        %v5036 = vpop.f32.mrb[0].mxu0
        %5037 = vmatprep.mubr.f32.mxu0 0.0
        %5038 = vmatmul.mubr.f32.gmra.mrb[0].mxu0 %v4095
        %v5039 = vpop.f32.mrb[0].mxu0
        %v5040 = vadd.f32 0.0, %v5039
        %v5041 = vpop.f32.mrb[0].mxu0
        %5042 = vmatprep.mubr.f32.mxu0 0.0
        %5043 = vmatmul.mubr.f32.gmra.mrb[0].mxu0 %v4096
        %v5044 = vpop.f32.mrb[0].mxu0
        %v5045 = vadd.f32 0.0, %v5044
        %v5046 = vpop.f32.mrb[0].mxu0
        %5047 = vmatprep.mubr.f32.mxu0 0.0
        %5048 = vmatmul.mubr.f32.gmra.mrb[0].mxu0 %v4097
        %v5049 = vpop.f32.mrb[0].mxu0
        %v5050 = vadd.f32 0.0, %v5049
        %v5051 = vpop.f32.mrb[0].mxu0
        %5052 = vmatprep.mubr.f32.mxu0 0.0
        %5053 = vmatmul.mubr.f32.gmra.mrb[0].mxu0 %v4098
        %v5054 = vpop.f32.mrb[0].mxu0
        %v5055 = vadd.f32 0.0, %v5054
        %v5056 = vpop.f32.mrb[0].mxu0
        %5057 = vmatprep.mubr.f32.mxu0 0.0
        %5058 = vmatmul.mubr.f32.gmra.mrb[0].mxu0 %v4099
        %v5059 = vpop.f32.mrb[0].mxu0
        %v5060 = vadd.f32 0.0, %v5059
        %v5061 = vpop.f32.mrb[0].mxu0
        %5062 = vmatprep.mubr.f32.mxu0 0.0
        %5063 = vmatmul.mubr.f32.gmra.mrb[0].mxu0 %v4100
        %v5064 = vpop.f32.mrb[0].mxu0
        %v5065 = vadd.f32 0.0, %v5064
        %v5066 = vpop.f32.mrb[0].mxu0
        %5067 = vmatprep.mubr.f32.mxu0 0.0
        %5068 = vmatmul.mubr.f32.gmra.mrb[0].mxu0 %v4101
        %v5069 = vpop.f32.mrb[0].mxu0
        %v5070 = vadd.f32 0.0, %v5069
        %v5071 = vpop.f32.mrb[0].mxu0
        %5072 = vmatprep.mubr.f32.mxu0 0.0
        %5073 = vmatmul.mubr.f32.gmra.mrb[0].mxu0 %v4102
        %v5074 = vpop.f32.mrb[0].mxu0
        %v5075 = vadd.f32 0.0, %v5074
        %v5076 = vpop.f32.mrb[0].mxu0
        %5077 = vmatprep.mubr.f32.mxu0 0.0
        %5078 = vmatmul.mubr.f32.gmra.mrb[0].mxu0 %v4103
        %v5079 = vpop.f32.mrb[0].mxu0
        %v5080 = vadd.f32 0.0, %v5079
        %v5081 = vpop.f32.mrb[0].mxu0
        %5082 = vmatprep.mubr.f32.mxu0 0.0
        %5083 = vmatmul.mubr.f32.gmra.mrb[0].mxu0 %v4104
        %v5084 = vpop.f32.mrb[0].mxu0
        %v5085 = vadd.f32 0.0, %v5084
        %v5086 = vpop.f32.mrb[0].mxu0
        %5087 = vmatprep.mubr.f32.mxu0 0.0
        %5088 = vmatmul.mubr.f32.gmra.mrb[0].mxu0 %v4105
        %v5089 = vpop.f32.mrb[0].mxu0
        %v5090 = vadd.f32 0.0, %v5089
        %v5091 = vpop.f32.mrb[0].mxu0
        %5092 = vmatprep.mubr.f32.mxu0 0.0
        %5093 = vmatmul.mubr.f32.gmra.mrb[0].mxu0 %v4106
        %v5094 = vpop.f32.mrb[0].mxu0
        %v5095 = vadd.f32 0.0, %v5094
        %v5096 = vpop.f32.mrb[0].mxu0
        %5097 = vmatprep.mubr.f32.mxu0 0.0
        %5098 = vmatmul.mubr.f32.gmra.mrb[0].mxu0 %v4107
        %v5099 = vpop.f32.mrb[0].mxu0
        %v5100 = vadd.f32 0.0, %v5099
        %v5101 = vpop.f32.mrb[0].mxu0
        %5102 = vmatprep.mubr.f32.mxu0 0.0
        %5103 = vmatmul.mubr.f32.gmra.mrb[0].mxu0 %v4108
        %v5104 = vpop.f32.mrb[0].mxu0
        %v5105 = vadd.f32 0.0, %v5104
        %v5106 = vpop.f32.mrb[0].mxu0
        %5107 = vdwg.mxu0
        %v5108 = vadd.f32 %v4834, %v4950
        %v5109 = vadd.f32 %v4835, %v4955
        %v5110 = vadd.f32 %v4836, %v4960
        %v5111 = vadd.f32 %v4837, %v4965
        %v5112 = vadd.f32 %v4838, %v4970
        %v5113 = vadd.f32 %v4839, %v4975
        %v5114 = vadd.f32 %v4840, %v4980
        %v5115 = vadd.f32 %v4841, %v4985
        %v5116 = vadd.f32 %v4842, %v4990
        %v5117 = vadd.f32 %v4843, %v4995
        %v5118 = vadd.f32 %v4844, %v5000
        %v5119 = vadd.f32 %v4845, %v5005
        %v5120 = vadd.f32 %v4846, %v5010
        %v5121 = vadd.f32 %v4847, %v5015
        %v5122 = vadd.f32 %v4848, %v5020
        %v5123 = vadd.f32 %v4849, %v5025
        %v5124 = vadd.f32 %v4850, %v5030
        %v5125 = vadd.f32 %v4851, %v5035
        %v5126 = vadd.f32 %v4852, %v5040
        %v5127 = vadd.f32 %v4853, %v5045
        %v5128 = vadd.f32 %v4854, %v5050
        %v5129 = vadd.f32 %v4855, %v5055
        %v5130 = vadd.f32 %v4856, %v5060
        %v5131 = vadd.f32 %v4857, %v5065
        %v5132 = vadd.f32 %v4858, %v5070
        %v5133 = vadd.f32 %v4859, %v5075
        %v5134 = vadd.f32 %v4860, %v5080
        %v5135 = vadd.f32 %v4861, %v5085
        %v5136 = vadd.f32 %v4862, %v5090
        %v5137 = vadd.f32 %v4863, %v5095
        %v5138 = vadd.f32 %v4864, %v5100
        %v5139 = vadd.f32 %v4865, %v5105
        %v5140 = vld [vmem:[%s4] sm:$0x1]
        %v5142 = vlaneseq
        %v5143 = vshrl.u32 %v5142, 7
        %v5144 = vsub.s32 0, %v5143
        %v5145 = vrot.slane %v5140, %v5144
        %v5147 = vadd.f32 %v5108, %v5145
        %v5148 = vadd.f32 %v5109, %v5145
        %v5149 = vadd.f32 %v5110, %v5145
        %v5150 = vadd.f32 %v5111, %v5145
        %v5151 = vadd.f32 %v5112, %v5145
        %v5152 = vadd.f32 %v5113, %v5145
        %v5153 = vadd.f32 %v5114, %v5145
        %v5154 = vadd.f32 %v5115, %v5145
        %v5155 = vadd.f32 %v5116, %v5145
        %v5156 = vadd.f32 %v5117, %v5145
        %v5157 = vadd.f32 %v5118, %v5145
        %v5158 = vadd.f32 %v5119, %v5145
        %v5159 = vadd.f32 %v5120, %v5145
        %v5160 = vadd.f32 %v5121, %v5145
        %v5161 = vadd.f32 %v5122, %v5145
        %v5162 = vadd.f32 %v5123, %v5145
        %v5163 = vadd.f32 %v5124, %v5145
        %v5164 = vadd.f32 %v5125, %v5145
        %v5165 = vadd.f32 %v5126, %v5145
        %v5166 = vadd.f32 %v5127, %v5145
        %v5167 = vadd.f32 %v5128, %v5145
        %v5168 = vadd.f32 %v5129, %v5145
        %v5169 = vadd.f32 %v5130, %v5145
        %v5170 = vadd.f32 %v5131, %v5145
        %v5171 = vadd.f32 %v5132, %v5145
        %v5172 = vadd.f32 %v5133, %v5145
        %v5173 = vadd.f32 %v5134, %v5145
        %v5174 = vadd.f32 %v5135, %v5145
        %v5175 = vadd.f32 %v5136, %v5145
        %v5176 = vadd.f32 %v5137, %v5145
        %v5177 = vadd.f32 %v5138, %v5145
        %v5178 = vadd.f32 %v5139, %v5145
        %v5179 = vmul.f32 %v5147, 0.1
        %v5180 = vmul.f32 %v5148, 0.1
        %v5181 = vmul.f32 %v5149, 0.1
        %v5182 = vmul.f32 %v5150, 0.1
        %v5183 = vmul.f32 %v5151, 0.1
        %v5184 = vmul.f32 %v5152, 0.1
        %v5185 = vmul.f32 %v5153, 0.1
        %v5186 = vmul.f32 %v5154, 0.1
        %v5187 = vmul.f32 %v5155, 0.1
        %v5188 = vmul.f32 %v5156, 0.1
        %v5189 = vmul.f32 %v5157, 0.1
        %v5190 = vmul.f32 %v5158, 0.1
        %v5191 = vmul.f32 %v5159, 0.1
        %v5192 = vmul.f32 %v5160, 0.1
        %v5193 = vmul.f32 %v5161, 0.1
        %v5194 = vmul.f32 %v5162, 0.1
        %v5195 = vmul.f32 %v5163, 0.1
        %v5196 = vmul.f32 %v5164, 0.1
        %v5197 = vmul.f32 %v5165, 0.1
        %v5198 = vmul.f32 %v5166, 0.1
        %v5199 = vmul.f32 %v5167, 0.1
        %v5200 = vmul.f32 %v5168, 0.1
        %v5201 = vmul.f32 %v5169, 0.1
        %v5202 = vmul.f32 %v5170, 0.1
        %v5203 = vmul.f32 %v5171, 0.1
        %v5204 = vmul.f32 %v5172, 0.1
        %v5205 = vmul.f32 %v5173, 0.1
        %v5206 = vmul.f32 %v5174, 0.1
        %v5207 = vmul.f32 %v5175, 0.1
        %v5208 = vmul.f32 %v5176, 0.1
        %v5209 = vmul.f32 %v5177, 0.1
        %v5210 = vmul.f32 %v5178, 0.1
        %v5211 = vmax.f32 %v5147, %v5179
        %v5212 = vmax.f32 %v5148, %v5180
        %v5213 = vmax.f32 %v5149, %v5181
        %v5214 = vmax.f32 %v5150, %v5182
        %v5215 = vmax.f32 %v5151, %v5183
        %v5216 = vmax.f32 %v5152, %v5184
        %v5217 = vmax.f32 %v5153, %v5185
        %v5218 = vmax.f32 %v5154, %v5186
        %v5219 = vmax.f32 %v5155, %v5187
        %v5220 = vmax.f32 %v5156, %v5188
        %v5221 = vmax.f32 %v5157, %v5189
        %v5222 = vmax.f32 %v5158, %v5190
        %v5223 = vmax.f32 %v5159, %v5191
        %v5224 = vmax.f32 %v5160, %v5192
        %v5225 = vmax.f32 %v5161, %v5193
        %v5226 = vmax.f32 %v5162, %v5194
        %v5227 = vmax.f32 %v5163, %v5195
        %v5228 = vmax.f32 %v5164, %v5196
        %v5229 = vmax.f32 %v5165, %v5197
        %v5230 = vmax.f32 %v5166, %v5198
        %v5231 = vmax.f32 %v5167, %v5199
        %v5232 = vmax.f32 %v5168, %v5200
        %v5233 = vmax.f32 %v5169, %v5201
        %v5234 = vmax.f32 %v5170, %v5202
        %v5235 = vmax.f32 %v5171, %v5203
        %v5236 = vmax.f32 %v5172, %v5204
        %v5237 = vmax.f32 %v5173, %v5205
        %v5238 = vmax.f32 %v5174, %v5206
        %v5239 = vmax.f32 %v5175, %v5207
        %v5240 = vmax.f32 %v5176, %v5208
        %v5241 = vmax.f32 %v5177, %v5209
        %v5242 = vmax.f32 %v5178, %v5210
        %5243 = vst [vmem:[%s271] sm:$0xff] %v5211
        %5244 = vst [vmem:[%s271 + $0x8] sm:$0xff] %v5212
        %5245 = vst [vmem:[%s271 + $0x10] sm:$0xff] %v5213
        %5246 = vst [vmem:[%s271 + $0x18] sm:$0xff] %v5214
        %5247 = vst [vmem:[%s271 + $0x20] sm:$0xff] %v5215
        %5248 = vst [vmem:[%s271 + $0x28] sm:$0xff] %v5216
        %5249 = vst [vmem:[%s271 + $0x30] sm:$0xff] %v5217
        %5250 = vst [vmem:[%s271 + $0x38] sm:$0xff] %v5218
        %5251 = vst [vmem:[%s271 + $0x40] sm:$0xff] %v5219
        %5252 = vst [vmem:[%s271 + $0x48] sm:$0xff] %v5220
        %5253 = vst [vmem:[%s271 + $0x50] sm:$0xff] %v5221
        %5254 = vst [vmem:[%s271 + $0x58] sm:$0xff] %v5222
        %5255 = vst [vmem:[%s271 + $0x60] sm:$0xff] %v5223
        %5256 = vst [vmem:[%s271 + $0x68] sm:$0xff] %v5224
        %5257 = vst [vmem:[%s271 + $0x70] sm:$0xff] %v5225
        %5258 = vst [vmem:[%s271 + $0x78] sm:$0xff] %v5226
        %5259 = vst [vmem:[%s271 + $0x80] sm:$0xff] %v5227
        %5260 = vst [vmem:[%s271 + $0x88] sm:$0xff] %v5228
        %5261 = vst [vmem:[%s271 + $0x90] sm:$0xff] %v5229
        %5262 = vst [vmem:[%s271 + $0x98] sm:$0xff] %v5230
        %5263 = vst [vmem:[%s271 + $0xa0] sm:$0xff] %v5231
        %5264 = vst [vmem:[%s271 + $0xa8] sm:$0xff] %v5232
        %5265 = vst [vmem:[%s271 + $0xb0] sm:$0xff] %v5233
        %5266 = vst [vmem:[%s271 + $0xb8] sm:$0xff] %v5234
        %5267 = vst [vmem:[%s271 + $0xc0] sm:$0xff] %v5235
        %5268 = vst [vmem:[%s271 + $0xc8] sm:$0xff] %v5236
        %5269 = vst [vmem:[%s271 + $0xd0] sm:$0xff] %v5237
        %5270 = vst [vmem:[%s271 + $0xd8] sm:$0xff] %v5238
        %5271 = vst [vmem:[%s271 + $0xe0] sm:$0xff] %v5239
        %5272 = vst [vmem:[%s271 + $0xe8] sm:$0xff] %v5240
        %5273 = vst [vmem:[%s271 + $0xf0] sm:$0xff] %v5241
        %5274 = vst [vmem:[%s271 + $0xf8] sm:$0xff] %v5242
        %s5275 = sand.u32 %s141, 1
        %s5276 = scalar_lea.sflag [#allocation4], %s5275
        %s5277 = sand.u32 %s141, 1
        %s5278 = smul.addr %s5277, 256
        %s5279 = scalar_lea.vmem [#allocation8], %s5278
        // Predicated region
        $region53: #{tpu_custom_call.1} parent=39 // pred_check
          %p5280 = pneg %p151
        $region54: #{tpu_custom_call.1} parent=39 // pred_check_branch
          %5282 = sbr.rel (%p5280) target = $region56
        $region55: #{tpu_custom_call.1} parent=39 // pred_region
          %s5284 = ssub.s32 4096, 4096
          %5285 = vsyncadd %s5276, %s5284
          %s5286 = smul.addr %s23, 32
          %s5287 = smul.addr %s5286, 128
          %s5288 = scalar_lea.hbm %s5, %s5287
          %s5289 = sshll.u32 %s5279, 4
          %s5290 = int_to_ptr.vmem [resolvable:$true] %s5289
          %5295 = dma.vmem_to_hbm [thread:$0]  %s5290, 4096, %s5288, %s5276, 128, 128, 8
        $region56: #{tpu_custom_call.1} parent=39 // pred_fallthru
          _
      $region40: #{tpu_custom_call.1} parent=5 // pred_fallthru
        _
      %p5296 = scmp.le.s32.totalorder 2, %s18
      // Predicated region
      $region57: #{tpu_custom_call.1} parent=5 // pred_check
        %p5297 = pneg %p5296
      $region58: #{tpu_custom_call.1} parent=5 // pred_check_branch
        %5299 = sbr.rel (%p5297) target = $region60
      $region59: #{tpu_custom_call.1} parent=5 // pred_region
        %s5300 = ssub.s32 %s18, 2
        // Predicated region
        $region61: #{tpu_custom_call.1} parent=59 // pred_check
          %p5301 = pneg %p157
        $region62: #{tpu_custom_call.1} parent=59 // pred_check_branch
          %5303 = sbr.rel (%p5301) target = $region64
        $region63: #{tpu_custom_call.1} parent=59 // pred_region
          %s5304 = sand.u32 %s142, 1
          %s5305 = scalar_lea.sflag [#allocation4], %s5304
          %s5306 = sand.u32 %s142, 1
          %s5307 = smul.addr %s5306, 256
          %s5308 = scalar_lea.vmem [#allocation8], %s5307
          %5309 = dma.done %s5305, 4096
        $region64: #{tpu_custom_call.1} parent=59 // pred_fallthru
          _
      $region60: #{tpu_custom_call.1} parent=5 // pred_fallthru
        _
    $region6: #{tpu_custom_call.1} parent=1 // loop_footer
      %s22 = sadd.s32 1, %s18
    $region7: #{tpu_custom_call.1} parent=1 // loop_footer_branch
      %17 = sbr.rel target = $region3
    $region8: #{tpu_custom_call.1} parent=1 // loop_exit
      _
    %5310 = vsyncpa [#allocation3], 1
    %s5311 = scalar_lea.sflag [#allocation3], 1
    %5312 = vsyncpa %s5311, 1
    %5313 = vsyncpa [#allocation6], 1
    %5314 = vsyncpa [#allocation4], 1
    %s5315 = scalar_lea.sflag [#allocation4], 1
    %5316 = vsyncpa %s5315, 1

</llo_original>
